<compile_context>
chip_gen: v5e
topology: v5e:2x2
jax: 0.10.0
libtpu: 0.0.40
codegen_flags: <defaults>
</compile_context>

<pallas_src>
import functools

import numpy as np
import jax
import jax.numpy as jnp
from jax.experimental import pallas as pl
from jax.experimental.pallas import tpu as pltpu

_NB = 8          # samples per lane group (their channels sit side by side on lanes)
_NG_MAX = 8      # max lane groups stacked per grid step on the sublane/time axis
_NBINS = 8       # AdaptiveAvgPool1d(8) / Unflatten(1, (32, 8))
_C1, _C2 = 16, 32
_WDT = jnp.bfloat16   # weight / MXU-operand dtype (default MXU precision is bf16 anyway)


# ---------------------------------------------------------------------------
# host-side helpers: PyTorch weights -> lane-batched block-diagonal operands
# ---------------------------------------------------------------------------
def _pool_bins(L, nbins=_NBINS):
    """Exact nn.AdaptiveAvgPool1d bins: [floor(p*L/n), ceil((p+1)*L/n))."""
    return [((p * L) // nbins, -((-(p + 1) * L) // nbins)) for p in range(nbins)]


def _conv_weights(w, b, nb=_NB):
    """Conv1d(Cin, Cout, 3, padding=1) -> tap-stacked block-diagonal weight.

    w: (Cout, Cin, 3), b: (Cout,) -> W: (3*nb*Cin, nb*Cout) bf16, b: (1, nb*Cout) f32.
    Row blocks are ordered [tap x[t-1] | tap x[t] | tap x[t+1]], each tap packed
    as sample*Cin+i; columns are packed sample*Cout+o (samples never mix).
    """
    wt = jnp.transpose(w.astype(jnp.float32), (2, 1, 0))              # (3, Cin, Cout)
    eye = jnp.eye(nb, dtype=jnp.float32)
    wbd = jnp.concatenate([jnp.kron(eye, wt[k]) for k in range(3)], axis=0)
    return wbd.astype(_WDT), jnp.tile(b, nb)[None, :].astype(jnp.float32)


def _encoder_weights(We, be, latent, nb=_NB):
    """Linear(32*8, latent); PyTorch flatten order is (channel, time)."""
    w3 = jnp.transpose(We.astype(jnp.float32).reshape(latent, _C2, _NBINS), (2, 1, 0))
    eye = jnp.eye(nb, dtype=jnp.float32)
    wbd = jnp.concatenate([jnp.kron(eye, w3[p]) for p in range(_NBINS)], axis=0)
    return wbd.astype(_WDT), jnp.tile(be, nb)[None, :].astype(jnp.float32)


def _decoder_weights(Wd, bd, latent, nb=_NB):
    """Linear(latent, 32*8) + Unflatten(1, (32, 8)); columns are bin-major."""
    w3 = jnp.transpose(Wd.astype(jnp.float32).reshape(_C2, _NBINS, latent), (1, 2, 0))
    eye = jnp.eye(nb, dtype=jnp.float32)
    wbd = jnp.concatenate([jnp.kron(eye, w3[p]) for p in range(_NBINS)], axis=1)
    b3 = jnp.transpose(bd.reshape(_C2, _NBINS))                       # (8, 32)
    bbd = jnp.concatenate([jnp.tile(b3[p], nb) for p in range(_NBINS)])[None, :]
    return wbd.astype(_WDT), bbd.astype(jnp.float32)


def _pool_matrix(L, Lp, ng, nbins=_NBINS):
    """(nbins, ng, ng*Lp) block-diagonal AdaptiveAvgPool1d(8) matrices."""
    P = np.zeros((nbins, ng, ng * Lp), np.float32)
    for p, (s, e) in enumerate(_pool_bins(L, nbins)):
        for g in range(ng):
            P[p, g, g * Lp + s:g * Lp + e] = 1.0 / (e - s)
    return jnp.asarray(P, dtype=_WDT)


def _upsample_matrix(L, Lp, ng, nbins=_NBINS):
    """(nbins, ng*Lp, ng) block-diagonal nearest-Upsample(size=L) selectors."""
    U = np.zeros((nbins, ng * Lp, ng), np.float32)
    for t in range(L):
        p = (t * nbins) // L
        for g in range(ng):
            U[p, g * Lp + t, g] = 1.0
    return jnp.asarray(U, dtype=_WDT)


def _conv_masks(L, Lp, ng):
    """(ng*Lp, 1) masks zeroing rows a sublane roll wraps across samples/pads."""
    t = np.arange(ng * Lp) % Lp
    m_first = (t > 0).astype(np.float32)[:, None]
    m_last = (t < L - 1).astype(np.float32)[:, None]
    return jnp.asarray(m_first), jnp.asarray(m_last)


# ---------------------------------------------------------------------------
# kernel
# ---------------------------------------------------------------------------
def _make_kernel(L, Lp, ng, nb):
    LT = ng * Lp                      # total wide rows per grid step
    cw2 = nb * _C2                    # lane width of the 32-channel activations

    def kernel(x_ref, mf_ref, ml_ref, w1, b1, w2, b2, pmat, we, be,
               wd, bd, umat, w3, b3, w4, b4, out_ref):
        f32 = jnp.float32
        mf = mf_ref[...]
        ml = ml_ref[...]

        # (ng*nb, L) lane-dense input block -> wide layout (ng*Lp, nb):
        # time on sublanes, per-group rows padded to a sublane-tile multiple.
        xv = x_ref[...]
        cols = []
        for g in range(ng):
            xg = jnp.transpose(xv[g * nb:(g + 1) * nb, :])            # (L, nb)
            if Lp > L:
                xg = jnp.concatenate(
                    [xg, jnp.zeros((Lp - L, nb), xg.dtype)], axis=0)
            cols.append(xg)
        x = jnp.concatenate(cols, axis=0) if ng > 1 else cols[0]       # (LT, nb)

        def conv(h, w_ref, b_ref, fuse_taps):
            """'same' Conv1d(kernel=3) on the wide layout h: (LT, nb*Cin) f32."""
            cw = h.shape[1]
            hm1 = mf * pltpu.roll(h, shift=1, axis=0)            # h[t-1]
            hp1 = ml * pltpu.roll(h, shift=LT - 1, axis=0)       # h[t+1]
            w = w_ref[...]
            if fuse_taps:      # narrow first layer (Cin=1): one dot on fused taps
                taps = jnp.concatenate([hm1, h, hp1], axis=1).astype(_WDT)
                out = jnp.dot(taps, w, preferred_element_type=f32)
            else:              # wide layers: 3 accumulated dots, no taps concat
                out = (jnp.dot(hm1.astype(_WDT), w[:cw],
                               preferred_element_type=f32)
                       + jnp.dot(h.astype(_WDT), w[cw:2 * cw],
                                 preferred_element_type=f32)
                       + jnp.dot(hp1.astype(_WDT), w[2 * cw:],
                                 preferred_element_type=f32))
            return out + b_ref[...]

        # ---------------- encoder ----------------
        h1 = jnp.maximum(conv(x, w1, b1, True), 0.0)             # (LT, nb*16)
        h2 = jnp.maximum(conv(h1, w2, b2, False), 0.0)           # (LT, nb*32)

        # AdaptiveAvgPool1d(8) as 8 tiny MXU dots (one per bin), lane-concatenated
        # (256-aligned) into the PyTorch (channel, time)-flatten layout of `we`.
        h2c = h2.astype(_WDT)
        flat = jnp.concatenate(
            [jnp.dot(pmat[p], h2c, preferred_element_type=f32)
             for p in range(_NBINS)], axis=1)                    # (ng, 8*nb*32)

        z = jnp.dot(flat.astype(_WDT), we[...],
                    preferred_element_type=f32) + be[...]        # (ng, nb*latent)

        # ---------------- decoder ----------------
        d = jnp.dot(z.astype(_WDT), wd[...],
                    preferred_element_type=f32) + bd[...]        # (ng, 8*nb*32)

        # nearest Upsample(size=L) as 8 accumulated selector dots on the
        # lane-aligned 256-wide bin blocks of d.
        dc = d.astype(_WDT)
        up = functools.reduce(
            lambda a, b: a + b,
            [jnp.dot(umat[p], dc[:, p * cw2:(p + 1) * cw2],
                     preferred_element_type=f32) for p in range(_NBINS)])

        h3 = jnp.maximum(conv(up, w3, b3, False), 0.0)           # (LT, nb*16)
        y = conv(h3, w4, b4, False)                              # (LT, nb)

        # wide (ng*Lp, nb) -> lane-dense (ng*nb, L) output block.
        rows = [jnp.transpose(y[g * Lp:g * Lp + L, :]) for g in range(ng)]
        out = jnp.concatenate(rows, axis=0) if ng > 1 else rows[0]
        out_ref[...] = out.astype(out_ref.dtype)

    return kernel


# ---------------------------------------------------------------------------
# wrapper
# ---------------------------------------------------------------------------
def autoencoder_forward(x, params, input_dim, latent_dim):
    """x: (B, input_dim, 1) float32 -> (x_rec,), x_rec: (B, input_dim, 1)."""
    B, L, one = x.shape
    assert L == input_dim and one == 1
    assert L >= _NBINS, "input_dim must be >= 8 (AdaptiveAvgPool1d(8))"

    nb = _NB
    n_groups = -(-B // nb)                    # lane groups of 8 samples
    # Stack several groups per grid step (raises M of every matmul), but keep
    # >= 2 grid steps whenever possible so both v7x TensorCores get work.
    ng = min(_NG_MAX, -(-n_groups // 2)) if n_groups > 1 else 1
    G = -(-n_groups // ng)                    # grid steps
    Bp = G * ng * nb
    Lp = -(-L // 8) * 8                       # per-group rows, sublane-tile aligned

    x2 = jnp.pad(x[:, :, 0], ((0, Bp - B), (0, 0)))              # (Bp, L) lane-dense

    mf, ml = _conv_masks(L, Lp, ng)
    w1, b1 = _conv_weights(params["w1"], params["b1"])
    w2, b2 = _conv_weights(params["w2"], params["b2"])
    w3, b3 = _conv_weights(params["w3"], params["b3"])
    w4, b4 = _conv_weights(params["w4"], params["b4"])
    we, be = _encoder_weights(params["We"], params["be"], latent_dim)
    wd, bd = _decoder_weights(params["Wd"], params["bd"], latent_dim)
    pmat = _pool_matrix(L, Lp, ng)
    umat = _upsample_matrix(L, Lp, ng)

    consts = [mf, ml, w1, b1, w2, b2, pmat, we, be, wd, bd, umat, w3, b3, w4, b4]
    kernel = _make_kernel(L, Lp, ng, nb)

    out = pl.pallas_call(
        kernel,
        out_shape=jax.ShapeDtypeStruct((Bp, L), jnp.float32),
        grid=(G,),
        in_specs=[pl.BlockSpec((ng * nb, L), lambda g: (g, 0))]
                 + [pl.BlockSpec(c.shape, (lambda g, _nd=c.ndim: (0,) * _nd))
                    for c in consts],
        out_specs=pl.BlockSpec((ng * nb, L), lambda g: (g, 0)),
        compiler_params=pltpu.CompilerParams(
            dimension_semantics=("parallel",),
            vmem_limit_bytes=48 * 1024 * 1024),
    )(x2, *consts)

    return (out[:B, :, None],)


# ---------------------------------------------------------------------------
# pure-JAX reference (PyTorch NCL layout, f32 HIGHEST precision)
# ---------------------------------------------------------------------------
def _ref_forward(x, p, L):
    HI = jax.lax.Precision.HIGHEST
    B = x.shape[0]
    xc = jnp.transpose(x, (0, 2, 1))                              # (B, 1, L)

    def conv(xin, w, b):
        Lc = xin.shape[-1]
        xp = jnp.pad(xin, ((0, 0), (0, 0), (1, 1)))
        y = b[None, :, None]
        for k in range(3):
            y = y + jnp.einsum("bil,oi->bol", xp[:, :, k:k + Lc], w[:, :, k],
                               precision=HI)
        return y

    h1 = jax.nn.relu(conv(xc, p["w1"], p["b1"]))
    h2 = jax.nn.relu(conv(h1, p["w2"], p["b2"]))
    pooled = jnp.stack([h2[:, :, s:e].mean(-1) for s, e in _pool_bins(L)], axis=-1)
    flat = pooled.reshape(B, _C2 * _NBINS)                        # (channel, time) flatten
    z = jnp.einsum("bf,lf->bl", flat, p["We"], precision=HI) + p["be"]
    d = (jnp.einsum("bl,fl->bf", z, p["Wd"], precision=HI) + p["bd"]).reshape(B, _C2, _NBINS)
    idx = jnp.asarray([(t * _NBINS) // L for t in range(L)], dtype=jnp.int32)
    up = d[:, :, idx]                                             # nearest upsample
    h3 = jax.nn.relu(conv(up, p["w3"], p["b3"]))
    o = conv(h3, p["w4"], p["b4"])
    return jnp.transpose(o, (0, 2, 1))


def _make_params(key, latent):
    ks = jax.random.split(key, 12)

    def u(k, shape, fan_in):
        bound = 1.0 / float(np.sqrt(fan_in))
        return jax.random.uniform(k, shape, jnp.float32, -bound, bound)

    return {
        "w1": u(ks[0], (_C1, 1, 3), 1 * 3),       "b1": u(ks[1], (_C1,), 1 * 3),
        "w2": u(ks[2], (_C2, _C1, 3), _C1 * 3),   "b2": u(ks[3], (_C2,), _C1 * 3),
        "We": u(ks[4], (latent, _C2 * _NBINS), _C2 * _NBINS),
        "be": u(ks[5], (latent,), _C2 * _NBINS),
        "Wd": u(ks[6], (_C2 * _NBINS, latent), latent),
        "bd": u(ks[7], (_C2 * _NBINS,), latent),
        "w3": u(ks[8], (_C1, _C2, 3), _C2 * 3),   "b3": u(ks[9], (_C1,), _C2 * 3),
        "w4": u(ks[10], (1, _C1, 3), _C1 * 3),    "b4": u(ks[11], (1,), _C1 * 3),
    }


# ---------------------------------------------------------------------------
if __name__ == "__main__":
    root = jax.random.PRNGKey(0)

    # (batch, input_dim, latent): covers NG==1 / NG>1 and L%8==0 / L%8!=0.
    configs = ((10, 16, 8), (3, 12, 5), (37, 24, 6), (20, 12, 4))
    for (batch, input_dim, latent), k in zip(configs, jax.random.split(root, len(configs))):
        kp, kx = jax.random.split(k)
        params = _make_params(kp, latent)
        x = jax.random.normal(kx, (batch, input_dim, 1), dtype=jnp.float32)

        (x_rec,) = autoencoder_forward(x, params, input_dim, latent)
        x_rec = jax.block_until_ready(x_rec)

        ref = _ref_forward(x, params, input_dim)
        # Kernel matmuls / pool / upsample use bf16 operands with f32
        # accumulation (MXU default precision); the reference is f32-HIGHEST,
        # hence the loosened tolerance.
        np.testing.assert_allclose(np.asarray(x_rec), np.asarray(ref),
                                   rtol=3e-2, atol=3e-2)

    print("KERNEL_OK")
</pallas_src>

<mosaic_0001>
module attributes {stable_mosaic.version = 11 : i64} {
  func.func @kernel(%arg0: i32, %arg1: memref<8x16xf32, #tpu.memory_space<vmem>>, %arg2: memref<16x1xf32, #tpu.memory_space<vmem>>, %arg3: memref<16x1xf32, #tpu.memory_space<vmem>>, %arg4: memref<24x128xbf16, #tpu.memory_space<vmem>>, %arg5: memref<1x128xf32, #tpu.memory_space<vmem>>, %arg6: memref<384x256xbf16, #tpu.memory_space<vmem>>, %arg7: memref<1x256xf32, #tpu.memory_space<vmem>>, %arg8: memref<8x1x16xbf16, #tpu.memory_space<vmem>>, %arg9: memref<2048x64xbf16, #tpu.memory_space<vmem>>, %arg10: memref<1x64xf32, #tpu.memory_space<vmem>>, %arg11: memref<64x2048xbf16, #tpu.memory_space<vmem>>, %arg12: memref<1x2048xf32, #tpu.memory_space<vmem>>, %arg13: memref<8x16x1xbf16, #tpu.memory_space<vmem>>, %arg14: memref<768x128xbf16, #tpu.memory_space<vmem>>, %arg15: memref<1x128xf32, #tpu.memory_space<vmem>>, %arg16: memref<384x8xbf16, #tpu.memory_space<vmem>>, %arg17: memref<1x8xf32, #tpu.memory_space<vmem>>, %arg18: memref<8x16xf32, #tpu.memory_space<vmem>>) attributes {dimension_semantics = [#tpu.dimension_semantics<parallel>], iteration_bounds = array<i64: 2>, scalar_prefetch = 0 : i64, scratch_operands = 0 : i64, tpu.core_type = #tpu.core_type<tc>, window_params = [{transform_indices = @transform_0, window_bounds = array<i64: 8, 16>}, {pipeline_mode = #tpu.pipeline_mode<synchronous>, transform_indices = @transform_1, window_bounds = array<i64: 16, 1>}, {pipeline_mode = #tpu.pipeline_mode<synchronous>, transform_indices = @transform_2, window_bounds = array<i64: 16, 1>}, {pipeline_mode = #tpu.pipeline_mode<synchronous>, transform_indices = @transform_3, window_bounds = array<i64: 24, 128>}, {pipeline_mode = #tpu.pipeline_mode<synchronous>, transform_indices = @transform_4, window_bounds = array<i64: 1, 128>}, {pipeline_mode = #tpu.pipeline_mode<synchronous>, transform_indices = @transform_5, window_bounds = array<i64: 384, 256>}, {pipeline_mode = #tpu.pipeline_mode<synchronous>, transform_indices = @transform_6, window_bounds = array<i64: 1, 256>}, {pipeline_mode = #tpu.pipeline_mode<synchronous>, transform_indices = @transform_7, window_bounds = array<i64: 8, 1, 16>}, {pipeline_mode = #tpu.pipeline_mode<synchronous>, transform_indices = @transform_8, window_bounds = array<i64: 2048, 64>}, {pipeline_mode = #tpu.pipeline_mode<synchronous>, transform_indices = @transform_9, window_bounds = array<i64: 1, 64>}, {pipeline_mode = #tpu.pipeline_mode<synchronous>, transform_indices = @transform_10, window_bounds = array<i64: 64, 2048>}, {pipeline_mode = #tpu.pipeline_mode<synchronous>, transform_indices = @transform_11, window_bounds = array<i64: 1, 2048>}, {pipeline_mode = #tpu.pipeline_mode<synchronous>, transform_indices = @transform_12, window_bounds = array<i64: 8, 16, 1>}, {pipeline_mode = #tpu.pipeline_mode<synchronous>, transform_indices = @transform_13, window_bounds = array<i64: 768, 128>}, {pipeline_mode = #tpu.pipeline_mode<synchronous>, transform_indices = @transform_14, window_bounds = array<i64: 1, 128>}, {pipeline_mode = #tpu.pipeline_mode<synchronous>, transform_indices = @transform_15, window_bounds = array<i64: 384, 8>}, {pipeline_mode = #tpu.pipeline_mode<synchronous>, transform_indices = @transform_16, window_bounds = array<i64: 1, 8>}, {transform_indices = @transform_17, window_bounds = array<i64: 8, 16>}]} {
    %c0 = arith.constant 0 : index
    %c0_0 = arith.constant 0 : index
    %0 = vector.load %arg2[%c0, %c0_0] : memref<16x1xf32, #tpu.memory_space<vmem>>, vector<16x1xf32>
    %c0_1 = arith.constant 0 : index
    %c0_2 = arith.constant 0 : index
    %1 = vector.load %arg3[%c0_1, %c0_2] : memref<16x1xf32, #tpu.memory_space<vmem>>, vector<16x1xf32>
    %c0_3 = arith.constant 0 : index
    %c0_4 = arith.constant 0 : index
    %2 = vector.load %arg1[%c0_3, %c0_4] : memref<8x16xf32, #tpu.memory_space<vmem>>, vector<8x16xf32>
    %3 = tpu.transpose %2, [1, 0] : vector<8x16xf32> -> vector<16x8xf32>
    %c1_i32 = arith.constant 1 : i32
    %4 = tpu.dynamic_rotate %3 by %c1_i32 dim 0 : vector<16x8xf32>, i32 -> vector<16x8xf32>
    %5 = vector.broadcast %0 : vector<16x1xf32> to vector<16x8xf32>
    %6 = arith.mulf %5, %4 : vector<16x8xf32>
    %c15_i32 = arith.constant 15 : i32
    %7 = tpu.dynamic_rotate %3 by %c15_i32 dim 0 : vector<16x8xf32>, i32 -> vector<16x8xf32>
    %8 = vector.broadcast %1 : vector<16x1xf32> to vector<16x8xf32>
    %9 = arith.mulf %8, %7 : vector<16x8xf32>
    %c0_5 = arith.constant 0 : index
    %c0_6 = arith.constant 0 : index
    %10 = vector.load %arg4[%c0_5, %c0_6] : memref<24x128xbf16, #tpu.memory_space<vmem>>, vector<24x128xbf16>
    %11 = tpu.concatenate %6, %3, %9 in 1 : vector<16x8xf32>, vector<16x8xf32>, vector<16x8xf32> -> vector<16x24xf32>
    %12 = arith.truncf %11 : vector<16x24xf32> to vector<16x24xbf16>
    %cst = arith.constant dense<0.000000e+00> : vector<16x128xf32>
    %13 = tpu.matmul %12, %10, %cst {dimension_numbers = #tpu.dot_dimension_numbers<[1], [0], [0], [1], [0, 0, 1, 1], [], []>} : vector<16x24xbf16>, vector<24x128xbf16>, vector<16x128xf32> -> vector<16x128xf32>
    %c0_7 = arith.constant 0 : index
    %c0_8 = arith.constant 0 : index
    %14 = vector.load %arg5[%c0_7, %c0_8] : memref<1x128xf32, #tpu.memory_space<vmem>>, vector<1x128xf32>
    %15 = vector.broadcast %14 : vector<1x128xf32> to vector<16x128xf32>
    %16 = arith.addf %13, %15 : vector<16x128xf32>
    %cst_9 = arith.constant 0.000000e+00 : f32
    %17 = vector.broadcast %cst_9 : f32 to vector<16x128xf32>
    %18 = arith.maximumf %16, %17 : vector<16x128xf32>
    %c1_i32_10 = arith.constant 1 : i32
    %19 = tpu.dynamic_rotate %18 by %c1_i32_10 dim 0 : vector<16x128xf32>, i32 -> vector<16x128xf32>
    %20 = vector.broadcast %0 : vector<16x1xf32> to vector<16x128xf32>
    %21 = arith.mulf %20, %19 : vector<16x128xf32>
    %c15_i32_11 = arith.constant 15 : i32
    %22 = tpu.dynamic_rotate %18 by %c15_i32_11 dim 0 : vector<16x128xf32>, i32 -> vector<16x128xf32>
    %23 = vector.broadcast %1 : vector<16x1xf32> to vector<16x128xf32>
    %24 = arith.mulf %23, %22 : vector<16x128xf32>
    %c0_12 = arith.constant 0 : index
    %c0_13 = arith.constant 0 : index
    %25 = vector.load %arg6[%c0_12, %c0_13] : memref<384x256xbf16, #tpu.memory_space<vmem>>, vector<384x256xbf16>
    %26 = arith.truncf %21 : vector<16x128xf32> to vector<16x128xbf16>
    %27 = vector.extract_strided_slice %25 {offsets = [0, 0], sizes = [128, 256], strides = [1, 1]} : vector<384x256xbf16> to vector<128x256xbf16>
    %cst_14 = arith.constant dense<0.000000e+00> : vector<16x256xf32>
    %28 = tpu.matmul %26, %27, %cst_14 {dimension_numbers = #tpu.dot_dimension_numbers<[1], [0], [0], [1], [0, 0, 1, 1], [], []>} : vector<16x128xbf16>, vector<128x256xbf16>, vector<16x256xf32> -> vector<16x256xf32>
    %29 = arith.truncf %18 : vector<16x128xf32> to vector<16x128xbf16>
    %30 = vector.extract_strided_slice %25 {offsets = [128, 0], sizes = [128, 256], strides = [1, 1]} : vector<384x256xbf16> to vector<128x256xbf16>
    %cst_15 = arith.constant dense<0.000000e+00> : vector<16x256xf32>
    %31 = tpu.matmul %29, %30, %cst_15 {dimension_numbers = #tpu.dot_dimension_numbers<[1], [0], [0], [1], [0, 0, 1, 1], [], []>} : vector<16x128xbf16>, vector<128x256xbf16>, vector<16x256xf32> -> vector<16x256xf32>
    %32 = arith.addf %28, %31 : vector<16x256xf32>
    %33 = arith.truncf %24 : vector<16x128xf32> to vector<16x128xbf16>
    %34 = vector.extract_strided_slice %25 {offsets = [256, 0], sizes = [128, 256], strides = [1, 1]} : vector<384x256xbf16> to vector<128x256xbf16>
    %cst_16 = arith.constant dense<0.000000e+00> : vector<16x256xf32>
    %35 = tpu.matmul %33, %34, %cst_16 {dimension_numbers = #tpu.dot_dimension_numbers<[1], [0], [0], [1], [0, 0, 1, 1], [], []>} : vector<16x128xbf16>, vector<128x256xbf16>, vector<16x256xf32> -> vector<16x256xf32>
    %36 = arith.addf %32, %35 : vector<16x256xf32>
    %c0_17 = arith.constant 0 : index
    %c0_18 = arith.constant 0 : index
    %37 = vector.load %arg7[%c0_17, %c0_18] : memref<1x256xf32, #tpu.memory_space<vmem>>, vector<1x256xf32>
    %38 = vector.broadcast %37 : vector<1x256xf32> to vector<16x256xf32>
    %39 = arith.addf %36, %38 : vector<16x256xf32>
    %cst_19 = arith.constant 0.000000e+00 : f32
    %40 = vector.broadcast %cst_19 : f32 to vector<16x256xf32>
    %41 = arith.maximumf %39, %40 : vector<16x256xf32>
    %42 = arith.truncf %41 : vector<16x256xf32> to vector<16x256xbf16>
    %c0_20 = arith.constant 0 : index
    %c0_21 = arith.constant 0 : index
    %c0_22 = arith.constant 0 : index
    %43 = vector.load %arg8[%c0_20, %c0_21, %c0_22] : memref<8x1x16xbf16, #tpu.memory_space<vmem>>, vector<1x1x16xbf16>
    %44 = vector.shape_cast %43 : vector<1x1x16xbf16> to vector<1x16xbf16>
    %cst_23 = arith.constant dense<0.000000e+00> : vector<1x256xf32>
    %45 = tpu.matmul %44, %42, %cst_23 {dimension_numbers = #tpu.dot_dimension_numbers<[1], [0], [0], [1], [0, 0, 1, 1], [], []>} : vector<1x16xbf16>, vector<16x256xbf16>, vector<1x256xf32> -> vector<1x256xf32>
    %c1 = arith.constant 1 : index
    %c0_24 = arith.constant 0 : index
    %c0_25 = arith.constant 0 : index
    %46 = vector.load %arg8[%c1, %c0_24, %c0_25] : memref<8x1x16xbf16, #tpu.memory_space<vmem>>, vector<1x1x16xbf16>
    %47 = vector.shape_cast %46 : vector<1x1x16xbf16> to vector<1x16xbf16>
    %cst_26 = arith.constant dense<0.000000e+00> : vector<1x256xf32>
    %48 = tpu.matmul %47, %42, %cst_26 {dimension_numbers = #tpu.dot_dimension_numbers<[1], [0], [0], [1], [0, 0, 1, 1], [], []>} : vector<1x16xbf16>, vector<16x256xbf16>, vector<1x256xf32> -> vector<1x256xf32>
    %c2 = arith.constant 2 : index
    %c0_27 = arith.constant 0 : index
    %c0_28 = arith.constant 0 : index
    %49 = vector.load %arg8[%c2, %c0_27, %c0_28] : memref<8x1x16xbf16, #tpu.memory_space<vmem>>, vector<1x1x16xbf16>
    %50 = vector.shape_cast %49 : vector<1x1x16xbf16> to vector<1x16xbf16>
    %cst_29 = arith.constant dense<0.000000e+00> : vector<1x256xf32>
    %51 = tpu.matmul %50, %42, %cst_29 {dimension_numbers = #tpu.dot_dimension_numbers<[1], [0], [0], [1], [0, 0, 1, 1], [], []>} : vector<1x16xbf16>, vector<16x256xbf16>, vector<1x256xf32> -> vector<1x256xf32>
    %c3 = arith.constant 3 : index
    %c0_30 = arith.constant 0 : index
    %c0_31 = arith.constant 0 : index
    %52 = vector.load %arg8[%c3, %c0_30, %c0_31] : memref<8x1x16xbf16, #tpu.memory_space<vmem>>, vector<1x1x16xbf16>
    %53 = vector.shape_cast %52 : vector<1x1x16xbf16> to vector<1x16xbf16>
    %cst_32 = arith.constant dense<0.000000e+00> : vector<1x256xf32>
    %54 = tpu.matmul %53, %42, %cst_32 {dimension_numbers = #tpu.dot_dimension_numbers<[1], [0], [0], [1], [0, 0, 1, 1], [], []>} : vector<1x16xbf16>, vector<16x256xbf16>, vector<1x256xf32> -> vector<1x256xf32>
    %c4 = arith.constant 4 : index
    %c0_33 = arith.constant 0 : index
    %c0_34 = arith.constant 0 : index
    %55 = vector.load %arg8[%c4, %c0_33, %c0_34] : memref<8x1x16xbf16, #tpu.memory_space<vmem>>, vector<1x1x16xbf16>
    %56 = vector.shape_cast %55 : vector<1x1x16xbf16> to vector<1x16xbf16>
    %cst_35 = arith.constant dense<0.000000e+00> : vector<1x256xf32>
    %57 = tpu.matmul %56, %42, %cst_35 {dimension_numbers = #tpu.dot_dimension_numbers<[1], [0], [0], [1], [0, 0, 1, 1], [], []>} : vector<1x16xbf16>, vector<16x256xbf16>, vector<1x256xf32> -> vector<1x256xf32>
    %c5 = arith.constant 5 : index
    %c0_36 = arith.constant 0 : index
    %c0_37 = arith.constant 0 : index
    %58 = vector.load %arg8[%c5, %c0_36, %c0_37] : memref<8x1x16xbf16, #tpu.memory_space<vmem>>, vector<1x1x16xbf16>
    %59 = vector.shape_cast %58 : vector<1x1x16xbf16> to vector<1x16xbf16>
    %cst_38 = arith.constant dense<0.000000e+00> : vector<1x256xf32>
    %60 = tpu.matmul %59, %42, %cst_38 {dimension_numbers = #tpu.dot_dimension_numbers<[1], [0], [0], [1], [0, 0, 1, 1], [], []>} : vector<1x16xbf16>, vector<16x256xbf16>, vector<1x256xf32> -> vector<1x256xf32>
    %c6 = arith.constant 6 : index
    %c0_39 = arith.constant 0 : index
    %c0_40 = arith.constant 0 : index
    %61 = vector.load %arg8[%c6, %c0_39, %c0_40] : memref<8x1x16xbf16, #tpu.memory_space<vmem>>, vector<1x1x16xbf16>
    %62 = vector.shape_cast %61 : vector<1x1x16xbf16> to vector<1x16xbf16>
    %cst_41 = arith.constant dense<0.000000e+00> : vector<1x256xf32>
    %63 = tpu.matmul %62, %42, %cst_41 {dimension_numbers = #tpu.dot_dimension_numbers<[1], [0], [0], [1], [0, 0, 1, 1], [], []>} : vector<1x16xbf16>, vector<16x256xbf16>, vector<1x256xf32> -> vector<1x256xf32>
    %c7 = arith.constant 7 : index
    %c0_42 = arith.constant 0 : index
    %c0_43 = arith.constant 0 : index
    %64 = vector.load %arg8[%c7, %c0_42, %c0_43] : memref<8x1x16xbf16, #tpu.memory_space<vmem>>, vector<1x1x16xbf16>
    %65 = vector.shape_cast %64 : vector<1x1x16xbf16> to vector<1x16xbf16>
    %cst_44 = arith.constant dense<0.000000e+00> : vector<1x256xf32>
    %66 = tpu.matmul %65, %42, %cst_44 {dimension_numbers = #tpu.dot_dimension_numbers<[1], [0], [0], [1], [0, 0, 1, 1], [], []>} : vector<1x16xbf16>, vector<16x256xbf16>, vector<1x256xf32> -> vector<1x256xf32>
    %67 = tpu.concatenate %45, %48, %51, %54, %57, %60, %63, %66 in 1 : vector<1x256xf32>, vector<1x256xf32>, vector<1x256xf32>, vector<1x256xf32>, vector<1x256xf32>, vector<1x256xf32>, vector<1x256xf32>, vector<1x256xf32> -> vector<1x2048xf32>
    %68 = arith.truncf %67 : vector<1x2048xf32> to vector<1x2048xbf16>
    %c0_45 = arith.constant 0 : index
    %c0_46 = arith.constant 0 : index
    %69 = vector.load %arg9[%c0_45, %c0_46] : memref<2048x64xbf16, #tpu.memory_space<vmem>>, vector<2048x64xbf16>
    %cst_47 = arith.constant dense<0.000000e+00> : vector<1x64xf32>
    %70 = tpu.matmul %68, %69, %cst_47 {dimension_numbers = #tpu.dot_dimension_numbers<[1], [0], [0], [1], [0, 0, 1, 1], [], []>} : vector<1x2048xbf16>, vector<2048x64xbf16>, vector<1x64xf32> -> vector<1x64xf32>
    %c0_48 = arith.constant 0 : index
    %c0_49 = arith.constant 0 : index
    %71 = vector.load %arg10[%c0_48, %c0_49] : memref<1x64xf32, #tpu.memory_space<vmem>>, vector<1x64xf32>
    %72 = arith.addf %70, %71 : vector<1x64xf32>
    %73 = arith.truncf %72 : vector<1x64xf32> to vector<1x64xbf16>
    %c0_50 = arith.constant 0 : index
    %c0_51 = arith.constant 0 : index
    %74 = vector.load %arg11[%c0_50, %c0_51] : memref<64x2048xbf16, #tpu.memory_space<vmem>>, vector<64x2048xbf16>
    %cst_52 = arith.constant dense<0.000000e+00> : vector<1x2048xf32>
    %75 = tpu.matmul %73, %74, %cst_52 {dimension_numbers = #tpu.dot_dimension_numbers<[1], [0], [0], [1], [0, 0, 1, 1], [], []>} : vector<1x64xbf16>, vector<64x2048xbf16>, vector<1x2048xf32> -> vector<1x2048xf32>
    %c0_53 = arith.constant 0 : index
    %c0_54 = arith.constant 0 : index
    %76 = vector.load %arg12[%c0_53, %c0_54] : memref<1x2048xf32, #tpu.memory_space<vmem>>, vector<1x2048xf32>
    %77 = arith.addf %75, %76 : vector<1x2048xf32>
    %78 = arith.truncf %77 : vector<1x2048xf32> to vector<1x2048xbf16>
    %c0_55 = arith.constant 0 : index
    %c0_56 = arith.constant 0 : index
    %c0_57 = arith.constant 0 : index
    %79 = vector.load %arg13[%c0_55, %c0_56, %c0_57] : memref<8x16x1xbf16, #tpu.memory_space<vmem>>, vector<1x16x1xbf16>
    %80 = vector.shape_cast %79 : vector<1x16x1xbf16> to vector<16x1xbf16>
    %81 = vector.extract_strided_slice %78 {offsets = [0, 0], sizes = [1, 256], strides = [1, 1]} : vector<1x2048xbf16> to vector<1x256xbf16>
    %cst_58 = arith.constant dense<0.000000e+00> : vector<16x256xf32>
    %82 = tpu.matmul %80, %81, %cst_58 {dimension_numbers = #tpu.dot_dimension_numbers<[1], [0], [0], [1], [0, 0, 1, 1], [], []>} : vector<16x1xbf16>, vector<1x256xbf16>, vector<16x256xf32> -> vector<16x256xf32>
    %c1_59 = arith.constant 1 : index
    %c0_60 = arith.constant 0 : index
    %c0_61 = arith.constant 0 : index
    %83 = vector.load %arg13[%c1_59, %c0_60, %c0_61] : memref<8x16x1xbf16, #tpu.memory_space<vmem>>, vector<1x16x1xbf16>
    %84 = vector.shape_cast %83 : vector<1x16x1xbf16> to vector<16x1xbf16>
    %85 = vector.extract_strided_slice %78 {offsets = [0, 256], sizes = [1, 256], strides = [1, 1]} : vector<1x2048xbf16> to vector<1x256xbf16>
    %cst_62 = arith.constant dense<0.000000e+00> : vector<16x256xf32>
    %86 = tpu.matmul %84, %85, %cst_62 {dimension_numbers = #tpu.dot_dimension_numbers<[1], [0], [0], [1], [0, 0, 1, 1], [], []>} : vector<16x1xbf16>, vector<1x256xbf16>, vector<16x256xf32> -> vector<16x256xf32>
    %c2_63 = arith.constant 2 : index
    %c0_64 = arith.constant 0 : index
    %c0_65 = arith.constant 0 : index
    %87 = vector.load %arg13[%c2_63, %c0_64, %c0_65] : memref<8x16x1xbf16, #tpu.memory_space<vmem>>, vector<1x16x1xbf16>
    %88 = vector.shape_cast %87 : vector<1x16x1xbf16> to vector<16x1xbf16>
    %89 = vector.extract_strided_slice %78 {offsets = [0, 512], sizes = [1, 256], strides = [1, 1]} : vector<1x2048xbf16> to vector<1x256xbf16>
    %cst_66 = arith.constant dense<0.000000e+00> : vector<16x256xf32>
    %90 = tpu.matmul %88, %89, %cst_66 {dimension_numbers = #tpu.dot_dimension_numbers<[1], [0], [0], [1], [0, 0, 1, 1], [], []>} : vector<16x1xbf16>, vector<1x256xbf16>, vector<16x256xf32> -> vector<16x256xf32>
    %c3_67 = arith.constant 3 : index
    %c0_68 = arith.constant 0 : index
    %c0_69 = arith.constant 0 : index
    %91 = vector.load %arg13[%c3_67, %c0_68, %c0_69] : memref<8x16x1xbf16, #tpu.memory_space<vmem>>, vector<1x16x1xbf16>
    %92 = vector.shape_cast %91 : vector<1x16x1xbf16> to vector<16x1xbf16>
    %93 = vector.extract_strided_slice %78 {offsets = [0, 768], sizes = [1, 256], strides = [1, 1]} : vector<1x2048xbf16> to vector<1x256xbf16>
    %cst_70 = arith.constant dense<0.000000e+00> : vector<16x256xf32>
    %94 = tpu.matmul %92, %93, %cst_70 {dimension_numbers = #tpu.dot_dimension_numbers<[1], [0], [0], [1], [0, 0, 1, 1], [], []>} : vector<16x1xbf16>, vector<1x256xbf16>, vector<16x256xf32> -> vector<16x256xf32>
    %c4_71 = arith.constant 4 : index
    %c0_72 = arith.constant 0 : index
    %c0_73 = arith.constant 0 : index
    %95 = vector.load %arg13[%c4_71, %c0_72, %c0_73] : memref<8x16x1xbf16, #tpu.memory_space<vmem>>, vector<1x16x1xbf16>
    %96 = vector.shape_cast %95 : vector<1x16x1xbf16> to vector<16x1xbf16>
    %97 = vector.extract_strided_slice %78 {offsets = [0, 1024], sizes = [1, 256], strides = [1, 1]} : vector<1x2048xbf16> to vector<1x256xbf16>
    %cst_74 = arith.constant dense<0.000000e+00> : vector<16x256xf32>
    %98 = tpu.matmul %96, %97, %cst_74 {dimension_numbers = #tpu.dot_dimension_numbers<[1], [0], [0], [1], [0, 0, 1, 1], [], []>} : vector<16x1xbf16>, vector<1x256xbf16>, vector<16x256xf32> -> vector<16x256xf32>
    %c5_75 = arith.constant 5 : index
    %c0_76 = arith.constant 0 : index
    %c0_77 = arith.constant 0 : index
    %99 = vector.load %arg13[%c5_75, %c0_76, %c0_77] : memref<8x16x1xbf16, #tpu.memory_space<vmem>>, vector<1x16x1xbf16>
    %100 = vector.shape_cast %99 : vector<1x16x1xbf16> to vector<16x1xbf16>
    %101 = vector.extract_strided_slice %78 {offsets = [0, 1280], sizes = [1, 256], strides = [1, 1]} : vector<1x2048xbf16> to vector<1x256xbf16>
    %cst_78 = arith.constant dense<0.000000e+00> : vector<16x256xf32>
    %102 = tpu.matmul %100, %101, %cst_78 {dimension_numbers = #tpu.dot_dimension_numbers<[1], [0], [0], [1], [0, 0, 1, 1], [], []>} : vector<16x1xbf16>, vector<1x256xbf16>, vector<16x256xf32> -> vector<16x256xf32>
    %c6_79 = arith.constant 6 : index
    %c0_80 = arith.constant 0 : index
    %c0_81 = arith.constant 0 : index
    %103 = vector.load %arg13[%c6_79, %c0_80, %c0_81] : memref<8x16x1xbf16, #tpu.memory_space<vmem>>, vector<1x16x1xbf16>
    %104 = vector.shape_cast %103 : vector<1x16x1xbf16> to vector<16x1xbf16>
    %105 = vector.extract_strided_slice %78 {offsets = [0, 1536], sizes = [1, 256], strides = [1, 1]} : vector<1x2048xbf16> to vector<1x256xbf16>
    %cst_82 = arith.constant dense<0.000000e+00> : vector<16x256xf32>
    %106 = tpu.matmul %104, %105, %cst_82 {dimension_numbers = #tpu.dot_dimension_numbers<[1], [0], [0], [1], [0, 0, 1, 1], [], []>} : vector<16x1xbf16>, vector<1x256xbf16>, vector<16x256xf32> -> vector<16x256xf32>
    %c7_83 = arith.constant 7 : index
    %c0_84 = arith.constant 0 : index
    %c0_85 = arith.constant 0 : index
    %107 = vector.load %arg13[%c7_83, %c0_84, %c0_85] : memref<8x16x1xbf16, #tpu.memory_space<vmem>>, vector<1x16x1xbf16>
    %108 = vector.shape_cast %107 : vector<1x16x1xbf16> to vector<16x1xbf16>
    %109 = vector.extract_strided_slice %78 {offsets = [0, 1792], sizes = [1, 256], strides = [1, 1]} : vector<1x2048xbf16> to vector<1x256xbf16>
    %cst_86 = arith.constant dense<0.000000e+00> : vector<16x256xf32>
    %110 = tpu.matmul %108, %109, %cst_86 {dimension_numbers = #tpu.dot_dimension_numbers<[1], [0], [0], [1], [0, 0, 1, 1], [], []>} : vector<16x1xbf16>, vector<1x256xbf16>, vector<16x256xf32> -> vector<16x256xf32>
    %111 = arith.addf %82, %86 : vector<16x256xf32>
    %112 = arith.addf %111, %90 : vector<16x256xf32>
    %113 = arith.addf %112, %94 : vector<16x256xf32>
    %114 = arith.addf %113, %98 : vector<16x256xf32>
    %115 = arith.addf %114, %102 : vector<16x256xf32>
    %116 = arith.addf %115, %106 : vector<16x256xf32>
    %117 = arith.addf %116, %110 : vector<16x256xf32>
    %c1_i32_87 = arith.constant 1 : i32
    %118 = tpu.dynamic_rotate %117 by %c1_i32_87 dim 0 : vector<16x256xf32>, i32 -> vector<16x256xf32>
    %119 = vector.broadcast %0 : vector<16x1xf32> to vector<16x256xf32>
    %120 = arith.mulf %119, %118 : vector<16x256xf32>
    %c15_i32_88 = arith.constant 15 : i32
    %121 = tpu.dynamic_rotate %117 by %c15_i32_88 dim 0 : vector<16x256xf32>, i32 -> vector<16x256xf32>
    %122 = vector.broadcast %1 : vector<16x1xf32> to vector<16x256xf32>
    %123 = arith.mulf %122, %121 : vector<16x256xf32>
    %c0_89 = arith.constant 0 : index
    %c0_90 = arith.constant 0 : index
    %124 = vector.load %arg14[%c0_89, %c0_90] : memref<768x128xbf16, #tpu.memory_space<vmem>>, vector<768x128xbf16>
    %125 = arith.truncf %120 : vector<16x256xf32> to vector<16x256xbf16>
    %126 = vector.extract_strided_slice %124 {offsets = [0, 0], sizes = [256, 128], strides = [1, 1]} : vector<768x128xbf16> to vector<256x128xbf16>
    %cst_91 = arith.constant dense<0.000000e+00> : vector<16x128xf32>
    %127 = tpu.matmul %125, %126, %cst_91 {dimension_numbers = #tpu.dot_dimension_numbers<[1], [0], [0], [1], [0, 0, 1, 1], [], []>} : vector<16x256xbf16>, vector<256x128xbf16>, vector<16x128xf32> -> vector<16x128xf32>
    %128 = arith.truncf %117 : vector<16x256xf32> to vector<16x256xbf16>
    %129 = vector.extract_strided_slice %124 {offsets = [256, 0], sizes = [256, 128], strides = [1, 1]} : vector<768x128xbf16> to vector<256x128xbf16>
    %cst_92 = arith.constant dense<0.000000e+00> : vector<16x128xf32>
    %130 = tpu.matmul %128, %129, %cst_92 {dimension_numbers = #tpu.dot_dimension_numbers<[1], [0], [0], [1], [0, 0, 1, 1], [], []>} : vector<16x256xbf16>, vector<256x128xbf16>, vector<16x128xf32> -> vector<16x128xf32>
    %131 = arith.addf %127, %130 : vector<16x128xf32>
    %132 = arith.truncf %123 : vector<16x256xf32> to vector<16x256xbf16>
    %133 = vector.extract_strided_slice %124 {offsets = [512, 0], sizes = [256, 128], strides = [1, 1]} : vector<768x128xbf16> to vector<256x128xbf16>
    %cst_93 = arith.constant dense<0.000000e+00> : vector<16x128xf32>
    %134 = tpu.matmul %132, %133, %cst_93 {dimension_numbers = #tpu.dot_dimension_numbers<[1], [0], [0], [1], [0, 0, 1, 1], [], []>} : vector<16x256xbf16>, vector<256x128xbf16>, vector<16x128xf32> -> vector<16x128xf32>
    %135 = arith.addf %131, %134 : vector<16x128xf32>
    %c0_94 = arith.constant 0 : index
    %c0_95 = arith.constant 0 : index
    %136 = vector.load %arg15[%c0_94, %c0_95] : memref<1x128xf32, #tpu.memory_space<vmem>>, vector<1x128xf32>
    %137 = vector.broadcast %136 : vector<1x128xf32> to vector<16x128xf32>
    %138 = arith.addf %135, %137 : vector<16x128xf32>
    %cst_96 = arith.constant 0.000000e+00 : f32
    %139 = vector.broadcast %cst_96 : f32 to vector<16x128xf32>
    %140 = arith.maximumf %138, %139 : vector<16x128xf32>
    %c1_i32_97 = arith.constant 1 : i32
    %141 = tpu.dynamic_rotate %140 by %c1_i32_97 dim 0 : vector<16x128xf32>, i32 -> vector<16x128xf32>
    %142 = vector.broadcast %0 : vector<16x1xf32> to vector<16x128xf32>
    %143 = arith.mulf %142, %141 : vector<16x128xf32>
    %c15_i32_98 = arith.constant 15 : i32
    %144 = tpu.dynamic_rotate %140 by %c15_i32_98 dim 0 : vector<16x128xf32>, i32 -> vector<16x128xf32>
    %145 = vector.broadcast %1 : vector<16x1xf32> to vector<16x128xf32>
    %146 = arith.mulf %145, %144 : vector<16x128xf32>
    %c0_99 = arith.constant 0 : index
    %c0_100 = arith.constant 0 : index
    %147 = vector.load %arg16[%c0_99, %c0_100] : memref<384x8xbf16, #tpu.memory_space<vmem>>, vector<384x8xbf16>
    %148 = arith.truncf %143 : vector<16x128xf32> to vector<16x128xbf16>
    %149 = vector.extract_strided_slice %147 {offsets = [0, 0], sizes = [128, 8], strides = [1, 1]} : vector<384x8xbf16> to vector<128x8xbf16>
    %cst_101 = arith.constant dense<0.000000e+00> : vector<16x8xf32>
    %150 = tpu.matmul %148, %149, %cst_101 {dimension_numbers = #tpu.dot_dimension_numbers<[1], [0], [0], [1], [0, 0, 1, 1], [], []>} : vector<16x128xbf16>, vector<128x8xbf16>, vector<16x8xf32> -> vector<16x8xf32>
    %151 = arith.truncf %140 : vector<16x128xf32> to vector<16x128xbf16>
    %152 = vector.extract_strided_slice %147 {offsets = [128, 0], sizes = [128, 8], strides = [1, 1]} : vector<384x8xbf16> to vector<128x8xbf16>
    %cst_102 = arith.constant dense<0.000000e+00> : vector<16x8xf32>
    %153 = tpu.matmul %151, %152, %cst_102 {dimension_numbers = #tpu.dot_dimension_numbers<[1], [0], [0], [1], [0, 0, 1, 1], [], []>} : vector<16x128xbf16>, vector<128x8xbf16>, vector<16x8xf32> -> vector<16x8xf32>
    %154 = arith.addf %150, %153 : vector<16x8xf32>
    %155 = arith.truncf %146 : vector<16x128xf32> to vector<16x128xbf16>
    %156 = vector.extract_strided_slice %147 {offsets = [256, 0], sizes = [128, 8], strides = [1, 1]} : vector<384x8xbf16> to vector<128x8xbf16>
    %cst_103 = arith.constant dense<0.000000e+00> : vector<16x8xf32>
    %157 = tpu.matmul %155, %156, %cst_103 {dimension_numbers = #tpu.dot_dimension_numbers<[1], [0], [0], [1], [0, 0, 1, 1], [], []>} : vector<16x128xbf16>, vector<128x8xbf16>, vector<16x8xf32> -> vector<16x8xf32>
    %158 = arith.addf %154, %157 : vector<16x8xf32>
    %c0_104 = arith.constant 0 : index
    %c0_105 = arith.constant 0 : index
    %159 = vector.load %arg17[%c0_104, %c0_105] : memref<1x8xf32, #tpu.memory_space<vmem>>, vector<1x8xf32>
    %160 = vector.broadcast %159 : vector<1x8xf32> to vector<16x8xf32>
    %161 = arith.addf %158, %160 : vector<16x8xf32>
    %162 = tpu.transpose %161, [1, 0] : vector<16x8xf32> -> vector<8x16xf32>
    %c0_106 = arith.constant 0 : index
    %c0_107 = arith.constant 0 : index
    %163 = vector.load %arg18[%c0_106, %c0_107] : memref<8x16xf32, #tpu.memory_space<vmem>>, vector<8x16xf32>
    tpu.vector_store %arg18[%c0_106, %c0_107], %162 {strides = array<i32>} : memref<8x16xf32, #tpu.memory_space<vmem>>, vector<8x16xf32>,
    return
  }
  func.func @transform_0(%arg0: i32) -> (i32, i32) {
    %c0_i32 = arith.constant 0 : i32
    %c0_i32_0 = arith.constant 0 : i32
    return %arg0, %c0_i32 : i32, i32
  }
  func.func @transform_1(%arg0: i32) -> (i32, i32) {
    %c0_i32 = arith.constant 0 : i32
    %c0_i32_0 = arith.constant 0 : i32
    %c0_i32_1 = arith.constant 0 : i32
    return %c0_i32, %c0_i32_0 : i32, i32
  }
  func.func @transform_2(%arg0: i32) -> (i32, i32) {
    %c0_i32 = arith.constant 0 : i32
    %c0_i32_0 = arith.constant 0 : i32
    %c0_i32_1 = arith.constant 0 : i32
    return %c0_i32, %c0_i32_0 : i32, i32
  }
  func.func @transform_3(%arg0: i32) -> (i32, i32) {
    %c0_i32 = arith.constant 0 : i32
    %c0_i32_0 = arith.constant 0 : i32
    %c0_i32_1 = arith.constant 0 : i32
    return %c0_i32, %c0_i32_0 : i32, i32
  }
  func.func @transform_4(%arg0: i32) -> (i32, i32) {
    %c0_i32 = arith.constant 0 : i32
    %c0_i32_0 = arith.constant 0 : i32
    %c0_i32_1 = arith.constant 0 : i32
    return %c0_i32, %c0_i32_0 : i32, i32
  }
  func.func @transform_5(%arg0: i32) -> (i32, i32) {
    %c0_i32 = arith.constant 0 : i32
    %c0_i32_0 = arith.constant 0 : i32
    %c0_i32_1 = arith.constant 0 : i32
    return %c0_i32, %c0_i32_0 : i32, i32
  }
  func.func @transform_6(%arg0: i32) -> (i32, i32) {
    %c0_i32 = arith.constant 0 : i32
    %c0_i32_0 = arith.constant 0 : i32
    %c0_i32_1 = arith.constant 0 : i32
    return %c0_i32, %c0_i32_0 : i32, i32
  }
  func.func @transform_7(%arg0: i32) -> (i32, i32, i32) {
    %c0_i32 = arith.constant 0 : i32
    %c0_i32_0 = arith.constant 0 : i32
    %c0_i32_1 = arith.constant 0 : i32
    %c0_i32_2 = arith.constant 0 : i32
    return %c0_i32, %c0_i32_0, %c0_i32_1 : i32, i32, i32
  }
  func.func @transform_8(%arg0: i32) -> (i32, i32) {
    %c0_i32 = arith.constant 0 : i32
    %c0_i32_0 = arith.constant 0 : i32
    %c0_i32_1 = arith.constant 0 : i32
    return %c0_i32, %c0_i32_0 : i32, i32
  }
  func.func @transform_9(%arg0: i32) -> (i32, i32) {
    %c0_i32 = arith.constant 0 : i32
    %c0_i32_0 = arith.constant 0 : i32
    %c0_i32_1 = arith.constant 0 : i32
    return %c0_i32, %c0_i32_0 : i32, i32
  }
  func.func @transform_10(%arg0: i32) -> (i32, i32) {
    %c0_i32 = arith.constant 0 : i32
    %c0_i32_0 = arith.constant 0 : i32
    %c0_i32_1 = arith.constant 0 : i32
    return %c0_i32, %c0_i32_0 : i32, i32
  }
  func.func @transform_11(%arg0: i32) -> (i32, i32) {
    %c0_i32 = arith.constant 0 : i32
    %c0_i32_0 = arith.constant 0 : i32
    %c0_i32_1 = arith.constant 0 : i32
    return %c0_i32, %c0_i32_0 : i32, i32
  }
  func.func @transform_12(%arg0: i32) -> (i32, i32, i32) {
    %c0_i32 = arith.constant 0 : i32
    %c0_i32_0 = arith.constant 0 : i32
    %c0_i32_1 = arith.constant 0 : i32
    %c0_i32_2 = arith.constant 0 : i32
    return %c0_i32, %c0_i32_0, %c0_i32_1 : i32, i32, i32
  }
  func.func @transform_13(%arg0: i32) -> (i32, i32) {
    %c0_i32 = arith.constant 0 : i32
    %c0_i32_0 = arith.constant 0 : i32
    %c0_i32_1 = arith.constant 0 : i32
    return %c0_i32, %c0_i32_0 : i32, i32
  }
  func.func @transform_14(%arg0: i32) -> (i32, i32) {
    %c0_i32 = arith.constant 0 : i32
    %c0_i32_0 = arith.constant 0 : i32
    %c0_i32_1 = arith.constant 0 : i32
    return %c0_i32, %c0_i32_0 : i32, i32
  }
  func.func @transform_15(%arg0: i32) -> (i32, i32) {
    %c0_i32 = arith.constant 0 : i32
    %c0_i32_0 = arith.constant 0 : i32
    %c0_i32_1 = arith.constant 0 : i32
    return %c0_i32, %c0_i32_0 : i32, i32
  }
  func.func @transform_16(%arg0: i32) -> (i32, i32) {
    %c0_i32 = arith.constant 0 : i32
    %c0_i32_0 = arith.constant 0 : i32
    %c0_i32_1 = arith.constant 0 : i32
    return %c0_i32, %c0_i32_0 : i32, i32
  }
  func.func @transform_17(%arg0: i32) -> (i32, i32) {
    %c0_i32 = arith.constant 0 : i32
    %c0_i32_0 = arith.constant 0 : i32
    return %arg0, %c0_i32 : i32, i32
  }
}

</mosaic_0001>

<llo_original>
// kernel: tpu_custom_call.1
$region0: #{tpu_custom_call.1}
  #allocation0 [shape = 'u32[]', space=smem, size = 0x4, offset = 0x4, fixed_abs, tag = 'smem constant byte address 0x4 - core index']
  #allocation1 [shape = 'u32[72,128]{1,0:T(1,128)}', space=vmem, size = 0x9000, scoped, tag = 'internal scratch']
  %s0 = inlined_call_operand.vmem [shape: f32[16,16], index: 0, kind: input, shape index: {}]
  %s1 = inlined_call_operand.vmem [shape: f32[16,1], index: 1, kind: input, shape index: {}]
  %s2 = inlined_call_operand.vmem [shape: f32[16,1], index: 2, kind: input, shape index: {}]
  %s3 = inlined_call_operand.vmem [shape: bf16[24,128], index: 3, kind: input, shape index: {}]
  %s4 = inlined_call_operand.vmem [shape: f32[1,128], index: 4, kind: input, shape index: {}]
  %s5 = inlined_call_operand.vmem [shape: bf16[384,256], index: 5, kind: input, shape index: {}]
  %s6 = inlined_call_operand.vmem [shape: f32[1,256], index: 6, kind: input, shape index: {}]
  %s7 = inlined_call_operand.vmem [shape: bf16[8,1,16], index: 7, kind: input, shape index: {}]
  %s8 = inlined_call_operand.vmem [shape: bf16[2048,64], index: 8, kind: input, shape index: {}]
  %s9 = inlined_call_operand.vmem [shape: f32[1,64], index: 9, kind: input, shape index: {}]
  %s10 = inlined_call_operand.vmem [shape: bf16[64,2048], index: 10, kind: input, shape index: {}]
  %s11 = inlined_call_operand.vmem [shape: f32[1,2048], index: 11, kind: input, shape index: {}]
  %s12 = inlined_call_operand.vmem [shape: bf16[8,16,1], index: 12, kind: input, shape index: {}]
  %s13 = inlined_call_operand.vmem [shape: bf16[768,128], index: 13, kind: input, shape index: {}]
  %s14 = inlined_call_operand.vmem [shape: f32[1,128], index: 14, kind: input, shape index: {}]
  %s15 = inlined_call_operand.vmem [shape: bf16[384,8], index: 15, kind: input, shape index: {}]
  %s16 = inlined_call_operand.vmem [shape: f32[1,8], index: 16, kind: input, shape index: {}]
  %s17 = inlined_call_operand.hbm [shape: f32[16,16], index: 17, kind: output, shape index: {}]
  %s18 = sld [smem:[#allocation0]]
  $region101: #{tpu_custom_call.1} parent=0
    _
  %s20 = ssub.s32 1, %s18
  %s21 = scalar_select 0, %s20, %s18
  $region1: #{tpu_custom_call.1} parent=0
    #allocation2 [shape = 'u8[8192]{0}', space=vmem, size = 0x2000, scoped, tag = 'output window, operand 0']
    #allocation3 [shape = 's32[2]{0}', space=sflag, size = 0x8, scoped, tag = 'scoped memory for tpu_custom_call.1']
    %22 = vsyncpa [#allocation3], 0
    %s23 = scalar_lea.sflag [#allocation3], 1
    %24 = vsyncpa %s23, 0
    loop: start=0, step=1, limit=4
    $region2: #{tpu_custom_call.1} parent=1 // loop_pre_header
      _
    $region3: #{tpu_custom_call.1} parent=1 // loop_header
      %s26 = sphi 0, %s30
      %p27 = scmp.ge.s32.totalorder %s26, 4
      %s36 = sphi 0, %s38
      %s39 = sphi 0, %s36
      %s40 = sphi 0, %s39
      %s56 = sphi 0, %s40
      %s60 = sphi 0, %s60
      %s62 = sphi 0, %s60
      %s63 = sphi 0, %s62
      %s77 = sphi 0, %s63
      %s81 = sphi 0, %s81
      %s83 = sphi 0, %s81
      %s84 = sphi 0, %s83
      %s98 = sphi 0, %s84
      %s102 = sphi 0, %s102
      %s104 = sphi 0, %s102
      %s105 = sphi 0, %s104
      %s119 = sphi 0, %s105
      %s123 = sphi 0, %s123
      %s125 = sphi 0, %s123
      %s126 = sphi 0, %s125
      %s140 = sphi 0, %s126
      %s144 = sphi 0, %s144
      %s146 = sphi 0, %s144
      %s147 = sphi 0, %s146
      %s161 = sphi 0, %s147
      %s165 = sphi 0, %s165
      %s167 = sphi 0, %s165
      %s168 = sphi 0, %s167
      %s182 = sphi 0, %s168
      %s186 = sphi 0, %s186
      %s188 = sphi 0, %s186
      %s189 = sphi 0, %s188
      %s203 = sphi 0, %s189
      %s207 = sphi 0, %s207
      %s209 = sphi 0, %s207
      %s210 = sphi 0, %s209
      %s224 = sphi 0, %s210
      %s228 = sphi 0, %s228
      %s230 = sphi 0, %s228
      %s231 = sphi 0, %s230
      %s245 = sphi 0, %s231
      %s249 = sphi 0, %s249
      %s251 = sphi 0, %s249
      %s252 = sphi 0, %s251
      %s266 = sphi 0, %s252
      %s270 = sphi 0, %s270
      %s272 = sphi 0, %s270
      %s273 = sphi 0, %s272
      %s287 = sphi 0, %s273
      %s291 = sphi 0, %s291
      %s293 = sphi 0, %s291
      %s294 = sphi 0, %s293
      %s308 = sphi 0, %s294
      %s312 = sphi 0, %s312
      %s314 = sphi 0, %s312
      %s315 = sphi 0, %s314
      %s329 = sphi 0, %s315
      %s333 = sphi 0, %s333
      %s335 = sphi 0, %s333
      %s336 = sphi 0, %s335
      %s350 = sphi 0, %s336
      %s354 = sphi 0, %s354
      %s356 = sphi 0, %s354
      %s357 = sphi 0, %s356
      %s371 = sphi 0, %s357
      %s375 = sphi 0, %s375
      %s377 = sphi 0, %s375
      %s378 = sphi 0, %s377
      %s392 = sphi 0, %s378
      %s398 = sphi 0, %s400
      %s401 = sphi 0, %s398
      %s402 = sphi 0, %s401
      %s418 = sphi 0, %s402
    $region4: #{tpu_custom_call.1} parent=1 // loop_header_branch
      %29 = sbr.rel (%p27) target = $region8
    $region5: #{tpu_custom_call.1} parent=1 // loop_body
      %s31 = ssub.s32 %s26, 1
      %s32 = ssub.s32 %s26, 2
      %s33 = sadd.s32 %s26, 1
      %s34 = ssub.s32 %s26, %s33
      %p35 = scmp.eq.s32.totalorder %s34, 0
      %s37 = sadd.s32 %s36, 1
      %s38 = scalar_select %p35, %s36, %s37
      %p41 = pneg %p35
      %p42 = scmp.eq.s32.totalorder %s26, 1
      %p43 = por %p41, %p42
      %p44 = scmp.ne.s32.totalorder %s36, %s39
      %p45 = scmp.eq.s32.totalorder %s26, 0
      %p46 = por %p44, %p45
      %p47 = scmp.ne.s32.totalorder %s36, %s39
      %p48 = scmp.eq.s32.totalorder %s31, 1
      %p49 = por %p47, %p48
      %p50 = scmp.ne.s32.totalorder %s39, %s40
      %p51 = scmp.eq.s32.totalorder %s31, 0
      %p52 = por %p50, %p51
      %p53 = scmp.ne.s32.totalorder %s39, %s40
      %p54 = scmp.eq.s32.totalorder %s32, 1
      %p55 = por %p53, %p54
      %p57 = scmp.ne.s32.totalorder %s40, %s56
      %p58 = scmp.eq.s32.totalorder %s32, 0
      %p59 = por %p57, %p58
      %s61 = sadd.s32 %s60, 1
      %p64 = scmp.eq.s32.totalorder %s26, 1
      %p65 = scmp.ne.s32.totalorder %s60, %s62
      %p66 = scmp.eq.s32.totalorder %s26, 0
      %p67 = por %p65, %p66
      %p68 = scmp.ne.s32.totalorder %s60, %s62
      %p69 = scmp.eq.s32.totalorder %s31, 1
      %p70 = por %p68, %p69
      %p71 = scmp.ne.s32.totalorder %s62, %s63
      %p72 = scmp.eq.s32.totalorder %s31, 0
      %p73 = por %p71, %p72
      %p74 = scmp.ne.s32.totalorder %s62, %s63
      %p75 = scmp.eq.s32.totalorder %s32, 1
      %p76 = por %p74, %p75
      %p78 = scmp.ne.s32.totalorder %s63, %s77
      %p79 = scmp.eq.s32.totalorder %s32, 0
      %p80 = por %p78, %p79
      %s82 = sadd.s32 %s81, 1
      %p85 = scmp.eq.s32.totalorder %s26, 1
      %p86 = scmp.ne.s32.totalorder %s81, %s83
      %p87 = scmp.eq.s32.totalorder %s26, 0
      %p88 = por %p86, %p87
      %p89 = scmp.ne.s32.totalorder %s81, %s83
      %p90 = scmp.eq.s32.totalorder %s31, 1
      %p91 = por %p89, %p90
      %p92 = scmp.ne.s32.totalorder %s83, %s84
      %p93 = scmp.eq.s32.totalorder %s31, 0
      %p94 = por %p92, %p93
      %p95 = scmp.ne.s32.totalorder %s83, %s84
      %p96 = scmp.eq.s32.totalorder %s32, 1
      %p97 = por %p95, %p96
      %p99 = scmp.ne.s32.totalorder %s84, %s98
      %p100 = scmp.eq.s32.totalorder %s32, 0
      %p101 = por %p99, %p100
      %s103 = sadd.s32 %s102, 1
      %p106 = scmp.eq.s32.totalorder %s26, 1
      %p107 = scmp.ne.s32.totalorder %s102, %s104
      %p108 = scmp.eq.s32.totalorder %s26, 0
      %p109 = por %p107, %p108
      %p110 = scmp.ne.s32.totalorder %s102, %s104
      %p111 = scmp.eq.s32.totalorder %s31, 1
      %p112 = por %p110, %p111
      %p113 = scmp.ne.s32.totalorder %s104, %s105
      %p114 = scmp.eq.s32.totalorder %s31, 0
      %p115 = por %p113, %p114
      %p116 = scmp.ne.s32.totalorder %s104, %s105
      %p117 = scmp.eq.s32.totalorder %s32, 1
      %p118 = por %p116, %p117
      %p120 = scmp.ne.s32.totalorder %s105, %s119
      %p121 = scmp.eq.s32.totalorder %s32, 0
      %p122 = por %p120, %p121
      %s124 = sadd.s32 %s123, 1
      %p127 = scmp.eq.s32.totalorder %s26, 1
      %p128 = scmp.ne.s32.totalorder %s123, %s125
      %p129 = scmp.eq.s32.totalorder %s26, 0
      %p130 = por %p128, %p129
      %p131 = scmp.ne.s32.totalorder %s123, %s125
      %p132 = scmp.eq.s32.totalorder %s31, 1
      %p133 = por %p131, %p132
      %p134 = scmp.ne.s32.totalorder %s125, %s126
      %p135 = scmp.eq.s32.totalorder %s31, 0
      %p136 = por %p134, %p135
      %p137 = scmp.ne.s32.totalorder %s125, %s126
      %p138 = scmp.eq.s32.totalorder %s32, 1
      %p139 = por %p137, %p138
      %p141 = scmp.ne.s32.totalorder %s126, %s140
      %p142 = scmp.eq.s32.totalorder %s32, 0
      %p143 = por %p141, %p142
      %s145 = sadd.s32 %s144, 1
      %p148 = scmp.eq.s32.totalorder %s26, 1
      %p149 = scmp.ne.s32.totalorder %s144, %s146
      %p150 = scmp.eq.s32.totalorder %s26, 0
      %p151 = por %p149, %p150
      %p152 = scmp.ne.s32.totalorder %s144, %s146
      %p153 = scmp.eq.s32.totalorder %s31, 1
      %p154 = por %p152, %p153
      %p155 = scmp.ne.s32.totalorder %s146, %s147
      %p156 = scmp.eq.s32.totalorder %s31, 0
      %p157 = por %p155, %p156
      %p158 = scmp.ne.s32.totalorder %s146, %s147
      %p159 = scmp.eq.s32.totalorder %s32, 1
      %p160 = por %p158, %p159
      %p162 = scmp.ne.s32.totalorder %s147, %s161
      %p163 = scmp.eq.s32.totalorder %s32, 0
      %p164 = por %p162, %p163
      %s166 = sadd.s32 %s165, 1
      %p169 = scmp.eq.s32.totalorder %s26, 1
      %p170 = scmp.ne.s32.totalorder %s165, %s167
      %p171 = scmp.eq.s32.totalorder %s26, 0
      %p172 = por %p170, %p171
      %p173 = scmp.ne.s32.totalorder %s165, %s167
      %p174 = scmp.eq.s32.totalorder %s31, 1
      %p175 = por %p173, %p174
      %p176 = scmp.ne.s32.totalorder %s167, %s168
      %p177 = scmp.eq.s32.totalorder %s31, 0
      %p178 = por %p176, %p177
      %p179 = scmp.ne.s32.totalorder %s167, %s168
      %p180 = scmp.eq.s32.totalorder %s32, 1
      %p181 = por %p179, %p180
      %p183 = scmp.ne.s32.totalorder %s168, %s182
      %p184 = scmp.eq.s32.totalorder %s32, 0
      %p185 = por %p183, %p184
      %s187 = sadd.s32 %s186, 1
      %p190 = scmp.eq.s32.totalorder %s26, 1
      %p191 = scmp.ne.s32.totalorder %s186, %s188
      %p192 = scmp.eq.s32.totalorder %s26, 0
      %p193 = por %p191, %p192
      %p194 = scmp.ne.s32.totalorder %s186, %s188
      %p195 = scmp.eq.s32.totalorder %s31, 1
      %p196 = por %p194, %p195
      %p197 = scmp.ne.s32.totalorder %s188, %s189
      %p198 = scmp.eq.s32.totalorder %s31, 0
      %p199 = por %p197, %p198
      %p200 = scmp.ne.s32.totalorder %s188, %s189
      %p201 = scmp.eq.s32.totalorder %s32, 1
      %p202 = por %p200, %p201
      %p204 = scmp.ne.s32.totalorder %s189, %s203
      %p205 = scmp.eq.s32.totalorder %s32, 0
      %p206 = por %p204, %p205
      %s208 = sadd.s32 %s207, 1
      %p211 = scmp.eq.s32.totalorder %s26, 1
      %p212 = scmp.ne.s32.totalorder %s207, %s209
      %p213 = scmp.eq.s32.totalorder %s26, 0
      %p214 = por %p212, %p213
      %p215 = scmp.ne.s32.totalorder %s207, %s209
      %p216 = scmp.eq.s32.totalorder %s31, 1
      %p217 = por %p215, %p216
      %p218 = scmp.ne.s32.totalorder %s209, %s210
      %p219 = scmp.eq.s32.totalorder %s31, 0
      %p220 = por %p218, %p219
      %p221 = scmp.ne.s32.totalorder %s209, %s210
      %p222 = scmp.eq.s32.totalorder %s32, 1
      %p223 = por %p221, %p222
      %p225 = scmp.ne.s32.totalorder %s210, %s224
      %p226 = scmp.eq.s32.totalorder %s32, 0
      %p227 = por %p225, %p226
      %s229 = sadd.s32 %s228, 1
      %p232 = scmp.eq.s32.totalorder %s26, 1
      %p233 = scmp.ne.s32.totalorder %s228, %s230
      %p234 = scmp.eq.s32.totalorder %s26, 0
      %p235 = por %p233, %p234
      %p236 = scmp.ne.s32.totalorder %s228, %s230
      %p237 = scmp.eq.s32.totalorder %s31, 1
      %p238 = por %p236, %p237
      %p239 = scmp.ne.s32.totalorder %s230, %s231
      %p240 = scmp.eq.s32.totalorder %s31, 0
      %p241 = por %p239, %p240
      %p242 = scmp.ne.s32.totalorder %s230, %s231
      %p243 = scmp.eq.s32.totalorder %s32, 1
      %p244 = por %p242, %p243
      %p246 = scmp.ne.s32.totalorder %s231, %s245
      %p247 = scmp.eq.s32.totalorder %s32, 0
      %p248 = por %p246, %p247
      %s250 = sadd.s32 %s249, 1
      %p253 = scmp.eq.s32.totalorder %s26, 1
      %p254 = scmp.ne.s32.totalorder %s249, %s251
      %p255 = scmp.eq.s32.totalorder %s26, 0
      %p256 = por %p254, %p255
      %p257 = scmp.ne.s32.totalorder %s249, %s251
      %p258 = scmp.eq.s32.totalorder %s31, 1
      %p259 = por %p257, %p258
      %p260 = scmp.ne.s32.totalorder %s251, %s252
      %p261 = scmp.eq.s32.totalorder %s31, 0
      %p262 = por %p260, %p261
      %p263 = scmp.ne.s32.totalorder %s251, %s252
      %p264 = scmp.eq.s32.totalorder %s32, 1
      %p265 = por %p263, %p264
      %p267 = scmp.ne.s32.totalorder %s252, %s266
      %p268 = scmp.eq.s32.totalorder %s32, 0
      %p269 = por %p267, %p268
      %s271 = sadd.s32 %s270, 1
      %p274 = scmp.eq.s32.totalorder %s26, 1
      %p275 = scmp.ne.s32.totalorder %s270, %s272
      %p276 = scmp.eq.s32.totalorder %s26, 0
      %p277 = por %p275, %p276
      %p278 = scmp.ne.s32.totalorder %s270, %s272
      %p279 = scmp.eq.s32.totalorder %s31, 1
      %p280 = por %p278, %p279
      %p281 = scmp.ne.s32.totalorder %s272, %s273
      %p282 = scmp.eq.s32.totalorder %s31, 0
      %p283 = por %p281, %p282
      %p284 = scmp.ne.s32.totalorder %s272, %s273
      %p285 = scmp.eq.s32.totalorder %s32, 1
      %p286 = por %p284, %p285
      %p288 = scmp.ne.s32.totalorder %s273, %s287
      %p289 = scmp.eq.s32.totalorder %s32, 0
      %p290 = por %p288, %p289
      %s292 = sadd.s32 %s291, 1
      %p295 = scmp.eq.s32.totalorder %s26, 1
      %p296 = scmp.ne.s32.totalorder %s291, %s293
      %p297 = scmp.eq.s32.totalorder %s26, 0
      %p298 = por %p296, %p297
      %p299 = scmp.ne.s32.totalorder %s291, %s293
      %p300 = scmp.eq.s32.totalorder %s31, 1
      %p301 = por %p299, %p300
      %p302 = scmp.ne.s32.totalorder %s293, %s294
      %p303 = scmp.eq.s32.totalorder %s31, 0
      %p304 = por %p302, %p303
      %p305 = scmp.ne.s32.totalorder %s293, %s294
      %p306 = scmp.eq.s32.totalorder %s32, 1
      %p307 = por %p305, %p306
      %p309 = scmp.ne.s32.totalorder %s294, %s308
      %p310 = scmp.eq.s32.totalorder %s32, 0
      %p311 = por %p309, %p310
      %s313 = sadd.s32 %s312, 1
      %p316 = scmp.eq.s32.totalorder %s26, 1
      %p317 = scmp.ne.s32.totalorder %s312, %s314
      %p318 = scmp.eq.s32.totalorder %s26, 0
      %p319 = por %p317, %p318
      %p320 = scmp.ne.s32.totalorder %s312, %s314
      %p321 = scmp.eq.s32.totalorder %s31, 1
      %p322 = por %p320, %p321
      %p323 = scmp.ne.s32.totalorder %s314, %s315
      %p324 = scmp.eq.s32.totalorder %s31, 0
      %p325 = por %p323, %p324
      %p326 = scmp.ne.s32.totalorder %s314, %s315
      %p327 = scmp.eq.s32.totalorder %s32, 1
      %p328 = por %p326, %p327
      %p330 = scmp.ne.s32.totalorder %s315, %s329
      %p331 = scmp.eq.s32.totalorder %s32, 0
      %p332 = por %p330, %p331
      %s334 = sadd.s32 %s333, 1
      %p337 = scmp.eq.s32.totalorder %s26, 1
      %p338 = scmp.ne.s32.totalorder %s333, %s335
      %p339 = scmp.eq.s32.totalorder %s26, 0
      %p340 = por %p338, %p339
      %p341 = scmp.ne.s32.totalorder %s333, %s335
      %p342 = scmp.eq.s32.totalorder %s31, 1
      %p343 = por %p341, %p342
      %p344 = scmp.ne.s32.totalorder %s335, %s336
      %p345 = scmp.eq.s32.totalorder %s31, 0
      %p346 = por %p344, %p345
      %p347 = scmp.ne.s32.totalorder %s335, %s336
      %p348 = scmp.eq.s32.totalorder %s32, 1
      %p349 = por %p347, %p348
      %p351 = scmp.ne.s32.totalorder %s336, %s350
      %p352 = scmp.eq.s32.totalorder %s32, 0
      %p353 = por %p351, %p352
      %s355 = sadd.s32 %s354, 1
      %p358 = scmp.eq.s32.totalorder %s26, 1
      %p359 = scmp.ne.s32.totalorder %s354, %s356
      %p360 = scmp.eq.s32.totalorder %s26, 0
      %p361 = por %p359, %p360
      %p362 = scmp.ne.s32.totalorder %s354, %s356
      %p363 = scmp.eq.s32.totalorder %s31, 1
      %p364 = por %p362, %p363
      %p365 = scmp.ne.s32.totalorder %s356, %s357
      %p366 = scmp.eq.s32.totalorder %s31, 0
      %p367 = por %p365, %p366
      %p368 = scmp.ne.s32.totalorder %s356, %s357
      %p369 = scmp.eq.s32.totalorder %s32, 1
      %p370 = por %p368, %p369
      %p372 = scmp.ne.s32.totalorder %s357, %s371
      %p373 = scmp.eq.s32.totalorder %s32, 0
      %p374 = por %p372, %p373
      %s376 = sadd.s32 %s375, 1
      %p379 = scmp.eq.s32.totalorder %s26, 1
      %p380 = scmp.ne.s32.totalorder %s375, %s377
      %p381 = scmp.eq.s32.totalorder %s26, 0
      %p382 = por %p380, %p381
      %p383 = scmp.ne.s32.totalorder %s375, %s377
      %p384 = scmp.eq.s32.totalorder %s31, 1
      %p385 = por %p383, %p384
      %p386 = scmp.ne.s32.totalorder %s377, %s378
      %p387 = scmp.eq.s32.totalorder %s31, 0
      %p388 = por %p386, %p387
      %p389 = scmp.ne.s32.totalorder %s377, %s378
      %p390 = scmp.eq.s32.totalorder %s32, 1
      %p391 = por %p389, %p390
      %p393 = scmp.ne.s32.totalorder %s378, %s392
      %p394 = scmp.eq.s32.totalorder %s32, 0
      %p395 = por %p393, %p394
      %s396 = ssub.s32 %s26, %s33
      %p397 = scmp.eq.s32.totalorder %s396, 0
      %s399 = sadd.s32 %s398, 1
      %s400 = scalar_select %p397, %s398, %s399
      %p403 = pneg %p397
      %p404 = scmp.eq.s32.totalorder %s26, 1
      %p405 = por %p403, %p404
      %p406 = scmp.ne.s32.totalorder %s398, %s401
      %p407 = scmp.eq.s32.totalorder %s26, 0
      %p408 = por %p406, %p407
      %p409 = scmp.ne.s32.totalorder %s398, %s401
      %p410 = scmp.eq.s32.totalorder %s31, 1
      %p411 = por %p409, %p410
      %p412 = scmp.ne.s32.totalorder %s401, %s402
      %p413 = scmp.eq.s32.totalorder %s31, 0
      %p414 = por %p412, %p413
      %p415 = scmp.ne.s32.totalorder %s401, %s402
      %p416 = scmp.eq.s32.totalorder %s32, 1
      %p417 = por %p415, %p416
      %p419 = scmp.ne.s32.totalorder %s402, %s418
      %p420 = scmp.eq.s32.totalorder %s32, 0
      %p421 = por %p419, %p420
      %p422 = scmp.le.s32.totalorder 1, %s26
      %p423 = scmp.lt.s32.totalorder %s26, 3
      %p424 = pnand %p422, %p423
      %p425 = pneg %p424
      // Predicated region
      $region9: #{tpu_custom_call.1} parent=5 // pred_check
        _
      $region10: #{tpu_custom_call.1} parent=5 // pred_check_branch
        %427 = sbr.rel (%p424) target = $region12
      $region11: #{tpu_custom_call.1} parent=5 // pred_region
        %s428 = ssub.s32 %s26, 1
        // Predicated region
        $region13: #{tpu_custom_call.1} parent=11 // pred_check
          %p429 = pneg %p73
        $region14: #{tpu_custom_call.1} parent=11 // pred_check_branch
          %431 = sbr.rel (%p429) target = $region16
        $region15: #{tpu_custom_call.1} parent=11 // pred_region
          _
        $region16: #{tpu_custom_call.1} parent=11 // pred_fallthru
          _
        // Predicated region
        $region17: #{tpu_custom_call.1} parent=11 // pred_check
          %p432 = pneg %p94
        $region18: #{tpu_custom_call.1} parent=11 // pred_check_branch
          %434 = sbr.rel (%p432) target = $region20
        $region19: #{tpu_custom_call.1} parent=11 // pred_region
          _
        $region20: #{tpu_custom_call.1} parent=11 // pred_fallthru
          _
        // Predicated region
        $region21: #{tpu_custom_call.1} parent=11 // pred_check
          %p435 = pneg %p115
        $region22: #{tpu_custom_call.1} parent=11 // pred_check_branch
          %437 = sbr.rel (%p435) target = $region24
        $region23: #{tpu_custom_call.1} parent=11 // pred_region
          _
        $region24: #{tpu_custom_call.1} parent=11 // pred_fallthru
          _
        // Predicated region
        $region25: #{tpu_custom_call.1} parent=11 // pred_check
          %p438 = pneg %p136
        $region26: #{tpu_custom_call.1} parent=11 // pred_check_branch
          %440 = sbr.rel (%p438) target = $region28
        $region27: #{tpu_custom_call.1} parent=11 // pred_region
          _
        $region28: #{tpu_custom_call.1} parent=11 // pred_fallthru
          _
        // Predicated region
        $region29: #{tpu_custom_call.1} parent=11 // pred_check
          %p441 = pneg %p157
        $region30: #{tpu_custom_call.1} parent=11 // pred_check_branch
          %443 = sbr.rel (%p441) target = $region32
        $region31: #{tpu_custom_call.1} parent=11 // pred_region
          _
        $region32: #{tpu_custom_call.1} parent=11 // pred_fallthru
          _
        // Predicated region
        $region33: #{tpu_custom_call.1} parent=11 // pred_check
          %p444 = pneg %p178
        $region34: #{tpu_custom_call.1} parent=11 // pred_check_branch
          %446 = sbr.rel (%p444) target = $region36
        $region35: #{tpu_custom_call.1} parent=11 // pred_region
          _
        $region36: #{tpu_custom_call.1} parent=11 // pred_fallthru
          _
        // Predicated region
        $region37: #{tpu_custom_call.1} parent=11 // pred_check
          %p447 = pneg %p199
        $region38: #{tpu_custom_call.1} parent=11 // pred_check_branch
          %449 = sbr.rel (%p447) target = $region40
        $region39: #{tpu_custom_call.1} parent=11 // pred_region
          _
        $region40: #{tpu_custom_call.1} parent=11 // pred_fallthru
          _
        // Predicated region
        $region41: #{tpu_custom_call.1} parent=11 // pred_check
          %p450 = pneg %p220
        $region42: #{tpu_custom_call.1} parent=11 // pred_check_branch
          %452 = sbr.rel (%p450) target = $region44
        $region43: #{tpu_custom_call.1} parent=11 // pred_region
          _
        $region44: #{tpu_custom_call.1} parent=11 // pred_fallthru
          _
        // Predicated region
        $region45: #{tpu_custom_call.1} parent=11 // pred_check
          %p453 = pneg %p241
        $region46: #{tpu_custom_call.1} parent=11 // pred_check_branch
          %455 = sbr.rel (%p453) target = $region48
        $region47: #{tpu_custom_call.1} parent=11 // pred_region
          _
        $region48: #{tpu_custom_call.1} parent=11 // pred_fallthru
          _
        // Predicated region
        $region49: #{tpu_custom_call.1} parent=11 // pred_check
          %p456 = pneg %p262
        $region50: #{tpu_custom_call.1} parent=11 // pred_check_branch
          %458 = sbr.rel (%p456) target = $region52
        $region51: #{tpu_custom_call.1} parent=11 // pred_region
          _
        $region52: #{tpu_custom_call.1} parent=11 // pred_fallthru
          _
        // Predicated region
        $region53: #{tpu_custom_call.1} parent=11 // pred_check
          %p459 = pneg %p283
        $region54: #{tpu_custom_call.1} parent=11 // pred_check_branch
          %461 = sbr.rel (%p459) target = $region56
        $region55: #{tpu_custom_call.1} parent=11 // pred_region
          _
        $region56: #{tpu_custom_call.1} parent=11 // pred_fallthru
          _
        // Predicated region
        $region57: #{tpu_custom_call.1} parent=11 // pred_check
          %p462 = pneg %p304
        $region58: #{tpu_custom_call.1} parent=11 // pred_check_branch
          %464 = sbr.rel (%p462) target = $region60
        $region59: #{tpu_custom_call.1} parent=11 // pred_region
          _
        $region60: #{tpu_custom_call.1} parent=11 // pred_fallthru
          _
        // Predicated region
        $region61: #{tpu_custom_call.1} parent=11 // pred_check
          %p465 = pneg %p325
        $region62: #{tpu_custom_call.1} parent=11 // pred_check_branch
          %467 = sbr.rel (%p465) target = $region64
        $region63: #{tpu_custom_call.1} parent=11 // pred_region
          _
        $region64: #{tpu_custom_call.1} parent=11 // pred_fallthru
          _
        // Predicated region
        $region65: #{tpu_custom_call.1} parent=11 // pred_check
          %p468 = pneg %p346
        $region66: #{tpu_custom_call.1} parent=11 // pred_check_branch
          %470 = sbr.rel (%p468) target = $region68
        $region67: #{tpu_custom_call.1} parent=11 // pred_region
          _
        $region68: #{tpu_custom_call.1} parent=11 // pred_fallthru
          _
        // Predicated region
        $region69: #{tpu_custom_call.1} parent=11 // pred_check
          %p471 = pneg %p367
        $region70: #{tpu_custom_call.1} parent=11 // pred_check_branch
          %473 = sbr.rel (%p471) target = $region72
        $region71: #{tpu_custom_call.1} parent=11 // pred_region
          _
        $region72: #{tpu_custom_call.1} parent=11 // pred_fallthru
          _
        // Predicated region
        $region73: #{tpu_custom_call.1} parent=11 // pred_check
          %p474 = pneg %p388
        $region74: #{tpu_custom_call.1} parent=11 // pred_check_branch
          %476 = sbr.rel (%p474) target = $region76
        $region75: #{tpu_custom_call.1} parent=11 // pred_region
          _
        $region76: #{tpu_custom_call.1} parent=11 // pred_fallthru
          _
      $region12: #{tpu_custom_call.1} parent=5 // pred_fallthru
        _
      %p477 = scmp.lt.s32.totalorder %s26, 2
      // Predicated region
      $region77: #{tpu_custom_call.1} parent=5 // pred_check
        %p478 = pneg %p477
      $region78: #{tpu_custom_call.1} parent=5 // pred_check_branch
        %480 = sbr.rel (%p478) target = $region80
      $region79: #{tpu_custom_call.1} parent=5 // pred_region
        // Predicated region
        $region81: #{tpu_custom_call.1} parent=79 // pred_check
          %p481 = pneg %p46
        $region82: #{tpu_custom_call.1} parent=79 // pred_check_branch
          %483 = sbr.rel (%p481) target = $region84
        $region83: #{tpu_custom_call.1} parent=79 // pred_region
          %p484 = scmp.lt.s32.totalorder %s26, 1
          %s485 = scalar_select %p484, %s26, 1
          %s486 = smul.addr %s485, 8
          %s487 = scalar_lea.vmem %s0, %s486
        $region84: #{tpu_custom_call.1} parent=79 // pred_fallthru
          _
      $region80: #{tpu_custom_call.1} parent=5 // pred_fallthru
        _
      %p488 = scmp.le.s32.totalorder 1, %s26
      %p489 = scmp.lt.s32.totalorder %s26, 3
      %p490 = pnand %p488, %p489
      %p491 = pneg %p490
      // Predicated region
      $region85: #{tpu_custom_call.1} parent=5 // pred_check
        _
      $region86: #{tpu_custom_call.1} parent=5 // pred_check_branch
        %493 = sbr.rel (%p490) target = $region88
      $region87: #{tpu_custom_call.1} parent=5 // pred_region
        %s494 = ssub.s32 %s26, 1
        %p495 = scmp.lt.s32.totalorder %s31, 1
        %s496 = scalar_select %p495, %s31, 1
        %s497 = smul.addr %s496, 8
        %s498 = scalar_lea.vmem %s0, %s497
        %p499 = pneg %p52
        %p500 = pneg %p49
        %p501 = pneg %p73
        %p502 = pneg %p70
        %p503 = pneg %p94
        %p504 = pneg %p91
        %p505 = pneg %p115
        %p506 = pneg %p112
        %p507 = pneg %p136
        %p508 = pneg %p133
        %p509 = pneg %p157
        %p510 = pneg %p154
        %p511 = pneg %p178
        %p512 = pneg %p175
        %p513 = pneg %p199
        %p514 = pneg %p196
        %p515 = pneg %p220
        %p516 = pneg %p217
        %p517 = pneg %p241
        %p518 = pneg %p238
        %p519 = pneg %p262
        %p520 = pneg %p259
        %p521 = pneg %p283
        %p522 = pneg %p280
        %p523 = pneg %p304
        %p524 = pneg %p301
        %p525 = pneg %p325
        %p526 = pneg %p322
        %p527 = pneg %p346
        %p528 = pneg %p343
        %p529 = pneg %p367
        %p530 = pneg %p364
        %p531 = pneg %p388
        %p532 = pneg %p385
        %p533 = pneg %p414
        %p534 = pneg %p411
        %s535 = sand.u32 %s401, 1
        %s536 = scalar_lea.sflag [#allocation3], %s535
        %s537 = sand.u32 %s401, 1
        %s538 = smul.addr %s537, 8
        %s539 = scalar_lea.vmem [#allocation2], %s538
        %p540 = scmp.lt.s32.totalorder %s31, 1
        %s541 = scalar_select %p540, %s31, 1
        %s542 = smul.addr %s541, 8
        %s543 = scalar_lea.vmem %s0, %s542
        %v545 = vld [vmem:[%s1] sm:$0xff]
        %v546 = vld [vmem:[%s1 + $0x8] sm:$0xff]
        %v547 = vld [vmem:[%s2] sm:$0xff]
        %v548 = vld [vmem:[%s2 + $0x8] sm:$0xff]
        %v549 = vld [vmem:[%s543] sm:$0xff]
        %550 = vxpose.xlu0.b32.start [1/16] %v549, 128
        %551 = vxpose.xlu0.b32.cont [2/16] 0.0, 128
        %552 = vxpose.xlu0.b32.cont [3/16] 0.0, 128
        %553 = vxpose.xlu0.b32.cont [4/16] 0.0, 128
        %554 = vxpose.xlu0.b32.cont [5/16] 0.0, 128
        %555 = vxpose.xlu0.b32.cont [6/16] 0.0, 128
        %556 = vxpose.xlu0.b32.cont [7/16] 0.0, 128
        %557 = vxpose.xlu0.b32.cont [8/16] 0.0, 128
        %558 = vxpose.xlu0.b32.cont [9/16] 0.0, 128
        %559 = vxpose.xlu0.b32.cont [10/16] 0.0, 128
        %560 = vxpose.xlu0.b32.cont [11/16] 0.0, 128
        %561 = vxpose.xlu0.b32.cont [12/16] 0.0, 128
        %562 = vxpose.xlu0.b32.cont [13/16] 0.0, 128
        %563 = vxpose.xlu0.b32.cont [14/16] 0.0, 128
        %564 = vxpose.xlu0.b32.cont [15/16] 0.0, 128
        %565 = vxpose.xlu0.b32.end [16/16] 0.0, 128
        %v566 = vpop.trf.xlu0
        %v567 = vpop.trf.xlu0
        %v568 = vpop.trf.xlu0
        %v569 = vpop.trf.xlu0
        %v570 = vpop.trf.xlu0
        %v571 = vpop.trf.xlu0
        %v572 = vpop.trf.xlu0
        %v573 = vpop.trf.xlu0
        %v574 = vpop.trf.xlu0
        %v575 = vpop.trf.xlu0
        %v576 = vpop.trf.xlu0
        %v577 = vpop.trf.xlu0
        %v578 = vpop.trf.xlu0
        %v579 = vpop.trf.xlu0
        %v580 = vpop.trf.xlu0
        %v581 = vpop.trf.xlu0
        %v582 = vrot.slane %v566, 7
        %v583 = vrot.slane %v567, 7
        %v584 = vlaneseq
        %v585 = vshrl.u32 %v584, 7
        %vm586 = vcmp.lt.s32.totalorder %v585, 1
        %v587 = vsel %vm586, %v582, %v583
        %v588 = vsel %vm586, %v583, %v582
        %590 = vset.pattern.permute.xlu0 0
        %591 = vperm.xlu0 %590, %v545
        %v592 = vpop.permute.xlu0 %591
        %595 = vset.pattern.permute.xlu0 0
        %596 = vperm.xlu0 %595, %v546
        %v597 = vpop.permute.xlu0 %596
        %v599 = vmul.f32 %v592, %v588
        %v600 = vmul.f32 %v597, %v587
        %v601 = vrot.slane %v566, 1
        %v602 = vrot.slane %v567, 1
        %vm603 = vcmp.lt.s32.totalorder %v585, 7
        %v604 = vsel %vm603, %v601, %v602
        %v605 = vsel %vm603, %v602, %v601
        %607 = vset.pattern.permute.xlu0 0
        %608 = vperm.xlu0 %607, %v547
        %v609 = vpop.permute.xlu0 %608
        %612 = vset.pattern.permute.xlu0 0
        %613 = vperm.xlu0 %612, %v548
        %v614 = vpop.permute.xlu0 %613
        %v616 = vmul.f32 %v609, %v604
        %v617 = vmul.f32 %v614, %v605
        %v618 = vld [vmem:[%s3] sm:$0xf]
        %v619 = vld [vmem:[%s3 + $0x4] sm:$0xf]
        %v620 = vld [vmem:[%s3 + $0x8] sm:$0xf]
        %623 = vrot.lane.b32.xlu0 %v566, 8
        %v624 = vpop.permute.xlu0 %623
        %625 = vrot.lane.b32.xlu0 %v567, 8
        %v626 = vpop.permute.xlu0 %625
        %631 = vrot.lane.b32.xlu0 %v616, 16
        %v632 = vpop.permute.xlu0 %631
        %633 = vrot.lane.b32.xlu0 %v617, 16
        %v634 = vpop.permute.xlu0 %633
        %vm637 = vcmask 64512
        %v638 = vsel %vm637, %v599, %v624
        %v639 = vsel %vm637, %v600, %v626
        %vm640 = vcmask 130048
        %v641 = vsel %vm640, %v638, %v632
        %v642 = vsel %vm640, %v639, %v634
        %v643 = vpack.c.bf16 %v642, %v641
        %v644 = vld [vmem:[%s4] sm:$0x1]
        %v646 = vperm.slane %v644, 0
        %v651 = vunpack.c.l.b16 %v618
        %v652 = vunpack.c.l.b16 %v619
        %v653 = vunpack.c.l.b16 %v620
        %v654 = vpack.c.b16 %v652, %v651
        %v655 = vpack.c.b16 %v653, %v653
        %vm657 = vcmask 195584
        %v659 = vsel %vm657, %v643, 0
        %vm661 = vcmask 1043456
        %v663 = vsel %vm661, %v655, 0
        %665 = vmatpush.bf16.msra.mxu0 0
        %666 = vmatpush.bf16.msra.mxu0 0
        %667 = vmatpush.bf16.msra.mxu0 0
        %668 = vmatpush.bf16.msra.mxu0 0
        %669 = vmatpush.bf16.msra.mxu0 0
        %670 = vmatpush.bf16.msra.mxu0 0
        %671 = vmatpush.bf16.msra.mxu0 %v663
        %672 = vmatpush.bf16.msra.mxu0 %v654
        %673 = vmatmul.bf16.gmra.mxu0 %v659
        %v674 = vpop.f32.mrf.mxu0
        %v675 = vadd.f32 %v646, %v674
        %v676 = vpop.f32.mrf.mxu0
        %v677 = vadd.f32 %v646, %v676
        %678 = vdwg.mxu0
        %v679 = vmax.f32 %v675, 0.0
        %v680 = vmax.f32 %v677, 0.0
        %v681 = vrot.slane %v679, 7
        %v682 = vrot.slane %v680, 7
        %v683 = vsel %vm586, %v681, %v682
        %v684 = vsel %vm586, %v682, %v681
        %v685 = vmul.f32 %v592, %v684
        %v686 = vmul.f32 %v597, %v683
        %v687 = vrot.slane %v679, 1
        %v688 = vrot.slane %v680, 1
        %v689 = vsel %vm603, %v687, %v688
        %v690 = vsel %vm603, %v688, %v687
        %v691 = vmul.f32 %v609, %v689
        %v692 = vmul.f32 %v614, %v690
        %v693 = vld [vmem:[%s5] sm:$0xff]
        %v694 = vld [vmem:[%s5 + $0x8] sm:$0xff]
        %v695 = vld [vmem:[%s5 + $0x10] sm:$0xff]
        %v696 = vld [vmem:[%s5 + $0x18] sm:$0xff]
        %v697 = vld [vmem:[%s5 + $0x20] sm:$0xff]
        %v698 = vld [vmem:[%s5 + $0x28] sm:$0xff]
        %v699 = vld [vmem:[%s5 + $0x30] sm:$0xff]
        %v700 = vld [vmem:[%s5 + $0x38] sm:$0xff]
        %v701 = vld [vmem:[%s5 + $0x40] sm:$0xff]
        %v702 = vld [vmem:[%s5 + $0x48] sm:$0xff]
        %v703 = vld [vmem:[%s5 + $0x50] sm:$0xff]
        %v704 = vld [vmem:[%s5 + $0x58] sm:$0xff]
        %v705 = vld [vmem:[%s5 + $0x60] sm:$0xff]
        %v706 = vld [vmem:[%s5 + $0x68] sm:$0xff]
        %v707 = vld [vmem:[%s5 + $0x70] sm:$0xff]
        %v708 = vld [vmem:[%s5 + $0x78] sm:$0xff]
        %v709 = vld [vmem:[%s5 + $0x80] sm:$0xff]
        %v710 = vld [vmem:[%s5 + $0x88] sm:$0xff]
        %v711 = vld [vmem:[%s5 + $0x90] sm:$0xff]
        %v712 = vld [vmem:[%s5 + $0x98] sm:$0xff]
        %v713 = vld [vmem:[%s5 + $0xa0] sm:$0xff]
        %v714 = vld [vmem:[%s5 + $0xa8] sm:$0xff]
        %v715 = vld [vmem:[%s5 + $0xb0] sm:$0xff]
        %v716 = vld [vmem:[%s5 + $0xb8] sm:$0xff]
        %v717 = vld [vmem:[%s5 + $0xc0] sm:$0xff]
        %v718 = vld [vmem:[%s5 + $0xc8] sm:$0xff]
        %v719 = vld [vmem:[%s5 + $0xd0] sm:$0xff]
        %v720 = vld [vmem:[%s5 + $0xd8] sm:$0xff]
        %v721 = vld [vmem:[%s5 + $0xe0] sm:$0xff]
        %v722 = vld [vmem:[%s5 + $0xe8] sm:$0xff]
        %v723 = vld [vmem:[%s5 + $0xf0] sm:$0xff]
        %v724 = vld [vmem:[%s5 + $0xf8] sm:$0xff]
        %v725 = vld [vmem:[%s5 + $0x100] sm:$0xff]
        %v726 = vld [vmem:[%s5 + $0x108] sm:$0xff]
        %v727 = vld [vmem:[%s5 + $0x110] sm:$0xff]
        %v728 = vld [vmem:[%s5 + $0x118] sm:$0xff]
        %v729 = vld [vmem:[%s5 + $0x120] sm:$0xff]
        %v730 = vld [vmem:[%s5 + $0x128] sm:$0xff]
        %v731 = vld [vmem:[%s5 + $0x130] sm:$0xff]
        %v732 = vld [vmem:[%s5 + $0x138] sm:$0xff]
        %v733 = vld [vmem:[%s5 + $0x140] sm:$0xff]
        %v734 = vld [vmem:[%s5 + $0x148] sm:$0xff]
        %v735 = vld [vmem:[%s5 + $0x150] sm:$0xff]
        %v736 = vld [vmem:[%s5 + $0x158] sm:$0xff]
        %v737 = vld [vmem:[%s5 + $0x160] sm:$0xff]
        %v738 = vld [vmem:[%s5 + $0x168] sm:$0xff]
        %v739 = vld [vmem:[%s5 + $0x170] sm:$0xff]
        %v740 = vld [vmem:[%s5 + $0x178] sm:$0xff]
        %v741 = vpack.c.bf16 %v686, %v685
        %v742 = vpack.c.bf16 %v680, %v679
        %v759 = vunpack.c.l.b16 %v709
        %v760 = vunpack.c.h.b16 %v709
        %v761 = vunpack.c.l.b16 %v710
        %v762 = vunpack.c.h.b16 %v710
        %v763 = vunpack.c.l.b16 %v711
        %v764 = vunpack.c.h.b16 %v711
        %v765 = vunpack.c.l.b16 %v712
        %v766 = vunpack.c.h.b16 %v712
        %v767 = vunpack.c.l.b16 %v713
        %v768 = vunpack.c.h.b16 %v713
        %v769 = vunpack.c.l.b16 %v714
        %v770 = vunpack.c.h.b16 %v714
        %v771 = vunpack.c.l.b16 %v715
        %v772 = vunpack.c.h.b16 %v715
        %v773 = vunpack.c.l.b16 %v716
        %v774 = vunpack.c.h.b16 %v716
        %v775 = vunpack.c.l.b16 %v717
        %v776 = vunpack.c.h.b16 %v717
        %v777 = vunpack.c.l.b16 %v718
        %v778 = vunpack.c.h.b16 %v718
        %v779 = vunpack.c.l.b16 %v719
        %v780 = vunpack.c.h.b16 %v719
        %v781 = vunpack.c.l.b16 %v720
        %v782 = vunpack.c.h.b16 %v720
        %v783 = vunpack.c.l.b16 %v721
        %v784 = vunpack.c.h.b16 %v721
        %v785 = vunpack.c.l.b16 %v722
        %v786 = vunpack.c.h.b16 %v722
        %v787 = vunpack.c.l.b16 %v723
        %v788 = vunpack.c.h.b16 %v723
        %v789 = vunpack.c.l.b16 %v724
        %v790 = vunpack.c.h.b16 %v724
        %v791 = vpack.c.b16 %v761, %v759
        %v792 = vpack.c.b16 %v762, %v760
        %v793 = vpack.c.b16 %v765, %v763
        %v794 = vpack.c.b16 %v766, %v764
        %v795 = vpack.c.b16 %v769, %v767
        %v796 = vpack.c.b16 %v770, %v768
        %v797 = vpack.c.b16 %v773, %v771
        %v798 = vpack.c.b16 %v774, %v772
        %v799 = vpack.c.b16 %v777, %v775
        %v800 = vpack.c.b16 %v778, %v776
        %v801 = vpack.c.b16 %v781, %v779
        %v802 = vpack.c.b16 %v782, %v780
        %v803 = vpack.c.b16 %v785, %v783
        %v804 = vpack.c.b16 %v786, %v784
        %v805 = vpack.c.b16 %v789, %v787
        %v806 = vpack.c.b16 %v790, %v788
        %823 = vmatpush.bf16.msra.mxu0 %v805
        %824 = vmatpush.bf16.msra.mxu0 %v803
        %825 = vmatpush.bf16.msra.mxu0 %v801
        %826 = vmatpush.bf16.msra.mxu0 %v799
        %827 = vmatpush.bf16.msra.mxu0 %v797
        %828 = vmatpush.bf16.msra.mxu0 %v795
        %829 = vmatpush.bf16.msra.mxu0 %v793
        %830 = vmatpush.bf16.msra.mxu0 %v791
        %831 = vmatmul.bf16.gmra.mxu0 %v742
        %v832 = vpop.f32.mrf.mxu0
        %v833 = vadd.f32 0.0, %v832
        %v834 = vpop.f32.mrf.mxu0
        %v835 = vadd.f32 0.0, %v834
        %836 = vdwg.mxu0
        %837 = vmatpush.bf16.msra.mxu0 %v806
        %838 = vmatpush.bf16.msra.mxu0 %v804
        %839 = vmatpush.bf16.msra.mxu0 %v802
        %840 = vmatpush.bf16.msra.mxu0 %v800
        %841 = vmatpush.bf16.msra.mxu0 %v798
        %842 = vmatpush.bf16.msra.mxu0 %v796
        %843 = vmatpush.bf16.msra.mxu0 %v794
        %844 = vmatpush.bf16.msra.mxu0 %v792
        %845 = vmatmul.bf16.gmra.mxu0 %v742
        %v846 = vpop.f32.mrf.mxu0
        %v847 = vadd.f32 0.0, %v846
        %v848 = vpop.f32.mrf.mxu0
        %v849 = vadd.f32 0.0, %v848
        %850 = vdwg.mxu0
        %v867 = vunpack.c.l.b16 %v693
        %v868 = vunpack.c.h.b16 %v693
        %v869 = vunpack.c.l.b16 %v694
        %v870 = vunpack.c.h.b16 %v694
        %v871 = vunpack.c.l.b16 %v695
        %v872 = vunpack.c.h.b16 %v695
        %v873 = vunpack.c.l.b16 %v696
        %v874 = vunpack.c.h.b16 %v696
        %v875 = vunpack.c.l.b16 %v697
        %v876 = vunpack.c.h.b16 %v697
        %v877 = vunpack.c.l.b16 %v698
        %v878 = vunpack.c.h.b16 %v698
        %v879 = vunpack.c.l.b16 %v699
        %v880 = vunpack.c.h.b16 %v699
        %v881 = vunpack.c.l.b16 %v700
        %v882 = vunpack.c.h.b16 %v700
        %v883 = vunpack.c.l.b16 %v701
        %v884 = vunpack.c.h.b16 %v701
        %v885 = vunpack.c.l.b16 %v702
        %v886 = vunpack.c.h.b16 %v702
        %v887 = vunpack.c.l.b16 %v703
        %v888 = vunpack.c.h.b16 %v703
        %v889 = vunpack.c.l.b16 %v704
        %v890 = vunpack.c.h.b16 %v704
        %v891 = vunpack.c.l.b16 %v705
        %v892 = vunpack.c.h.b16 %v705
        %v893 = vunpack.c.l.b16 %v706
        %v894 = vunpack.c.h.b16 %v706
        %v895 = vunpack.c.l.b16 %v707
        %v896 = vunpack.c.h.b16 %v707
        %v897 = vunpack.c.l.b16 %v708
        %v898 = vunpack.c.h.b16 %v708
        %v899 = vpack.c.b16 %v869, %v867
        %v900 = vpack.c.b16 %v870, %v868
        %v901 = vpack.c.b16 %v873, %v871
        %v902 = vpack.c.b16 %v874, %v872
        %v903 = vpack.c.b16 %v877, %v875
        %v904 = vpack.c.b16 %v878, %v876
        %v905 = vpack.c.b16 %v881, %v879
        %v906 = vpack.c.b16 %v882, %v880
        %v907 = vpack.c.b16 %v885, %v883
        %v908 = vpack.c.b16 %v886, %v884
        %v909 = vpack.c.b16 %v889, %v887
        %v910 = vpack.c.b16 %v890, %v888
        %v911 = vpack.c.b16 %v893, %v891
        %v912 = vpack.c.b16 %v894, %v892
        %v913 = vpack.c.b16 %v897, %v895
        %v914 = vpack.c.b16 %v898, %v896
        %931 = vmatpush.bf16.msra.mxu0 %v913
        %932 = vmatpush.bf16.msra.mxu0 %v911
        %933 = vmatpush.bf16.msra.mxu0 %v909
        %934 = vmatpush.bf16.msra.mxu0 %v907
        %935 = vmatpush.bf16.msra.mxu0 %v905
        %936 = vmatpush.bf16.msra.mxu0 %v903
        %937 = vmatpush.bf16.msra.mxu0 %v901
        %938 = vmatpush.bf16.msra.mxu0 %v899
        %939 = vmatmul.bf16.gmra.mxu0 %v741
        %v940 = vpop.f32.mrf.mxu0
        %v941 = vadd.f32 %v833, %v940
        %v942 = vpop.f32.mrf.mxu0
        %v943 = vadd.f32 %v835, %v942
        %944 = vdwg.mxu0
        %945 = vmatpush.bf16.msra.mxu0 %v914
        %946 = vmatpush.bf16.msra.mxu0 %v912
        %947 = vmatpush.bf16.msra.mxu0 %v910
        %948 = vmatpush.bf16.msra.mxu0 %v908
        %949 = vmatpush.bf16.msra.mxu0 %v906
        %950 = vmatpush.bf16.msra.mxu0 %v904
        %951 = vmatpush.bf16.msra.mxu0 %v902
        %952 = vmatpush.bf16.msra.mxu0 %v900
        %953 = vmatmul.bf16.gmra.mxu0 %v741
        %v954 = vpop.f32.mrf.mxu0
        %v955 = vadd.f32 %v847, %v954
        %v956 = vpop.f32.mrf.mxu0
        %v957 = vadd.f32 %v849, %v956
        %958 = vdwg.mxu0
        %v959 = vpack.c.bf16 %v692, %v691
        %v976 = vunpack.c.l.b16 %v725
        %v977 = vunpack.c.h.b16 %v725
        %v978 = vunpack.c.l.b16 %v726
        %v979 = vunpack.c.h.b16 %v726
        %v980 = vunpack.c.l.b16 %v727
        %v981 = vunpack.c.h.b16 %v727
        %v982 = vunpack.c.l.b16 %v728
        %v983 = vunpack.c.h.b16 %v728
        %v984 = vunpack.c.l.b16 %v729
        %v985 = vunpack.c.h.b16 %v729
        %v986 = vunpack.c.l.b16 %v730
        %v987 = vunpack.c.h.b16 %v730
        %v988 = vunpack.c.l.b16 %v731
        %v989 = vunpack.c.h.b16 %v731
        %v990 = vunpack.c.l.b16 %v732
        %v991 = vunpack.c.h.b16 %v732
        %v992 = vunpack.c.l.b16 %v733
        %v993 = vunpack.c.h.b16 %v733
        %v994 = vunpack.c.l.b16 %v734
        %v995 = vunpack.c.h.b16 %v734
        %v996 = vunpack.c.l.b16 %v735
        %v997 = vunpack.c.h.b16 %v735
        %v998 = vunpack.c.l.b16 %v736
        %v999 = vunpack.c.h.b16 %v736
        %v1000 = vunpack.c.l.b16 %v737
        %v1001 = vunpack.c.h.b16 %v737
        %v1002 = vunpack.c.l.b16 %v738
        %v1003 = vunpack.c.h.b16 %v738
        %v1004 = vunpack.c.l.b16 %v739
        %v1005 = vunpack.c.h.b16 %v739
        %v1006 = vunpack.c.l.b16 %v740
        %v1007 = vunpack.c.h.b16 %v740
        %v1008 = vpack.c.b16 %v978, %v976
        %v1009 = vpack.c.b16 %v979, %v977
        %v1010 = vpack.c.b16 %v982, %v980
        %v1011 = vpack.c.b16 %v983, %v981
        %v1012 = vpack.c.b16 %v986, %v984
        %v1013 = vpack.c.b16 %v987, %v985
        %v1014 = vpack.c.b16 %v990, %v988
        %v1015 = vpack.c.b16 %v991, %v989
        %v1016 = vpack.c.b16 %v994, %v992
        %v1017 = vpack.c.b16 %v995, %v993
        %v1018 = vpack.c.b16 %v998, %v996
        %v1019 = vpack.c.b16 %v999, %v997
        %v1020 = vpack.c.b16 %v1002, %v1000
        %v1021 = vpack.c.b16 %v1003, %v1001
        %v1022 = vpack.c.b16 %v1006, %v1004
        %v1023 = vpack.c.b16 %v1007, %v1005
        %1040 = vmatpush.bf16.msra.mxu0 %v1022
        %1041 = vmatpush.bf16.msra.mxu0 %v1020
        %1042 = vmatpush.bf16.msra.mxu0 %v1018
        %1043 = vmatpush.bf16.msra.mxu0 %v1016
        %1044 = vmatpush.bf16.msra.mxu0 %v1014
        %1045 = vmatpush.bf16.msra.mxu0 %v1012
        %1046 = vmatpush.bf16.msra.mxu0 %v1010
        %1047 = vmatpush.bf16.msra.mxu0 %v1008
        %1048 = vmatmul.bf16.gmra.mxu0 %v959
        %v1049 = vpop.f32.mrf.mxu0
        %v1050 = vadd.f32 0.0, %v1049
        %v1051 = vpop.f32.mrf.mxu0
        %v1052 = vadd.f32 0.0, %v1051
        %1053 = vdwg.mxu0
        %1054 = vmatpush.bf16.msra.mxu0 %v1023
        %1055 = vmatpush.bf16.msra.mxu0 %v1021
        %1056 = vmatpush.bf16.msra.mxu0 %v1019
        %1057 = vmatpush.bf16.msra.mxu0 %v1017
        %1058 = vmatpush.bf16.msra.mxu0 %v1015
        %1059 = vmatpush.bf16.msra.mxu0 %v1013
        %1060 = vmatpush.bf16.msra.mxu0 %v1011
        %1061 = vmatpush.bf16.msra.mxu0 %v1009
        %1062 = vmatmul.bf16.gmra.mxu0 %v959
        %v1063 = vpop.f32.mrf.mxu0
        %v1064 = vadd.f32 0.0, %v1063
        %v1065 = vpop.f32.mrf.mxu0
        %v1066 = vadd.f32 0.0, %v1065
        %1067 = vdwg.mxu0
        %v1068 = vadd.f32 %v941, %v1050
        %v1069 = vadd.f32 %v955, %v1064
        %v1070 = vadd.f32 %v943, %v1052
        %v1071 = vadd.f32 %v957, %v1066
        %v1072 = vld [vmem:[%s6] sm:$0x3]
        %v1074 = vperm.slane %v1072, 0
        %v1075 = vperm.slane %v1072, 1
        %v1078 = vadd.f32 %v1068, %v1074
        %v1079 = vadd.f32 %v1069, %v1075
        %v1080 = vadd.f32 %v1070, %v1074
        %v1081 = vadd.f32 %v1071, %v1075
        %v1082 = vmax.f32 %v1078, 0.0
        %v1083 = vmax.f32 %v1079, 0.0
        %v1084 = vmax.f32 %v1080, 0.0
        %v1085 = vmax.f32 %v1081, 0.0
        %v1086 = vpack.c.bf16 %v1084, %v1082
        %v1087 = vpack.c.bf16 %v1085, %v1083
        %v1088 = vld [vmem:[%s7] sm:$0x1]
        %v1090 = vsel %vm640, %v1088, 0
        %1092 = vmatpush.bf16.msra.mxu0 0
        %1093 = vmatpush.bf16.msra.mxu0 0
        %1094 = vmatpush.bf16.msra.mxu0 0
        %1095 = vmatpush.bf16.msra.mxu0 0
        %1096 = vmatpush.bf16.msra.mxu0 0
        %1097 = vmatpush.bf16.msra.mxu0 0
        %1098 = vmatpush.bf16.msra.mxu0 0
        %1099 = vmatpush.bf16.msra.mxu0 %v1086
        %1100 = vmatmul.bf16.gmra.mxu0 %v1090
        %v1101 = vpop.f32.mrf.mxu0
        %v1102 = vadd.f32 0.0, %v1101
        %v1103 = vpop.f32.mrf.mxu0
        %1104 = vdwg.mxu0
        %1105 = vmatpush.bf16.msra.mxu0 0
        %1106 = vmatpush.bf16.msra.mxu0 0
        %1107 = vmatpush.bf16.msra.mxu0 0
        %1108 = vmatpush.bf16.msra.mxu0 0
        %1109 = vmatpush.bf16.msra.mxu0 0
        %1110 = vmatpush.bf16.msra.mxu0 0
        %1111 = vmatpush.bf16.msra.mxu0 0
        %1112 = vmatpush.bf16.msra.mxu0 %v1087
        %1113 = vmatmul.bf16.gmra.mxu0 %v1090
        %v1114 = vpop.f32.mrf.mxu0
        %v1115 = vadd.f32 0.0, %v1114
        %v1116 = vpop.f32.mrf.mxu0
        %1117 = vdwg.mxu0
        %s1118 = scalar_lea.vmem %s7, 1
        %v1119 = vld [vmem:[%s1118] sm:$0x1]
        %v1121 = vsel %vm640, %v1119, 0
        %1123 = vmatpush.bf16.msra.mxu0 0
        %1124 = vmatpush.bf16.msra.mxu0 0
        %1125 = vmatpush.bf16.msra.mxu0 0
        %1126 = vmatpush.bf16.msra.mxu0 0
        %1127 = vmatpush.bf16.msra.mxu0 0
        %1128 = vmatpush.bf16.msra.mxu0 0
        %1129 = vmatpush.bf16.msra.mxu0 0
        %1130 = vmatpush.bf16.msra.mxu0 %v1086
        %1131 = vmatmul.bf16.gmra.mxu0 %v1121
        %v1132 = vpop.f32.mrf.mxu0
        %v1133 = vadd.f32 0.0, %v1132
        %v1134 = vpop.f32.mrf.mxu0
        %1135 = vdwg.mxu0
        %1136 = vmatpush.bf16.msra.mxu0 0
        %1137 = vmatpush.bf16.msra.mxu0 0
        %1138 = vmatpush.bf16.msra.mxu0 0
        %1139 = vmatpush.bf16.msra.mxu0 0
        %1140 = vmatpush.bf16.msra.mxu0 0
        %1141 = vmatpush.bf16.msra.mxu0 0
        %1142 = vmatpush.bf16.msra.mxu0 0
        %1143 = vmatpush.bf16.msra.mxu0 %v1087
        %1144 = vmatmul.bf16.gmra.mxu0 %v1121
        %v1145 = vpop.f32.mrf.mxu0
        %v1146 = vadd.f32 0.0, %v1145
        %v1147 = vpop.f32.mrf.mxu0
        %1148 = vdwg.mxu0
        %s1149 = scalar_lea.vmem %s7, 2
        %v1150 = vld [vmem:[%s1149] sm:$0x1]
        %v1152 = vsel %vm640, %v1150, 0
        %1154 = vmatpush.bf16.msra.mxu0 0
        %1155 = vmatpush.bf16.msra.mxu0 0
        %1156 = vmatpush.bf16.msra.mxu0 0
        %1157 = vmatpush.bf16.msra.mxu0 0
        %1158 = vmatpush.bf16.msra.mxu0 0
        %1159 = vmatpush.bf16.msra.mxu0 0
        %1160 = vmatpush.bf16.msra.mxu0 0
        %1161 = vmatpush.bf16.msra.mxu0 %v1086
        %1162 = vmatmul.bf16.gmra.mxu0 %v1152
        %v1163 = vpop.f32.mrf.mxu0
        %v1164 = vadd.f32 0.0, %v1163
        %v1165 = vpop.f32.mrf.mxu0
        %1166 = vdwg.mxu0
        %1167 = vmatpush.bf16.msra.mxu0 0
        %1168 = vmatpush.bf16.msra.mxu0 0
        %1169 = vmatpush.bf16.msra.mxu0 0
        %1170 = vmatpush.bf16.msra.mxu0 0
        %1171 = vmatpush.bf16.msra.mxu0 0
        %1172 = vmatpush.bf16.msra.mxu0 0
        %1173 = vmatpush.bf16.msra.mxu0 0
        %1174 = vmatpush.bf16.msra.mxu0 %v1087
        %1175 = vmatmul.bf16.gmra.mxu0 %v1152
        %v1176 = vpop.f32.mrf.mxu0
        %v1177 = vadd.f32 0.0, %v1176
        %v1178 = vpop.f32.mrf.mxu0
        %1179 = vdwg.mxu0
        %s1180 = scalar_lea.vmem %s7, 3
        %v1181 = vld [vmem:[%s1180] sm:$0x1]
        %v1183 = vsel %vm640, %v1181, 0
        %1185 = vmatpush.bf16.msra.mxu0 0
        %1186 = vmatpush.bf16.msra.mxu0 0
        %1187 = vmatpush.bf16.msra.mxu0 0
        %1188 = vmatpush.bf16.msra.mxu0 0
        %1189 = vmatpush.bf16.msra.mxu0 0
        %1190 = vmatpush.bf16.msra.mxu0 0
        %1191 = vmatpush.bf16.msra.mxu0 0
        %1192 = vmatpush.bf16.msra.mxu0 %v1086
        %1193 = vmatmul.bf16.gmra.mxu0 %v1183
        %v1194 = vpop.f32.mrf.mxu0
        %v1195 = vadd.f32 0.0, %v1194
        %v1196 = vpop.f32.mrf.mxu0
        %1197 = vdwg.mxu0
        %1198 = vmatpush.bf16.msra.mxu0 0
        %1199 = vmatpush.bf16.msra.mxu0 0
        %1200 = vmatpush.bf16.msra.mxu0 0
        %1201 = vmatpush.bf16.msra.mxu0 0
        %1202 = vmatpush.bf16.msra.mxu0 0
        %1203 = vmatpush.bf16.msra.mxu0 0
        %1204 = vmatpush.bf16.msra.mxu0 0
        %1205 = vmatpush.bf16.msra.mxu0 %v1087
        %1206 = vmatmul.bf16.gmra.mxu0 %v1183
        %v1207 = vpop.f32.mrf.mxu0
        %v1208 = vadd.f32 0.0, %v1207
        %v1209 = vpop.f32.mrf.mxu0
        %1210 = vdwg.mxu0
        %s1211 = scalar_lea.vmem %s7, 4
        %v1212 = vld [vmem:[%s1211] sm:$0x1]
        %v1214 = vsel %vm640, %v1212, 0
        %1216 = vmatpush.bf16.msra.mxu0 0
        %1217 = vmatpush.bf16.msra.mxu0 0
        %1218 = vmatpush.bf16.msra.mxu0 0
        %1219 = vmatpush.bf16.msra.mxu0 0
        %1220 = vmatpush.bf16.msra.mxu0 0
        %1221 = vmatpush.bf16.msra.mxu0 0
        %1222 = vmatpush.bf16.msra.mxu0 0
        %1223 = vmatpush.bf16.msra.mxu0 %v1086
        %1224 = vmatmul.bf16.gmra.mxu0 %v1214
        %v1225 = vpop.f32.mrf.mxu0
        %v1226 = vadd.f32 0.0, %v1225
        %v1227 = vpop.f32.mrf.mxu0
        %1228 = vdwg.mxu0
        %1229 = vmatpush.bf16.msra.mxu0 0
        %1230 = vmatpush.bf16.msra.mxu0 0
        %1231 = vmatpush.bf16.msra.mxu0 0
        %1232 = vmatpush.bf16.msra.mxu0 0
        %1233 = vmatpush.bf16.msra.mxu0 0
        %1234 = vmatpush.bf16.msra.mxu0 0
        %1235 = vmatpush.bf16.msra.mxu0 0
        %1236 = vmatpush.bf16.msra.mxu0 %v1087
        %1237 = vmatmul.bf16.gmra.mxu0 %v1214
        %v1238 = vpop.f32.mrf.mxu0
        %v1239 = vadd.f32 0.0, %v1238
        %v1240 = vpop.f32.mrf.mxu0
        %1241 = vdwg.mxu0
        %s1242 = scalar_lea.vmem %s7, 5
        %v1243 = vld [vmem:[%s1242] sm:$0x1]
        %v1245 = vsel %vm640, %v1243, 0
        %1247 = vmatpush.bf16.msra.mxu0 0
        %1248 = vmatpush.bf16.msra.mxu0 0
        %1249 = vmatpush.bf16.msra.mxu0 0
        %1250 = vmatpush.bf16.msra.mxu0 0
        %1251 = vmatpush.bf16.msra.mxu0 0
        %1252 = vmatpush.bf16.msra.mxu0 0
        %1253 = vmatpush.bf16.msra.mxu0 0
        %1254 = vmatpush.bf16.msra.mxu0 %v1086
        %1255 = vmatmul.bf16.gmra.mxu0 %v1245
        %v1256 = vpop.f32.mrf.mxu0
        %v1257 = vadd.f32 0.0, %v1256
        %v1258 = vpop.f32.mrf.mxu0
        %1259 = vdwg.mxu0
        %1260 = vmatpush.bf16.msra.mxu0 0
        %1261 = vmatpush.bf16.msra.mxu0 0
        %1262 = vmatpush.bf16.msra.mxu0 0
        %1263 = vmatpush.bf16.msra.mxu0 0
        %1264 = vmatpush.bf16.msra.mxu0 0
        %1265 = vmatpush.bf16.msra.mxu0 0
        %1266 = vmatpush.bf16.msra.mxu0 0
        %1267 = vmatpush.bf16.msra.mxu0 %v1087
        %1268 = vmatmul.bf16.gmra.mxu0 %v1245
        %v1269 = vpop.f32.mrf.mxu0
        %v1270 = vadd.f32 0.0, %v1269
        %v1271 = vpop.f32.mrf.mxu0
        %1272 = vdwg.mxu0
        %s1273 = scalar_lea.vmem %s7, 6
        %v1274 = vld [vmem:[%s1273] sm:$0x1]
        %v1276 = vsel %vm640, %v1274, 0
        %1278 = vmatpush.bf16.msra.mxu0 0
        %1279 = vmatpush.bf16.msra.mxu0 0
        %1280 = vmatpush.bf16.msra.mxu0 0
        %1281 = vmatpush.bf16.msra.mxu0 0
        %1282 = vmatpush.bf16.msra.mxu0 0
        %1283 = vmatpush.bf16.msra.mxu0 0
        %1284 = vmatpush.bf16.msra.mxu0 0
        %1285 = vmatpush.bf16.msra.mxu0 %v1086
        %1286 = vmatmul.bf16.gmra.mxu0 %v1276
        %v1287 = vpop.f32.mrf.mxu0
        %v1288 = vadd.f32 0.0, %v1287
        %v1289 = vpop.f32.mrf.mxu0
        %1290 = vdwg.mxu0
        %1291 = vmatpush.bf16.msra.mxu0 0
        %1292 = vmatpush.bf16.msra.mxu0 0
        %1293 = vmatpush.bf16.msra.mxu0 0
        %1294 = vmatpush.bf16.msra.mxu0 0
        %1295 = vmatpush.bf16.msra.mxu0 0
        %1296 = vmatpush.bf16.msra.mxu0 0
        %1297 = vmatpush.bf16.msra.mxu0 0
        %1298 = vmatpush.bf16.msra.mxu0 %v1087
        %1299 = vmatmul.bf16.gmra.mxu0 %v1276
        %v1300 = vpop.f32.mrf.mxu0
        %v1301 = vadd.f32 0.0, %v1300
        %v1302 = vpop.f32.mrf.mxu0
        %1303 = vdwg.mxu0
        %s1304 = scalar_lea.vmem %s7, 7
        %v1305 = vld [vmem:[%s1304] sm:$0x1]
        %v1307 = vsel %vm640, %v1305, 0
        %1309 = vmatpush.bf16.msra.mxu0 0
        %1310 = vmatpush.bf16.msra.mxu0 0
        %1311 = vmatpush.bf16.msra.mxu0 0
        %1312 = vmatpush.bf16.msra.mxu0 0
        %1313 = vmatpush.bf16.msra.mxu0 0
        %1314 = vmatpush.bf16.msra.mxu0 0
        %1315 = vmatpush.bf16.msra.mxu0 0
        %1316 = vmatpush.bf16.msra.mxu0 %v1086
        %1317 = vmatmul.bf16.gmra.mxu0 %v1307
        %v1318 = vpop.f32.mrf.mxu0
        %v1319 = vadd.f32 0.0, %v1318
        %v1320 = vpop.f32.mrf.mxu0
        %1321 = vdwg.mxu0
        %1322 = vmatpush.bf16.msra.mxu0 0
        %1323 = vmatpush.bf16.msra.mxu0 0
        %1324 = vmatpush.bf16.msra.mxu0 0
        %1325 = vmatpush.bf16.msra.mxu0 0
        %1326 = vmatpush.bf16.msra.mxu0 0
        %1327 = vmatpush.bf16.msra.mxu0 0
        %1328 = vmatpush.bf16.msra.mxu0 0
        %1329 = vmatpush.bf16.msra.mxu0 %v1087
        %1330 = vmatmul.bf16.gmra.mxu0 %v1307
        %v1331 = vpop.f32.mrf.mxu0
        %v1332 = vadd.f32 0.0, %v1331
        %v1333 = vpop.f32.mrf.mxu0
        %1334 = vdwg.mxu0
        %v1335 = vpack.c.bf16 %v1102, %v1102
        %v1336 = vpack.c.bf16 %v1115, %v1115
        %v1337 = vpack.c.bf16 %v1133, %v1133
        %v1338 = vpack.c.bf16 %v1146, %v1146
        %v1339 = vpack.c.bf16 %v1164, %v1164
        %v1340 = vpack.c.bf16 %v1177, %v1177
        %v1341 = vpack.c.bf16 %v1195, %v1195
        %v1342 = vpack.c.bf16 %v1208, %v1208
        %v1343 = vpack.c.bf16 %v1226, %v1226
        %v1344 = vpack.c.bf16 %v1239, %v1239
        %v1345 = vpack.c.bf16 %v1257, %v1257
        %v1346 = vpack.c.bf16 %v1270, %v1270
        %v1347 = vpack.c.bf16 %v1288, %v1288
        %v1348 = vpack.c.bf16 %v1301, %v1301
        %v1349 = vpack.c.bf16 %v1319, %v1319
        %v1350 = vpack.c.bf16 %v1332, %v1332
        %v1351 = vld [vmem:[%s8] sm:$0xf]
        %v1352 = vld [vmem:[%s8 + $0x4] sm:$0xf]
        %v1353 = vld [vmem:[%s8 + $0x8] sm:$0xf]
        %v1354 = vld [vmem:[%s8 + $0xc] sm:$0xf]
        %v1355 = vld [vmem:[%s8 + $0x10] sm:$0xf]
        %v1356 = vld [vmem:[%s8 + $0x14] sm:$0xf]
        %v1357 = vld [vmem:[%s8 + $0x18] sm:$0xf]
        %v1358 = vld [vmem:[%s8 + $0x1c] sm:$0xf]
        %v1359 = vld [vmem:[%s8 + $0x20] sm:$0xf]
        %v1360 = vld [vmem:[%s8 + $0x24] sm:$0xf]
        %v1361 = vld [vmem:[%s8 + $0x28] sm:$0xf]
        %v1362 = vld [vmem:[%s8 + $0x2c] sm:$0xf]
        %v1363 = vld [vmem:[%s8 + $0x30] sm:$0xf]
        %v1364 = vld [vmem:[%s8 + $0x34] sm:$0xf]
        %v1365 = vld [vmem:[%s8 + $0x38] sm:$0xf]
        %v1366 = vld [vmem:[%s8 + $0x3c] sm:$0xf]
        %v1367 = vld [vmem:[%s8 + $0x40] sm:$0xf]
        %v1368 = vld [vmem:[%s8 + $0x44] sm:$0xf]
        %v1369 = vld [vmem:[%s8 + $0x48] sm:$0xf]
        %v1370 = vld [vmem:[%s8 + $0x4c] sm:$0xf]
        %v1371 = vld [vmem:[%s8 + $0x50] sm:$0xf]
        %v1372 = vld [vmem:[%s8 + $0x54] sm:$0xf]
        %v1373 = vld [vmem:[%s8 + $0x58] sm:$0xf]
        %v1374 = vld [vmem:[%s8 + $0x5c] sm:$0xf]
        %v1375 = vld [vmem:[%s8 + $0x60] sm:$0xf]
        %v1376 = vld [vmem:[%s8 + $0x64] sm:$0xf]
        %v1377 = vld [vmem:[%s8 + $0x68] sm:$0xf]
        %v1378 = vld [vmem:[%s8 + $0x6c] sm:$0xf]
        %v1379 = vld [vmem:[%s8 + $0x70] sm:$0xf]
        %v1380 = vld [vmem:[%s8 + $0x74] sm:$0xf]
        %v1381 = vld [vmem:[%s8 + $0x78] sm:$0xf]
        %v1382 = vld [vmem:[%s8 + $0x7c] sm:$0xf]
        %v1383 = vld [vmem:[%s8 + $0x80] sm:$0xf]
        %v1384 = vld [vmem:[%s8 + $0x84] sm:$0xf]
        %v1385 = vld [vmem:[%s8 + $0x88] sm:$0xf]
        %v1386 = vld [vmem:[%s8 + $0x8c] sm:$0xf]
        %v1387 = vld [vmem:[%s8 + $0x90] sm:$0xf]
        %v1388 = vld [vmem:[%s8 + $0x94] sm:$0xf]
        %v1389 = vld [vmem:[%s8 + $0x98] sm:$0xf]
        %v1390 = vld [vmem:[%s8 + $0x9c] sm:$0xf]
        %v1391 = vld [vmem:[%s8 + $0xa0] sm:$0xf]
        %v1392 = vld [vmem:[%s8 + $0xa4] sm:$0xf]
        %v1393 = vld [vmem:[%s8 + $0xa8] sm:$0xf]
        %v1394 = vld [vmem:[%s8 + $0xac] sm:$0xf]
        %v1395 = vld [vmem:[%s8 + $0xb0] sm:$0xf]
        %v1396 = vld [vmem:[%s8 + $0xb4] sm:$0xf]
        %v1397 = vld [vmem:[%s8 + $0xb8] sm:$0xf]
        %v1398 = vld [vmem:[%s8 + $0xbc] sm:$0xf]
        %v1399 = vld [vmem:[%s8 + $0xc0] sm:$0xf]
        %v1400 = vld [vmem:[%s8 + $0xc4] sm:$0xf]
        %v1401 = vld [vmem:[%s8 + $0xc8] sm:$0xf]
        %v1402 = vld [vmem:[%s8 + $0xcc] sm:$0xf]
        %v1403 = vld [vmem:[%s8 + $0xd0] sm:$0xf]
        %v1404 = vld [vmem:[%s8 + $0xd4] sm:$0xf]
        %v1405 = vld [vmem:[%s8 + $0xd8] sm:$0xf]
        %v1406 = vld [vmem:[%s8 + $0xdc] sm:$0xf]
        %v1407 = vld [vmem:[%s8 + $0xe0] sm:$0xf]
        %v1408 = vld [vmem:[%s8 + $0xe4] sm:$0xf]
        %v1409 = vld [vmem:[%s8 + $0xe8] sm:$0xf]
        %v1410 = vld [vmem:[%s8 + $0xec] sm:$0xf]
        %v1411 = vld [vmem:[%s8 + $0xf0] sm:$0xf]
        %v1412 = vld [vmem:[%s8 + $0xf4] sm:$0xf]
        %v1413 = vld [vmem:[%s8 + $0xf8] sm:$0xf]
        %v1414 = vld [vmem:[%s8 + $0xfc] sm:$0xf]
        %v1415 = vld [vmem:[%s8 + $0x100] sm:$0xf]
        %v1416 = vld [vmem:[%s8 + $0x104] sm:$0xf]
        %v1417 = vld [vmem:[%s8 + $0x108] sm:$0xf]
        %v1418 = vld [vmem:[%s8 + $0x10c] sm:$0xf]
        %v1419 = vld [vmem:[%s8 + $0x110] sm:$0xf]
        %v1420 = vld [vmem:[%s8 + $0x114] sm:$0xf]
        %v1421 = vld [vmem:[%s8 + $0x118] sm:$0xf]
        %v1422 = vld [vmem:[%s8 + $0x11c] sm:$0xf]
        %v1423 = vld [vmem:[%s8 + $0x120] sm:$0xf]
        %v1424 = vld [vmem:[%s8 + $0x124] sm:$0xf]
        %v1425 = vld [vmem:[%s8 + $0x128] sm:$0xf]
        %v1426 = vld [vmem:[%s8 + $0x12c] sm:$0xf]
        %v1427 = vld [vmem:[%s8 + $0x130] sm:$0xf]
        %v1428 = vld [vmem:[%s8 + $0x134] sm:$0xf]
        %v1429 = vld [vmem:[%s8 + $0x138] sm:$0xf]
        %v1430 = vld [vmem:[%s8 + $0x13c] sm:$0xf]
        %v1431 = vld [vmem:[%s8 + $0x140] sm:$0xf]
        %v1432 = vld [vmem:[%s8 + $0x144] sm:$0xf]
        %v1433 = vld [vmem:[%s8 + $0x148] sm:$0xf]
        %v1434 = vld [vmem:[%s8 + $0x14c] sm:$0xf]
        %v1435 = vld [vmem:[%s8 + $0x150] sm:$0xf]
        %v1436 = vld [vmem:[%s8 + $0x154] sm:$0xf]
        %v1437 = vld [vmem:[%s8 + $0x158] sm:$0xf]
        %v1438 = vld [vmem:[%s8 + $0x15c] sm:$0xf]
        %v1439 = vld [vmem:[%s8 + $0x160] sm:$0xf]
        %v1440 = vld [vmem:[%s8 + $0x164] sm:$0xf]
        %v1441 = vld [vmem:[%s8 + $0x168] sm:$0xf]
        %v1442 = vld [vmem:[%s8 + $0x16c] sm:$0xf]
        %v1443 = vld [vmem:[%s8 + $0x170] sm:$0xf]
        %v1444 = vld [vmem:[%s8 + $0x174] sm:$0xf]
        %v1445 = vld [vmem:[%s8 + $0x178] sm:$0xf]
        %v1446 = vld [vmem:[%s8 + $0x17c] sm:$0xf]
        %v1447 = vld [vmem:[%s8 + $0x180] sm:$0xf]
        %v1448 = vld [vmem:[%s8 + $0x184] sm:$0xf]
        %v1449 = vld [vmem:[%s8 + $0x188] sm:$0xf]
        %v1450 = vld [vmem:[%s8 + $0x18c] sm:$0xf]
        %v1451 = vld [vmem:[%s8 + $0x190] sm:$0xf]
        %v1452 = vld [vmem:[%s8 + $0x194] sm:$0xf]
        %v1453 = vld [vmem:[%s8 + $0x198] sm:$0xf]
        %v1454 = vld [vmem:[%s8 + $0x19c] sm:$0xf]
        %v1455 = vld [vmem:[%s8 + $0x1a0] sm:$0xf]
        %v1456 = vld [vmem:[%s8 + $0x1a4] sm:$0xf]
        %v1457 = vld [vmem:[%s8 + $0x1a8] sm:$0xf]
        %v1458 = vld [vmem:[%s8 + $0x1ac] sm:$0xf]
        %v1459 = vld [vmem:[%s8 + $0x1b0] sm:$0xf]
        %v1460 = vld [vmem:[%s8 + $0x1b4] sm:$0xf]
        %v1461 = vld [vmem:[%s8 + $0x1b8] sm:$0xf]
        %v1462 = vld [vmem:[%s8 + $0x1bc] sm:$0xf]
        %v1463 = vld [vmem:[%s8 + $0x1c0] sm:$0xf]
        %v1464 = vld [vmem:[%s8 + $0x1c4] sm:$0xf]
        %v1465 = vld [vmem:[%s8 + $0x1c8] sm:$0xf]
        %v1466 = vld [vmem:[%s8 + $0x1cc] sm:$0xf]
        %v1467 = vld [vmem:[%s8 + $0x1d0] sm:$0xf]
        %v1468 = vld [vmem:[%s8 + $0x1d4] sm:$0xf]
        %v1469 = vld [vmem:[%s8 + $0x1d8] sm:$0xf]
        %v1470 = vld [vmem:[%s8 + $0x1dc] sm:$0xf]
        %v1471 = vld [vmem:[%s8 + $0x1e0] sm:$0xf]
        %v1472 = vld [vmem:[%s8 + $0x1e4] sm:$0xf]
        %v1473 = vld [vmem:[%s8 + $0x1e8] sm:$0xf]
        %v1474 = vld [vmem:[%s8 + $0x1ec] sm:$0xf]
        %v1475 = vld [vmem:[%s8 + $0x1f0] sm:$0xf]
        %v1476 = vld [vmem:[%s8 + $0x1f4] sm:$0xf]
        %v1477 = vld [vmem:[%s8 + $0x1f8] sm:$0xf]
        %v1478 = vld [vmem:[%s8 + $0x1fc] sm:$0xf]
        %v1479 = vld [vmem:[%s8 + $0x200] sm:$0xf]
        %v1480 = vld [vmem:[%s8 + $0x204] sm:$0xf]
        %v1481 = vld [vmem:[%s8 + $0x208] sm:$0xf]
        %v1482 = vld [vmem:[%s8 + $0x20c] sm:$0xf]
        %v1483 = vld [vmem:[%s8 + $0x210] sm:$0xf]
        %v1484 = vld [vmem:[%s8 + $0x214] sm:$0xf]
        %v1485 = vld [vmem:[%s8 + $0x218] sm:$0xf]
        %v1486 = vld [vmem:[%s8 + $0x21c] sm:$0xf]
        %v1487 = vld [vmem:[%s8 + $0x220] sm:$0xf]
        %v1488 = vld [vmem:[%s8 + $0x224] sm:$0xf]
        %v1489 = vld [vmem:[%s8 + $0x228] sm:$0xf]
        %v1490 = vld [vmem:[%s8 + $0x22c] sm:$0xf]
        %v1491 = vld [vmem:[%s8 + $0x230] sm:$0xf]
        %v1492 = vld [vmem:[%s8 + $0x234] sm:$0xf]
        %v1493 = vld [vmem:[%s8 + $0x238] sm:$0xf]
        %v1494 = vld [vmem:[%s8 + $0x23c] sm:$0xf]
        %v1495 = vld [vmem:[%s8 + $0x240] sm:$0xf]
        %v1496 = vld [vmem:[%s8 + $0x244] sm:$0xf]
        %v1497 = vld [vmem:[%s8 + $0x248] sm:$0xf]
        %v1498 = vld [vmem:[%s8 + $0x24c] sm:$0xf]
        %v1499 = vld [vmem:[%s8 + $0x250] sm:$0xf]
        %v1500 = vld [vmem:[%s8 + $0x254] sm:$0xf]
        %v1501 = vld [vmem:[%s8 + $0x258] sm:$0xf]
        %v1502 = vld [vmem:[%s8 + $0x25c] sm:$0xf]
        %v1503 = vld [vmem:[%s8 + $0x260] sm:$0xf]
        %v1504 = vld [vmem:[%s8 + $0x264] sm:$0xf]
        %v1505 = vld [vmem:[%s8 + $0x268] sm:$0xf]
        %v1506 = vld [vmem:[%s8 + $0x26c] sm:$0xf]
        %v1507 = vld [vmem:[%s8 + $0x270] sm:$0xf]
        %v1508 = vld [vmem:[%s8 + $0x274] sm:$0xf]
        %v1509 = vld [vmem:[%s8 + $0x278] sm:$0xf]
        %v1510 = vld [vmem:[%s8 + $0x27c] sm:$0xf]
        %v1511 = vld [vmem:[%s8 + $0x280] sm:$0xf]
        %v1512 = vld [vmem:[%s8 + $0x284] sm:$0xf]
        %v1513 = vld [vmem:[%s8 + $0x288] sm:$0xf]
        %v1514 = vld [vmem:[%s8 + $0x28c] sm:$0xf]
        %v1515 = vld [vmem:[%s8 + $0x290] sm:$0xf]
        %v1516 = vld [vmem:[%s8 + $0x294] sm:$0xf]
        %v1517 = vld [vmem:[%s8 + $0x298] sm:$0xf]
        %v1518 = vld [vmem:[%s8 + $0x29c] sm:$0xf]
        %v1519 = vld [vmem:[%s8 + $0x2a0] sm:$0xf]
        %v1520 = vld [vmem:[%s8 + $0x2a4] sm:$0xf]
        %v1521 = vld [vmem:[%s8 + $0x2a8] sm:$0xf]
        %v1522 = vld [vmem:[%s8 + $0x2ac] sm:$0xf]
        %v1523 = vld [vmem:[%s8 + $0x2b0] sm:$0xf]
        %v1524 = vld [vmem:[%s8 + $0x2b4] sm:$0xf]
        %v1525 = vld [vmem:[%s8 + $0x2b8] sm:$0xf]
        %v1526 = vld [vmem:[%s8 + $0x2bc] sm:$0xf]
        %v1527 = vld [vmem:[%s8 + $0x2c0] sm:$0xf]
        %v1528 = vld [vmem:[%s8 + $0x2c4] sm:$0xf]
        %v1529 = vld [vmem:[%s8 + $0x2c8] sm:$0xf]
        %v1530 = vld [vmem:[%s8 + $0x2cc] sm:$0xf]
        %v1531 = vld [vmem:[%s8 + $0x2d0] sm:$0xf]
        %v1532 = vld [vmem:[%s8 + $0x2d4] sm:$0xf]
        %v1533 = vld [vmem:[%s8 + $0x2d8] sm:$0xf]
        %v1534 = vld [vmem:[%s8 + $0x2dc] sm:$0xf]
        %v1535 = vld [vmem:[%s8 + $0x2e0] sm:$0xf]
        %v1536 = vld [vmem:[%s8 + $0x2e4] sm:$0xf]
        %v1537 = vld [vmem:[%s8 + $0x2e8] sm:$0xf]
        %v1538 = vld [vmem:[%s8 + $0x2ec] sm:$0xf]
        %v1539 = vld [vmem:[%s8 + $0x2f0] sm:$0xf]
        %v1540 = vld [vmem:[%s8 + $0x2f4] sm:$0xf]
        %v1541 = vld [vmem:[%s8 + $0x2f8] sm:$0xf]
        %v1542 = vld [vmem:[%s8 + $0x2fc] sm:$0xf]
        %v1543 = vld [vmem:[%s8 + $0x300] sm:$0xf]
        %v1544 = vld [vmem:[%s8 + $0x304] sm:$0xf]
        %v1545 = vld [vmem:[%s8 + $0x308] sm:$0xf]
        %v1546 = vld [vmem:[%s8 + $0x30c] sm:$0xf]
        %v1547 = vld [vmem:[%s8 + $0x310] sm:$0xf]
        %v1548 = vld [vmem:[%s8 + $0x314] sm:$0xf]
        %v1549 = vld [vmem:[%s8 + $0x318] sm:$0xf]
        %v1550 = vld [vmem:[%s8 + $0x31c] sm:$0xf]
        %v1551 = vld [vmem:[%s8 + $0x320] sm:$0xf]
        %v1552 = vld [vmem:[%s8 + $0x324] sm:$0xf]
        %v1553 = vld [vmem:[%s8 + $0x328] sm:$0xf]
        %v1554 = vld [vmem:[%s8 + $0x32c] sm:$0xf]
        %v1555 = vld [vmem:[%s8 + $0x330] sm:$0xf]
        %v1556 = vld [vmem:[%s8 + $0x334] sm:$0xf]
        %v1557 = vld [vmem:[%s8 + $0x338] sm:$0xf]
        %v1558 = vld [vmem:[%s8 + $0x33c] sm:$0xf]
        %v1559 = vld [vmem:[%s8 + $0x340] sm:$0xf]
        %v1560 = vld [vmem:[%s8 + $0x344] sm:$0xf]
        %v1561 = vld [vmem:[%s8 + $0x348] sm:$0xf]
        %v1562 = vld [vmem:[%s8 + $0x34c] sm:$0xf]
        %v1563 = vld [vmem:[%s8 + $0x350] sm:$0xf]
        %v1564 = vld [vmem:[%s8 + $0x354] sm:$0xf]
        %v1565 = vld [vmem:[%s8 + $0x358] sm:$0xf]
        %v1566 = vld [vmem:[%s8 + $0x35c] sm:$0xf]
        %v1567 = vld [vmem:[%s8 + $0x360] sm:$0xf]
        %v1568 = vld [vmem:[%s8 + $0x364] sm:$0xf]
        %v1569 = vld [vmem:[%s8 + $0x368] sm:$0xf]
        %v1570 = vld [vmem:[%s8 + $0x36c] sm:$0xf]
        %v1571 = vld [vmem:[%s8 + $0x370] sm:$0xf]
        %v1572 = vld [vmem:[%s8 + $0x374] sm:$0xf]
        %v1573 = vld [vmem:[%s8 + $0x378] sm:$0xf]
        %v1574 = vld [vmem:[%s8 + $0x37c] sm:$0xf]
        %v1575 = vld [vmem:[%s8 + $0x380] sm:$0xf]
        %v1576 = vld [vmem:[%s8 + $0x384] sm:$0xf]
        %v1577 = vld [vmem:[%s8 + $0x388] sm:$0xf]
        %v1578 = vld [vmem:[%s8 + $0x38c] sm:$0xf]
        %v1579 = vld [vmem:[%s8 + $0x390] sm:$0xf]
        %v1580 = vld [vmem:[%s8 + $0x394] sm:$0xf]
        %v1581 = vld [vmem:[%s8 + $0x398] sm:$0xf]
        %v1582 = vld [vmem:[%s8 + $0x39c] sm:$0xf]
        %v1583 = vld [vmem:[%s8 + $0x3a0] sm:$0xf]
        %v1584 = vld [vmem:[%s8 + $0x3a4] sm:$0xf]
        %v1585 = vld [vmem:[%s8 + $0x3a8] sm:$0xf]
        %v1586 = vld [vmem:[%s8 + $0x3ac] sm:$0xf]
        %v1587 = vld [vmem:[%s8 + $0x3b0] sm:$0xf]
        %v1588 = vld [vmem:[%s8 + $0x3b4] sm:$0xf]
        %v1589 = vld [vmem:[%s8 + $0x3b8] sm:$0xf]
        %v1590 = vld [vmem:[%s8 + $0x3bc] sm:$0xf]
        %v1591 = vld [vmem:[%s8 + $0x3c0] sm:$0xf]
        %v1592 = vld [vmem:[%s8 + $0x3c4] sm:$0xf]
        %v1593 = vld [vmem:[%s8 + $0x3c8] sm:$0xf]
        %v1594 = vld [vmem:[%s8 + $0x3cc] sm:$0xf]
        %v1595 = vld [vmem:[%s8 + $0x3d0] sm:$0xf]
        %v1596 = vld [vmem:[%s8 + $0x3d4] sm:$0xf]
        %v1597 = vld [vmem:[%s8 + $0x3d8] sm:$0xf]
        %v1598 = vld [vmem:[%s8 + $0x3dc] sm:$0xf]
        %v1599 = vld [vmem:[%s8 + $0x3e0] sm:$0xf]
        %v1600 = vld [vmem:[%s8 + $0x3e4] sm:$0xf]
        %v1601 = vld [vmem:[%s8 + $0x3e8] sm:$0xf]
        %v1602 = vld [vmem:[%s8 + $0x3ec] sm:$0xf]
        %v1603 = vld [vmem:[%s8 + $0x3f0] sm:$0xf]
        %v1604 = vld [vmem:[%s8 + $0x3f4] sm:$0xf]
        %v1605 = vld [vmem:[%s8 + $0x3f8] sm:$0xf]
        %v1606 = vld [vmem:[%s8 + $0x3fc] sm:$0xf]
        %v1607 = vld [vmem:[%s9] sm:$0x1]
        %v1864 = vunpack.c.l.b16 %v1351
        %v1865 = vunpack.c.l.b16 %v1352
        %v1866 = vunpack.c.l.b16 %v1353
        %v1867 = vunpack.c.l.b16 %v1354
        %v1868 = vunpack.c.l.b16 %v1355
        %v1869 = vunpack.c.l.b16 %v1356
        %v1870 = vunpack.c.l.b16 %v1357
        %v1871 = vunpack.c.l.b16 %v1358
        %v1872 = vunpack.c.l.b16 %v1359
        %v1873 = vunpack.c.l.b16 %v1360
        %v1874 = vunpack.c.l.b16 %v1361
        %v1875 = vunpack.c.l.b16 %v1362
        %v1876 = vunpack.c.l.b16 %v1363
        %v1877 = vunpack.c.l.b16 %v1364
        %v1878 = vunpack.c.l.b16 %v1365
        %v1879 = vunpack.c.l.b16 %v1366
        %v1880 = vunpack.c.l.b16 %v1367
        %v1881 = vunpack.c.l.b16 %v1368
        %v1882 = vunpack.c.l.b16 %v1369
        %v1883 = vunpack.c.l.b16 %v1370
        %v1884 = vunpack.c.l.b16 %v1371
        %v1885 = vunpack.c.l.b16 %v1372
        %v1886 = vunpack.c.l.b16 %v1373
        %v1887 = vunpack.c.l.b16 %v1374
        %v1888 = vunpack.c.l.b16 %v1375
        %v1889 = vunpack.c.l.b16 %v1376
        %v1890 = vunpack.c.l.b16 %v1377
        %v1891 = vunpack.c.l.b16 %v1378
        %v1892 = vunpack.c.l.b16 %v1379
        %v1893 = vunpack.c.l.b16 %v1380
        %v1894 = vunpack.c.l.b16 %v1381
        %v1895 = vunpack.c.l.b16 %v1382
        %v1896 = vunpack.c.l.b16 %v1383
        %v1897 = vunpack.c.l.b16 %v1384
        %v1898 = vunpack.c.l.b16 %v1385
        %v1899 = vunpack.c.l.b16 %v1386
        %v1900 = vunpack.c.l.b16 %v1387
        %v1901 = vunpack.c.l.b16 %v1388
        %v1902 = vunpack.c.l.b16 %v1389
        %v1903 = vunpack.c.l.b16 %v1390
        %v1904 = vunpack.c.l.b16 %v1391
        %v1905 = vunpack.c.l.b16 %v1392
        %v1906 = vunpack.c.l.b16 %v1393
        %v1907 = vunpack.c.l.b16 %v1394
        %v1908 = vunpack.c.l.b16 %v1395
        %v1909 = vunpack.c.l.b16 %v1396
        %v1910 = vunpack.c.l.b16 %v1397
        %v1911 = vunpack.c.l.b16 %v1398
        %v1912 = vunpack.c.l.b16 %v1399
        %v1913 = vunpack.c.l.b16 %v1400
        %v1914 = vunpack.c.l.b16 %v1401
        %v1915 = vunpack.c.l.b16 %v1402
        %v1916 = vunpack.c.l.b16 %v1403
        %v1917 = vunpack.c.l.b16 %v1404
        %v1918 = vunpack.c.l.b16 %v1405
        %v1919 = vunpack.c.l.b16 %v1406
        %v1920 = vunpack.c.l.b16 %v1407
        %v1921 = vunpack.c.l.b16 %v1408
        %v1922 = vunpack.c.l.b16 %v1409
        %v1923 = vunpack.c.l.b16 %v1410
        %v1924 = vunpack.c.l.b16 %v1411
        %v1925 = vunpack.c.l.b16 %v1412
        %v1926 = vunpack.c.l.b16 %v1413
        %v1927 = vunpack.c.l.b16 %v1414
        %v1928 = vunpack.c.l.b16 %v1415
        %v1929 = vunpack.c.l.b16 %v1416
        %v1930 = vunpack.c.l.b16 %v1417
        %v1931 = vunpack.c.l.b16 %v1418
        %v1932 = vunpack.c.l.b16 %v1419
        %v1933 = vunpack.c.l.b16 %v1420
        %v1934 = vunpack.c.l.b16 %v1421
        %v1935 = vunpack.c.l.b16 %v1422
        %v1936 = vunpack.c.l.b16 %v1423
        %v1937 = vunpack.c.l.b16 %v1424
        %v1938 = vunpack.c.l.b16 %v1425
        %v1939 = vunpack.c.l.b16 %v1426
        %v1940 = vunpack.c.l.b16 %v1427
        %v1941 = vunpack.c.l.b16 %v1428
        %v1942 = vunpack.c.l.b16 %v1429
        %v1943 = vunpack.c.l.b16 %v1430
        %v1944 = vunpack.c.l.b16 %v1431
        %v1945 = vunpack.c.l.b16 %v1432
        %v1946 = vunpack.c.l.b16 %v1433
        %v1947 = vunpack.c.l.b16 %v1434
        %v1948 = vunpack.c.l.b16 %v1435
        %v1949 = vunpack.c.l.b16 %v1436
        %v1950 = vunpack.c.l.b16 %v1437
        %v1951 = vunpack.c.l.b16 %v1438
        %v1952 = vunpack.c.l.b16 %v1439
        %v1953 = vunpack.c.l.b16 %v1440
        %v1954 = vunpack.c.l.b16 %v1441
        %v1955 = vunpack.c.l.b16 %v1442
        %v1956 = vunpack.c.l.b16 %v1443
        %v1957 = vunpack.c.l.b16 %v1444
        %v1958 = vunpack.c.l.b16 %v1445
        %v1959 = vunpack.c.l.b16 %v1446
        %v1960 = vunpack.c.l.b16 %v1447
        %v1961 = vunpack.c.l.b16 %v1448
        %v1962 = vunpack.c.l.b16 %v1449
        %v1963 = vunpack.c.l.b16 %v1450
        %v1964 = vunpack.c.l.b16 %v1451
        %v1965 = vunpack.c.l.b16 %v1452
        %v1966 = vunpack.c.l.b16 %v1453
        %v1967 = vunpack.c.l.b16 %v1454
        %v1968 = vunpack.c.l.b16 %v1455
        %v1969 = vunpack.c.l.b16 %v1456
        %v1970 = vunpack.c.l.b16 %v1457
        %v1971 = vunpack.c.l.b16 %v1458
        %v1972 = vunpack.c.l.b16 %v1459
        %v1973 = vunpack.c.l.b16 %v1460
        %v1974 = vunpack.c.l.b16 %v1461
        %v1975 = vunpack.c.l.b16 %v1462
        %v1976 = vunpack.c.l.b16 %v1463
        %v1977 = vunpack.c.l.b16 %v1464
        %v1978 = vunpack.c.l.b16 %v1465
        %v1979 = vunpack.c.l.b16 %v1466
        %v1980 = vunpack.c.l.b16 %v1467
        %v1981 = vunpack.c.l.b16 %v1468
        %v1982 = vunpack.c.l.b16 %v1469
        %v1983 = vunpack.c.l.b16 %v1470
        %v1984 = vunpack.c.l.b16 %v1471
        %v1985 = vunpack.c.l.b16 %v1472
        %v1986 = vunpack.c.l.b16 %v1473
        %v1987 = vunpack.c.l.b16 %v1474
        %v1988 = vunpack.c.l.b16 %v1475
        %v1989 = vunpack.c.l.b16 %v1476
        %v1990 = vunpack.c.l.b16 %v1477
        %v1991 = vunpack.c.l.b16 %v1478
        %v1992 = vunpack.c.l.b16 %v1479
        %v1993 = vunpack.c.l.b16 %v1480
        %v1994 = vunpack.c.l.b16 %v1481
        %v1995 = vunpack.c.l.b16 %v1482
        %v1996 = vunpack.c.l.b16 %v1483
        %v1997 = vunpack.c.l.b16 %v1484
        %v1998 = vunpack.c.l.b16 %v1485
        %v1999 = vunpack.c.l.b16 %v1486
        %v2000 = vunpack.c.l.b16 %v1487
        %v2001 = vunpack.c.l.b16 %v1488
        %v2002 = vunpack.c.l.b16 %v1489
        %v2003 = vunpack.c.l.b16 %v1490
        %v2004 = vunpack.c.l.b16 %v1491
        %v2005 = vunpack.c.l.b16 %v1492
        %v2006 = vunpack.c.l.b16 %v1493
        %v2007 = vunpack.c.l.b16 %v1494
        %v2008 = vunpack.c.l.b16 %v1495
        %v2009 = vunpack.c.l.b16 %v1496
        %v2010 = vunpack.c.l.b16 %v1497
        %v2011 = vunpack.c.l.b16 %v1498
        %v2012 = vunpack.c.l.b16 %v1499
        %v2013 = vunpack.c.l.b16 %v1500
        %v2014 = vunpack.c.l.b16 %v1501
        %v2015 = vunpack.c.l.b16 %v1502
        %v2016 = vunpack.c.l.b16 %v1503
        %v2017 = vunpack.c.l.b16 %v1504
        %v2018 = vunpack.c.l.b16 %v1505
        %v2019 = vunpack.c.l.b16 %v1506
        %v2020 = vunpack.c.l.b16 %v1507
        %v2021 = vunpack.c.l.b16 %v1508
        %v2022 = vunpack.c.l.b16 %v1509
        %v2023 = vunpack.c.l.b16 %v1510
        %v2024 = vunpack.c.l.b16 %v1511
        %v2025 = vunpack.c.l.b16 %v1512
        %v2026 = vunpack.c.l.b16 %v1513
        %v2027 = vunpack.c.l.b16 %v1514
        %v2028 = vunpack.c.l.b16 %v1515
        %v2029 = vunpack.c.l.b16 %v1516
        %v2030 = vunpack.c.l.b16 %v1517
        %v2031 = vunpack.c.l.b16 %v1518
        %v2032 = vunpack.c.l.b16 %v1519
        %v2033 = vunpack.c.l.b16 %v1520
        %v2034 = vunpack.c.l.b16 %v1521
        %v2035 = vunpack.c.l.b16 %v1522
        %v2036 = vunpack.c.l.b16 %v1523
        %v2037 = vunpack.c.l.b16 %v1524
        %v2038 = vunpack.c.l.b16 %v1525
        %v2039 = vunpack.c.l.b16 %v1526
        %v2040 = vunpack.c.l.b16 %v1527
        %v2041 = vunpack.c.l.b16 %v1528
        %v2042 = vunpack.c.l.b16 %v1529
        %v2043 = vunpack.c.l.b16 %v1530
        %v2044 = vunpack.c.l.b16 %v1531
        %v2045 = vunpack.c.l.b16 %v1532
        %v2046 = vunpack.c.l.b16 %v1533
        %v2047 = vunpack.c.l.b16 %v1534
        %v2048 = vunpack.c.l.b16 %v1535
        %v2049 = vunpack.c.l.b16 %v1536
        %v2050 = vunpack.c.l.b16 %v1537
        %v2051 = vunpack.c.l.b16 %v1538
        %v2052 = vunpack.c.l.b16 %v1539
        %v2053 = vunpack.c.l.b16 %v1540
        %v2054 = vunpack.c.l.b16 %v1541
        %v2055 = vunpack.c.l.b16 %v1542
        %v2056 = vunpack.c.l.b16 %v1543
        %v2057 = vunpack.c.l.b16 %v1544
        %v2058 = vunpack.c.l.b16 %v1545
        %v2059 = vunpack.c.l.b16 %v1546
        %v2060 = vunpack.c.l.b16 %v1547
        %v2061 = vunpack.c.l.b16 %v1548
        %v2062 = vunpack.c.l.b16 %v1549
        %v2063 = vunpack.c.l.b16 %v1550
        %v2064 = vunpack.c.l.b16 %v1551
        %v2065 = vunpack.c.l.b16 %v1552
        %v2066 = vunpack.c.l.b16 %v1553
        %v2067 = vunpack.c.l.b16 %v1554
        %v2068 = vunpack.c.l.b16 %v1555
        %v2069 = vunpack.c.l.b16 %v1556
        %v2070 = vunpack.c.l.b16 %v1557
        %v2071 = vunpack.c.l.b16 %v1558
        %v2072 = vunpack.c.l.b16 %v1559
        %v2073 = vunpack.c.l.b16 %v1560
        %v2074 = vunpack.c.l.b16 %v1561
        %v2075 = vunpack.c.l.b16 %v1562
        %v2076 = vunpack.c.l.b16 %v1563
        %v2077 = vunpack.c.l.b16 %v1564
        %v2078 = vunpack.c.l.b16 %v1565
        %v2079 = vunpack.c.l.b16 %v1566
        %v2080 = vunpack.c.l.b16 %v1567
        %v2081 = vunpack.c.l.b16 %v1568
        %v2082 = vunpack.c.l.b16 %v1569
        %v2083 = vunpack.c.l.b16 %v1570
        %v2084 = vunpack.c.l.b16 %v1571
        %v2085 = vunpack.c.l.b16 %v1572
        %v2086 = vunpack.c.l.b16 %v1573
        %v2087 = vunpack.c.l.b16 %v1574
        %v2088 = vunpack.c.l.b16 %v1575
        %v2089 = vunpack.c.l.b16 %v1576
        %v2090 = vunpack.c.l.b16 %v1577
        %v2091 = vunpack.c.l.b16 %v1578
        %v2092 = vunpack.c.l.b16 %v1579
        %v2093 = vunpack.c.l.b16 %v1580
        %v2094 = vunpack.c.l.b16 %v1581
        %v2095 = vunpack.c.l.b16 %v1582
        %v2096 = vunpack.c.l.b16 %v1583
        %v2097 = vunpack.c.l.b16 %v1584
        %v2098 = vunpack.c.l.b16 %v1585
        %v2099 = vunpack.c.l.b16 %v1586
        %v2100 = vunpack.c.l.b16 %v1587
        %v2101 = vunpack.c.l.b16 %v1588
        %v2102 = vunpack.c.l.b16 %v1589
        %v2103 = vunpack.c.l.b16 %v1590
        %v2104 = vunpack.c.l.b16 %v1591
        %v2105 = vunpack.c.l.b16 %v1592
        %v2106 = vunpack.c.l.b16 %v1593
        %v2107 = vunpack.c.l.b16 %v1594
        %v2108 = vunpack.c.l.b16 %v1595
        %v2109 = vunpack.c.l.b16 %v1596
        %v2110 = vunpack.c.l.b16 %v1597
        %v2111 = vunpack.c.l.b16 %v1598
        %v2112 = vunpack.c.l.b16 %v1599
        %v2113 = vunpack.c.l.b16 %v1600
        %v2114 = vunpack.c.l.b16 %v1601
        %v2115 = vunpack.c.l.b16 %v1602
        %v2116 = vunpack.c.l.b16 %v1603
        %v2117 = vunpack.c.l.b16 %v1604
        %v2118 = vunpack.c.l.b16 %v1605
        %v2119 = vunpack.c.l.b16 %v1606
        %v2120 = vpack.c.b16 %v1865, %v1864
        %v2121 = vpack.c.b16 %v1867, %v1866
        %v2122 = vpack.c.b16 %v1869, %v1868
        %v2123 = vpack.c.b16 %v1871, %v1870
        %v2124 = vpack.c.b16 %v1873, %v1872
        %v2125 = vpack.c.b16 %v1875, %v1874
        %v2126 = vpack.c.b16 %v1877, %v1876
        %v2127 = vpack.c.b16 %v1879, %v1878
        %v2128 = vpack.c.b16 %v1881, %v1880
        %v2129 = vpack.c.b16 %v1883, %v1882
        %v2130 = vpack.c.b16 %v1885, %v1884
        %v2131 = vpack.c.b16 %v1887, %v1886
        %v2132 = vpack.c.b16 %v1889, %v1888
        %v2133 = vpack.c.b16 %v1891, %v1890
        %v2134 = vpack.c.b16 %v1893, %v1892
        %v2135 = vpack.c.b16 %v1895, %v1894
        %v2136 = vpack.c.b16 %v1897, %v1896
        %v2137 = vpack.c.b16 %v1899, %v1898
        %v2138 = vpack.c.b16 %v1901, %v1900
        %v2139 = vpack.c.b16 %v1903, %v1902
        %v2140 = vpack.c.b16 %v1905, %v1904
        %v2141 = vpack.c.b16 %v1907, %v1906
        %v2142 = vpack.c.b16 %v1909, %v1908
        %v2143 = vpack.c.b16 %v1911, %v1910
        %v2144 = vpack.c.b16 %v1913, %v1912
        %v2145 = vpack.c.b16 %v1915, %v1914
        %v2146 = vpack.c.b16 %v1917, %v1916
        %v2147 = vpack.c.b16 %v1919, %v1918
        %v2148 = vpack.c.b16 %v1921, %v1920
        %v2149 = vpack.c.b16 %v1923, %v1922
        %v2150 = vpack.c.b16 %v1925, %v1924
        %v2151 = vpack.c.b16 %v1927, %v1926
        %v2152 = vpack.c.b16 %v1929, %v1928
        %v2153 = vpack.c.b16 %v1931, %v1930
        %v2154 = vpack.c.b16 %v1933, %v1932
        %v2155 = vpack.c.b16 %v1935, %v1934
        %v2156 = vpack.c.b16 %v1937, %v1936
        %v2157 = vpack.c.b16 %v1939, %v1938
        %v2158 = vpack.c.b16 %v1941, %v1940
        %v2159 = vpack.c.b16 %v1943, %v1942
        %v2160 = vpack.c.b16 %v1945, %v1944
        %v2161 = vpack.c.b16 %v1947, %v1946
        %v2162 = vpack.c.b16 %v1949, %v1948
        %v2163 = vpack.c.b16 %v1951, %v1950
        %v2164 = vpack.c.b16 %v1953, %v1952
        %v2165 = vpack.c.b16 %v1955, %v1954
        %v2166 = vpack.c.b16 %v1957, %v1956
        %v2167 = vpack.c.b16 %v1959, %v1958
        %v2168 = vpack.c.b16 %v1961, %v1960
        %v2169 = vpack.c.b16 %v1963, %v1962
        %v2170 = vpack.c.b16 %v1965, %v1964
        %v2171 = vpack.c.b16 %v1967, %v1966
        %v2172 = vpack.c.b16 %v1969, %v1968
        %v2173 = vpack.c.b16 %v1971, %v1970
        %v2174 = vpack.c.b16 %v1973, %v1972
        %v2175 = vpack.c.b16 %v1975, %v1974
        %v2176 = vpack.c.b16 %v1977, %v1976
        %v2177 = vpack.c.b16 %v1979, %v1978
        %v2178 = vpack.c.b16 %v1981, %v1980
        %v2179 = vpack.c.b16 %v1983, %v1982
        %v2180 = vpack.c.b16 %v1985, %v1984
        %v2181 = vpack.c.b16 %v1987, %v1986
        %v2182 = vpack.c.b16 %v1989, %v1988
        %v2183 = vpack.c.b16 %v1991, %v1990
        %v2184 = vpack.c.b16 %v1993, %v1992
        %v2185 = vpack.c.b16 %v1995, %v1994
        %v2186 = vpack.c.b16 %v1997, %v1996
        %v2187 = vpack.c.b16 %v1999, %v1998
        %v2188 = vpack.c.b16 %v2001, %v2000
        %v2189 = vpack.c.b16 %v2003, %v2002
        %v2190 = vpack.c.b16 %v2005, %v2004
        %v2191 = vpack.c.b16 %v2007, %v2006
        %v2192 = vpack.c.b16 %v2009, %v2008
        %v2193 = vpack.c.b16 %v2011, %v2010
        %v2194 = vpack.c.b16 %v2013, %v2012
        %v2195 = vpack.c.b16 %v2015, %v2014
        %v2196 = vpack.c.b16 %v2017, %v2016
        %v2197 = vpack.c.b16 %v2019, %v2018
        %v2198 = vpack.c.b16 %v2021, %v2020
        %v2199 = vpack.c.b16 %v2023, %v2022
        %v2200 = vpack.c.b16 %v2025, %v2024
        %v2201 = vpack.c.b16 %v2027, %v2026
        %v2202 = vpack.c.b16 %v2029, %v2028
        %v2203 = vpack.c.b16 %v2031, %v2030
        %v2204 = vpack.c.b16 %v2033, %v2032
        %v2205 = vpack.c.b16 %v2035, %v2034
        %v2206 = vpack.c.b16 %v2037, %v2036
        %v2207 = vpack.c.b16 %v2039, %v2038
        %v2208 = vpack.c.b16 %v2041, %v2040
        %v2209 = vpack.c.b16 %v2043, %v2042
        %v2210 = vpack.c.b16 %v2045, %v2044
        %v2211 = vpack.c.b16 %v2047, %v2046
        %v2212 = vpack.c.b16 %v2049, %v2048
        %v2213 = vpack.c.b16 %v2051, %v2050
        %v2214 = vpack.c.b16 %v2053, %v2052
        %v2215 = vpack.c.b16 %v2055, %v2054
        %v2216 = vpack.c.b16 %v2057, %v2056
        %v2217 = vpack.c.b16 %v2059, %v2058
        %v2218 = vpack.c.b16 %v2061, %v2060
        %v2219 = vpack.c.b16 %v2063, %v2062
        %v2220 = vpack.c.b16 %v2065, %v2064
        %v2221 = vpack.c.b16 %v2067, %v2066
        %v2222 = vpack.c.b16 %v2069, %v2068
        %v2223 = vpack.c.b16 %v2071, %v2070
        %v2224 = vpack.c.b16 %v2073, %v2072
        %v2225 = vpack.c.b16 %v2075, %v2074
        %v2226 = vpack.c.b16 %v2077, %v2076
        %v2227 = vpack.c.b16 %v2079, %v2078
        %v2228 = vpack.c.b16 %v2081, %v2080
        %v2229 = vpack.c.b16 %v2083, %v2082
        %v2230 = vpack.c.b16 %v2085, %v2084
        %v2231 = vpack.c.b16 %v2087, %v2086
        %v2232 = vpack.c.b16 %v2089, %v2088
        %v2233 = vpack.c.b16 %v2091, %v2090
        %v2234 = vpack.c.b16 %v2093, %v2092
        %v2235 = vpack.c.b16 %v2095, %v2094
        %v2236 = vpack.c.b16 %v2097, %v2096
        %v2237 = vpack.c.b16 %v2099, %v2098
        %v2238 = vpack.c.b16 %v2101, %v2100
        %v2239 = vpack.c.b16 %v2103, %v2102
        %v2240 = vpack.c.b16 %v2105, %v2104
        %v2241 = vpack.c.b16 %v2107, %v2106
        %v2242 = vpack.c.b16 %v2109, %v2108
        %v2243 = vpack.c.b16 %v2111, %v2110
        %v2244 = vpack.c.b16 %v2113, %v2112
        %v2245 = vpack.c.b16 %v2115, %v2114
        %v2246 = vpack.c.b16 %v2117, %v2116
        %v2247 = vpack.c.b16 %v2119, %v2118
        %2376 = vmatpush.bf16.msra.mxu0 %v2127
        %2377 = vmatpush.bf16.msra.mxu0 %v2126
        %2378 = vmatpush.bf16.msra.mxu0 %v2125
        %2379 = vmatpush.bf16.msra.mxu0 %v2124
        %2380 = vmatpush.bf16.msra.mxu0 %v2123
        %2381 = vmatpush.bf16.msra.mxu0 %v2122
        %2382 = vmatpush.bf16.msra.mxu0 %v2121
        %2383 = vmatpush.bf16.msra.mxu0 %v2120
        %2384 = vmatmul.bf16.gmra.mxu0 %v1335
        %v2385 = vpop.f32.mrf.mxu0
        %v2386 = vadd.f32 %v1607, %v2385
        %v2387 = vpop.f32.mrf.mxu0
        %2388 = vdwg.mxu0
        %2389 = vmatpush.bf16.msra.mxu0 %v2135
        %2390 = vmatpush.bf16.msra.mxu0 %v2134
        %2391 = vmatpush.bf16.msra.mxu0 %v2133
        %2392 = vmatpush.bf16.msra.mxu0 %v2132
        %2393 = vmatpush.bf16.msra.mxu0 %v2131
        %2394 = vmatpush.bf16.msra.mxu0 %v2130
        %2395 = vmatpush.bf16.msra.mxu0 %v2129
        %2396 = vmatpush.bf16.msra.mxu0 %v2128
        %2397 = vmatmul.bf16.gmra.mxu0 %v1336
        %v2398 = vpop.f32.mrf.mxu0
        %v2399 = vadd.f32 %v2386, %v2398
        %v2400 = vpop.f32.mrf.mxu0
        %2401 = vdwg.mxu0
        %2402 = vmatpush.bf16.msra.mxu0 %v2143
        %2403 = vmatpush.bf16.msra.mxu0 %v2142
        %2404 = vmatpush.bf16.msra.mxu0 %v2141
        %2405 = vmatpush.bf16.msra.mxu0 %v2140
        %2406 = vmatpush.bf16.msra.mxu0 %v2139
        %2407 = vmatpush.bf16.msra.mxu0 %v2138
        %2408 = vmatpush.bf16.msra.mxu0 %v2137
        %2409 = vmatpush.bf16.msra.mxu0 %v2136
        %2410 = vmatmul.bf16.gmra.mxu0 %v1337
        %v2411 = vpop.f32.mrf.mxu0
        %v2412 = vadd.f32 %v2399, %v2411
        %v2413 = vpop.f32.mrf.mxu0
        %2414 = vdwg.mxu0
        %2415 = vmatpush.bf16.msra.mxu0 %v2151
        %2416 = vmatpush.bf16.msra.mxu0 %v2150
        %2417 = vmatpush.bf16.msra.mxu0 %v2149
        %2418 = vmatpush.bf16.msra.mxu0 %v2148
        %2419 = vmatpush.bf16.msra.mxu0 %v2147
        %2420 = vmatpush.bf16.msra.mxu0 %v2146
        %2421 = vmatpush.bf16.msra.mxu0 %v2145
        %2422 = vmatpush.bf16.msra.mxu0 %v2144
        %2423 = vmatmul.bf16.gmra.mxu0 %v1338
        %v2424 = vpop.f32.mrf.mxu0
        %v2425 = vadd.f32 %v2412, %v2424
        %v2426 = vpop.f32.mrf.mxu0
        %2427 = vdwg.mxu0
        %2428 = vmatpush.bf16.msra.mxu0 %v2159
        %2429 = vmatpush.bf16.msra.mxu0 %v2158
        %2430 = vmatpush.bf16.msra.mxu0 %v2157
        %2431 = vmatpush.bf16.msra.mxu0 %v2156
        %2432 = vmatpush.bf16.msra.mxu0 %v2155
        %2433 = vmatpush.bf16.msra.mxu0 %v2154
        %2434 = vmatpush.bf16.msra.mxu0 %v2153
        %2435 = vmatpush.bf16.msra.mxu0 %v2152
        %2436 = vmatmul.bf16.gmra.mxu0 %v1339
        %v2437 = vpop.f32.mrf.mxu0
        %v2438 = vadd.f32 %v2425, %v2437
        %v2439 = vpop.f32.mrf.mxu0
        %2440 = vdwg.mxu0
        %2441 = vmatpush.bf16.msra.mxu0 %v2167
        %2442 = vmatpush.bf16.msra.mxu0 %v2166
        %2443 = vmatpush.bf16.msra.mxu0 %v2165
        %2444 = vmatpush.bf16.msra.mxu0 %v2164
        %2445 = vmatpush.bf16.msra.mxu0 %v2163
        %2446 = vmatpush.bf16.msra.mxu0 %v2162
        %2447 = vmatpush.bf16.msra.mxu0 %v2161
        %2448 = vmatpush.bf16.msra.mxu0 %v2160
        %2449 = vmatmul.bf16.gmra.mxu0 %v1340
        %v2450 = vpop.f32.mrf.mxu0
        %v2451 = vadd.f32 %v2438, %v2450
        %v2452 = vpop.f32.mrf.mxu0
        %2453 = vdwg.mxu0
        %2454 = vmatpush.bf16.msra.mxu0 %v2175
        %2455 = vmatpush.bf16.msra.mxu0 %v2174
        %2456 = vmatpush.bf16.msra.mxu0 %v2173
        %2457 = vmatpush.bf16.msra.mxu0 %v2172
        %2458 = vmatpush.bf16.msra.mxu0 %v2171
        %2459 = vmatpush.bf16.msra.mxu0 %v2170
        %2460 = vmatpush.bf16.msra.mxu0 %v2169
        %2461 = vmatpush.bf16.msra.mxu0 %v2168
        %2462 = vmatmul.bf16.gmra.mxu0 %v1341
        %v2463 = vpop.f32.mrf.mxu0
        %v2464 = vadd.f32 %v2451, %v2463
        %v2465 = vpop.f32.mrf.mxu0
        %2466 = vdwg.mxu0
        %2467 = vmatpush.bf16.msra.mxu0 %v2183
        %2468 = vmatpush.bf16.msra.mxu0 %v2182
        %2469 = vmatpush.bf16.msra.mxu0 %v2181
        %2470 = vmatpush.bf16.msra.mxu0 %v2180
        %2471 = vmatpush.bf16.msra.mxu0 %v2179
        %2472 = vmatpush.bf16.msra.mxu0 %v2178
        %2473 = vmatpush.bf16.msra.mxu0 %v2177
        %2474 = vmatpush.bf16.msra.mxu0 %v2176
        %2475 = vmatmul.bf16.gmra.mxu0 %v1342
        %v2476 = vpop.f32.mrf.mxu0
        %v2477 = vadd.f32 %v2464, %v2476
        %v2478 = vpop.f32.mrf.mxu0
        %2479 = vdwg.mxu0
        %2480 = vmatpush.bf16.msra.mxu0 %v2191
        %2481 = vmatpush.bf16.msra.mxu0 %v2190
        %2482 = vmatpush.bf16.msra.mxu0 %v2189
        %2483 = vmatpush.bf16.msra.mxu0 %v2188
        %2484 = vmatpush.bf16.msra.mxu0 %v2187
        %2485 = vmatpush.bf16.msra.mxu0 %v2186
        %2486 = vmatpush.bf16.msra.mxu0 %v2185
        %2487 = vmatpush.bf16.msra.mxu0 %v2184
        %2488 = vmatmul.bf16.gmra.mxu0 %v1343
        %v2489 = vpop.f32.mrf.mxu0
        %v2490 = vadd.f32 %v2477, %v2489
        %v2491 = vpop.f32.mrf.mxu0
        %2492 = vdwg.mxu0
        %2493 = vmatpush.bf16.msra.mxu0 %v2199
        %2494 = vmatpush.bf16.msra.mxu0 %v2198
        %2495 = vmatpush.bf16.msra.mxu0 %v2197
        %2496 = vmatpush.bf16.msra.mxu0 %v2196
        %2497 = vmatpush.bf16.msra.mxu0 %v2195
        %2498 = vmatpush.bf16.msra.mxu0 %v2194
        %2499 = vmatpush.bf16.msra.mxu0 %v2193
        %2500 = vmatpush.bf16.msra.mxu0 %v2192
        %2501 = vmatmul.bf16.gmra.mxu0 %v1344
        %v2502 = vpop.f32.mrf.mxu0
        %v2503 = vadd.f32 %v2490, %v2502
        %v2504 = vpop.f32.mrf.mxu0
        %2505 = vdwg.mxu0
        %2506 = vmatpush.bf16.msra.mxu0 %v2207
        %2507 = vmatpush.bf16.msra.mxu0 %v2206
        %2508 = vmatpush.bf16.msra.mxu0 %v2205
        %2509 = vmatpush.bf16.msra.mxu0 %v2204
        %2510 = vmatpush.bf16.msra.mxu0 %v2203
        %2511 = vmatpush.bf16.msra.mxu0 %v2202
        %2512 = vmatpush.bf16.msra.mxu0 %v2201
        %2513 = vmatpush.bf16.msra.mxu0 %v2200
        %2514 = vmatmul.bf16.gmra.mxu0 %v1345
        %v2515 = vpop.f32.mrf.mxu0
        %v2516 = vadd.f32 %v2503, %v2515
        %v2517 = vpop.f32.mrf.mxu0
        %2518 = vdwg.mxu0
        %2519 = vmatpush.bf16.msra.mxu0 %v2215
        %2520 = vmatpush.bf16.msra.mxu0 %v2214
        %2521 = vmatpush.bf16.msra.mxu0 %v2213
        %2522 = vmatpush.bf16.msra.mxu0 %v2212
        %2523 = vmatpush.bf16.msra.mxu0 %v2211
        %2524 = vmatpush.bf16.msra.mxu0 %v2210
        %2525 = vmatpush.bf16.msra.mxu0 %v2209
        %2526 = vmatpush.bf16.msra.mxu0 %v2208
        %2527 = vmatmul.bf16.gmra.mxu0 %v1346
        %v2528 = vpop.f32.mrf.mxu0
        %v2529 = vadd.f32 %v2516, %v2528
        %v2530 = vpop.f32.mrf.mxu0
        %2531 = vdwg.mxu0
        %2532 = vmatpush.bf16.msra.mxu0 %v2223
        %2533 = vmatpush.bf16.msra.mxu0 %v2222
        %2534 = vmatpush.bf16.msra.mxu0 %v2221
        %2535 = vmatpush.bf16.msra.mxu0 %v2220
        %2536 = vmatpush.bf16.msra.mxu0 %v2219
        %2537 = vmatpush.bf16.msra.mxu0 %v2218
        %2538 = vmatpush.bf16.msra.mxu0 %v2217
        %2539 = vmatpush.bf16.msra.mxu0 %v2216
        %2540 = vmatmul.bf16.gmra.mxu0 %v1347
        %v2541 = vpop.f32.mrf.mxu0
        %v2542 = vadd.f32 %v2529, %v2541
        %v2543 = vpop.f32.mrf.mxu0
        %2544 = vdwg.mxu0
        %2545 = vmatpush.bf16.msra.mxu0 %v2231
        %2546 = vmatpush.bf16.msra.mxu0 %v2230
        %2547 = vmatpush.bf16.msra.mxu0 %v2229
        %2548 = vmatpush.bf16.msra.mxu0 %v2228
        %2549 = vmatpush.bf16.msra.mxu0 %v2227
        %2550 = vmatpush.bf16.msra.mxu0 %v2226
        %2551 = vmatpush.bf16.msra.mxu0 %v2225
        %2552 = vmatpush.bf16.msra.mxu0 %v2224
        %2553 = vmatmul.bf16.gmra.mxu0 %v1348
        %v2554 = vpop.f32.mrf.mxu0
        %v2555 = vadd.f32 %v2542, %v2554
        %v2556 = vpop.f32.mrf.mxu0
        %2557 = vdwg.mxu0
        %2558 = vmatpush.bf16.msra.mxu0 %v2239
        %2559 = vmatpush.bf16.msra.mxu0 %v2238
        %2560 = vmatpush.bf16.msra.mxu0 %v2237
        %2561 = vmatpush.bf16.msra.mxu0 %v2236
        %2562 = vmatpush.bf16.msra.mxu0 %v2235
        %2563 = vmatpush.bf16.msra.mxu0 %v2234
        %2564 = vmatpush.bf16.msra.mxu0 %v2233
        %2565 = vmatpush.bf16.msra.mxu0 %v2232
        %2566 = vmatmul.bf16.gmra.mxu0 %v1349
        %v2567 = vpop.f32.mrf.mxu0
        %v2568 = vadd.f32 %v2555, %v2567
        %v2569 = vpop.f32.mrf.mxu0
        %2570 = vdwg.mxu0
        %2571 = vmatpush.bf16.msra.mxu0 %v2247
        %2572 = vmatpush.bf16.msra.mxu0 %v2246
        %2573 = vmatpush.bf16.msra.mxu0 %v2245
        %2574 = vmatpush.bf16.msra.mxu0 %v2244
        %2575 = vmatpush.bf16.msra.mxu0 %v2243
        %2576 = vmatpush.bf16.msra.mxu0 %v2242
        %2577 = vmatpush.bf16.msra.mxu0 %v2241
        %2578 = vmatpush.bf16.msra.mxu0 %v2240
        %2579 = vmatmul.bf16.gmra.mxu0 %v1350
        %v2580 = vpop.f32.mrf.mxu0
        %v2581 = vadd.f32 %v2568, %v2580
        %v2582 = vpop.f32.mrf.mxu0
        %2583 = vdwg.mxu0
        %v2584 = vpack.c.bf16 %v2581, %v2581
        %v2585 = vld [vmem:[%s10] sm:$0xff]
        %v2586 = vld [vmem:[%s10 + $0x8] sm:$0xff]
        %v2587 = vld [vmem:[%s10 + $0x10] sm:$0xff]
        %v2588 = vld [vmem:[%s10 + $0x18] sm:$0xff]
        %v2589 = vld [vmem:[%s10 + $0x20] sm:$0xff]
        %v2590 = vld [vmem:[%s10 + $0x28] sm:$0xff]
        %v2591 = vld [vmem:[%s10 + $0x30] sm:$0xff]
        %v2592 = vld [vmem:[%s10 + $0x38] sm:$0xff]
        %v2593 = vld [vmem:[%s10 + $0x40] sm:$0xff]
        %v2594 = vld [vmem:[%s10 + $0x48] sm:$0xff]
        %v2595 = vld [vmem:[%s10 + $0x50] sm:$0xff]
        %v2596 = vld [vmem:[%s10 + $0x58] sm:$0xff]
        %v2597 = vld [vmem:[%s10 + $0x60] sm:$0xff]
        %v2598 = vld [vmem:[%s10 + $0x68] sm:$0xff]
        %v2599 = vld [vmem:[%s10 + $0x70] sm:$0xff]
        %v2600 = vld [vmem:[%s10 + $0x78] sm:$0xff]
        %v2601 = vld [vmem:[%s10 + $0x80] sm:$0xff]
        %v2602 = vld [vmem:[%s10 + $0x88] sm:$0xff]
        %v2603 = vld [vmem:[%s10 + $0x90] sm:$0xff]
        %v2604 = vld [vmem:[%s10 + $0x98] sm:$0xff]
        %v2605 = vld [vmem:[%s10 + $0xa0] sm:$0xff]
        %v2606 = vld [vmem:[%s10 + $0xa8] sm:$0xff]
        %v2607 = vld [vmem:[%s10 + $0xb0] sm:$0xff]
        %v2608 = vld [vmem:[%s10 + $0xb8] sm:$0xff]
        %v2609 = vld [vmem:[%s10 + $0xc0] sm:$0xff]
        %v2610 = vld [vmem:[%s10 + $0xc8] sm:$0xff]
        %v2611 = vld [vmem:[%s10 + $0xd0] sm:$0xff]
        %v2612 = vld [vmem:[%s10 + $0xd8] sm:$0xff]
        %v2613 = vld [vmem:[%s10 + $0xe0] sm:$0xff]
        %v2614 = vld [vmem:[%s10 + $0xe8] sm:$0xff]
        %v2615 = vld [vmem:[%s10 + $0xf0] sm:$0xff]
        %v2616 = vld [vmem:[%s10 + $0xf8] sm:$0xff]
        %v2617 = vld [vmem:[%s10 + $0x100] sm:$0xff]
        %v2618 = vld [vmem:[%s10 + $0x108] sm:$0xff]
        %v2619 = vld [vmem:[%s10 + $0x110] sm:$0xff]
        %v2620 = vld [vmem:[%s10 + $0x118] sm:$0xff]
        %v2621 = vld [vmem:[%s10 + $0x120] sm:$0xff]
        %v2622 = vld [vmem:[%s10 + $0x128] sm:$0xff]
        %v2623 = vld [vmem:[%s10 + $0x130] sm:$0xff]
        %v2624 = vld [vmem:[%s10 + $0x138] sm:$0xff]
        %v2625 = vld [vmem:[%s10 + $0x140] sm:$0xff]
        %v2626 = vld [vmem:[%s10 + $0x148] sm:$0xff]
        %v2627 = vld [vmem:[%s10 + $0x150] sm:$0xff]
        %v2628 = vld [vmem:[%s10 + $0x158] sm:$0xff]
        %v2629 = vld [vmem:[%s10 + $0x160] sm:$0xff]
        %v2630 = vld [vmem:[%s10 + $0x168] sm:$0xff]
        %v2631 = vld [vmem:[%s10 + $0x170] sm:$0xff]
        %v2632 = vld [vmem:[%s10 + $0x178] sm:$0xff]
        %v2633 = vld [vmem:[%s10 + $0x180] sm:$0xff]
        %v2634 = vld [vmem:[%s10 + $0x188] sm:$0xff]
        %v2635 = vld [vmem:[%s10 + $0x190] sm:$0xff]
        %v2636 = vld [vmem:[%s10 + $0x198] sm:$0xff]
        %v2637 = vld [vmem:[%s10 + $0x1a0] sm:$0xff]
        %v2638 = vld [vmem:[%s10 + $0x1a8] sm:$0xff]
        %v2639 = vld [vmem:[%s10 + $0x1b0] sm:$0xff]
        %v2640 = vld [vmem:[%s10 + $0x1b8] sm:$0xff]
        %v2641 = vld [vmem:[%s10 + $0x1c0] sm:$0xff]
        %v2642 = vld [vmem:[%s10 + $0x1c8] sm:$0xff]
        %v2643 = vld [vmem:[%s10 + $0x1d0] sm:$0xff]
        %v2644 = vld [vmem:[%s10 + $0x1d8] sm:$0xff]
        %v2645 = vld [vmem:[%s10 + $0x1e0] sm:$0xff]
        %v2646 = vld [vmem:[%s10 + $0x1e8] sm:$0xff]
        %v2647 = vld [vmem:[%s10 + $0x1f0] sm:$0xff]
        %v2648 = vld [vmem:[%s10 + $0x1f8] sm:$0xff]
        %v2649 = vld [vmem:[%s11] sm:$0xff]
        %v2650 = vld [vmem:[%s11 + $0x8] sm:$0xff]
        %v2715 = vunpack.c.l.b16 %v2585
        %v2716 = vunpack.c.h.b16 %v2585
        %v2717 = vunpack.c.l.b16 %v2586
        %v2718 = vunpack.c.h.b16 %v2586
        %v2719 = vunpack.c.l.b16 %v2587
        %v2720 = vunpack.c.h.b16 %v2587
        %v2721 = vunpack.c.l.b16 %v2588
        %v2722 = vunpack.c.h.b16 %v2588
        %v2723 = vunpack.c.l.b16 %v2589
        %v2724 = vunpack.c.h.b16 %v2589
        %v2725 = vunpack.c.l.b16 %v2590
        %v2726 = vunpack.c.h.b16 %v2590
        %v2727 = vunpack.c.l.b16 %v2591
        %v2728 = vunpack.c.h.b16 %v2591
        %v2729 = vunpack.c.l.b16 %v2592
        %v2730 = vunpack.c.h.b16 %v2592
        %v2731 = vunpack.c.l.b16 %v2593
        %v2732 = vunpack.c.h.b16 %v2593
        %v2733 = vunpack.c.l.b16 %v2594
        %v2734 = vunpack.c.h.b16 %v2594
        %v2735 = vunpack.c.l.b16 %v2595
        %v2736 = vunpack.c.h.b16 %v2595
        %v2737 = vunpack.c.l.b16 %v2596
        %v2738 = vunpack.c.h.b16 %v2596
        %v2739 = vunpack.c.l.b16 %v2597
        %v2740 = vunpack.c.h.b16 %v2597
        %v2741 = vunpack.c.l.b16 %v2598
        %v2742 = vunpack.c.h.b16 %v2598
        %v2743 = vunpack.c.l.b16 %v2599
        %v2744 = vunpack.c.h.b16 %v2599
        %v2745 = vunpack.c.l.b16 %v2600
        %v2746 = vunpack.c.h.b16 %v2600
        %v2747 = vunpack.c.l.b16 %v2601
        %v2748 = vunpack.c.h.b16 %v2601
        %v2749 = vunpack.c.l.b16 %v2602
        %v2750 = vunpack.c.h.b16 %v2602
        %v2751 = vunpack.c.l.b16 %v2603
        %v2752 = vunpack.c.h.b16 %v2603
        %v2753 = vunpack.c.l.b16 %v2604
        %v2754 = vunpack.c.h.b16 %v2604
        %v2755 = vunpack.c.l.b16 %v2605
        %v2756 = vunpack.c.h.b16 %v2605
        %v2757 = vunpack.c.l.b16 %v2606
        %v2758 = vunpack.c.h.b16 %v2606
        %v2759 = vunpack.c.l.b16 %v2607
        %v2760 = vunpack.c.h.b16 %v2607
        %v2761 = vunpack.c.l.b16 %v2608
        %v2762 = vunpack.c.h.b16 %v2608
        %v2763 = vunpack.c.l.b16 %v2609
        %v2764 = vunpack.c.h.b16 %v2609
        %v2765 = vunpack.c.l.b16 %v2610
        %v2766 = vunpack.c.h.b16 %v2610
        %v2767 = vunpack.c.l.b16 %v2611
        %v2768 = vunpack.c.h.b16 %v2611
        %v2769 = vunpack.c.l.b16 %v2612
        %v2770 = vunpack.c.h.b16 %v2612
        %v2771 = vunpack.c.l.b16 %v2613
        %v2772 = vunpack.c.h.b16 %v2613
        %v2773 = vunpack.c.l.b16 %v2614
        %v2774 = vunpack.c.h.b16 %v2614
        %v2775 = vunpack.c.l.b16 %v2615
        %v2776 = vunpack.c.h.b16 %v2615
        %v2777 = vunpack.c.l.b16 %v2616
        %v2778 = vunpack.c.h.b16 %v2616
        %v2779 = vunpack.c.l.b16 %v2617
        %v2780 = vunpack.c.h.b16 %v2617
        %v2781 = vunpack.c.l.b16 %v2618
        %v2782 = vunpack.c.h.b16 %v2618
        %v2783 = vunpack.c.l.b16 %v2619
        %v2784 = vunpack.c.h.b16 %v2619
        %v2785 = vunpack.c.l.b16 %v2620
        %v2786 = vunpack.c.h.b16 %v2620
        %v2787 = vunpack.c.l.b16 %v2621
        %v2788 = vunpack.c.h.b16 %v2621
        %v2789 = vunpack.c.l.b16 %v2622
        %v2790 = vunpack.c.h.b16 %v2622
        %v2791 = vunpack.c.l.b16 %v2623
        %v2792 = vunpack.c.h.b16 %v2623
        %v2793 = vunpack.c.l.b16 %v2624
        %v2794 = vunpack.c.h.b16 %v2624
        %v2795 = vunpack.c.l.b16 %v2625
        %v2796 = vunpack.c.h.b16 %v2625
        %v2797 = vunpack.c.l.b16 %v2626
        %v2798 = vunpack.c.h.b16 %v2626
        %v2799 = vunpack.c.l.b16 %v2627
        %v2800 = vunpack.c.h.b16 %v2627
        %v2801 = vunpack.c.l.b16 %v2628
        %v2802 = vunpack.c.h.b16 %v2628
        %v2803 = vunpack.c.l.b16 %v2629
        %v2804 = vunpack.c.h.b16 %v2629
        %v2805 = vunpack.c.l.b16 %v2630
        %v2806 = vunpack.c.h.b16 %v2630
        %v2807 = vunpack.c.l.b16 %v2631
        %v2808 = vunpack.c.h.b16 %v2631
        %v2809 = vunpack.c.l.b16 %v2632
        %v2810 = vunpack.c.h.b16 %v2632
        %v2811 = vunpack.c.l.b16 %v2633
        %v2812 = vunpack.c.h.b16 %v2633
        %v2813 = vunpack.c.l.b16 %v2634
        %v2814 = vunpack.c.h.b16 %v2634
        %v2815 = vunpack.c.l.b16 %v2635
        %v2816 = vunpack.c.h.b16 %v2635
        %v2817 = vunpack.c.l.b16 %v2636
        %v2818 = vunpack.c.h.b16 %v2636
        %v2819 = vunpack.c.l.b16 %v2637
        %v2820 = vunpack.c.h.b16 %v2637
        %v2821 = vunpack.c.l.b16 %v2638
        %v2822 = vunpack.c.h.b16 %v2638
        %v2823 = vunpack.c.l.b16 %v2639
        %v2824 = vunpack.c.h.b16 %v2639
        %v2825 = vunpack.c.l.b16 %v2640
        %v2826 = vunpack.c.h.b16 %v2640
        %v2827 = vunpack.c.l.b16 %v2641
        %v2828 = vunpack.c.h.b16 %v2641
        %v2829 = vunpack.c.l.b16 %v2642
        %v2830 = vunpack.c.h.b16 %v2642
        %v2831 = vunpack.c.l.b16 %v2643
        %v2832 = vunpack.c.h.b16 %v2643
        %v2833 = vunpack.c.l.b16 %v2644
        %v2834 = vunpack.c.h.b16 %v2644
        %v2835 = vunpack.c.l.b16 %v2645
        %v2836 = vunpack.c.h.b16 %v2645
        %v2837 = vunpack.c.l.b16 %v2646
        %v2838 = vunpack.c.h.b16 %v2646
        %v2839 = vunpack.c.l.b16 %v2647
        %v2840 = vunpack.c.h.b16 %v2647
        %v2841 = vunpack.c.l.b16 %v2648
        %v2842 = vunpack.c.h.b16 %v2648
        %v2843 = vpack.c.b16 %v2731, %v2715
        %v2844 = vpack.c.b16 %v2732, %v2716
        %v2845 = vpack.c.b16 %v2733, %v2717
        %v2846 = vpack.c.b16 %v2734, %v2718
        %v2847 = vpack.c.b16 %v2735, %v2719
        %v2848 = vpack.c.b16 %v2736, %v2720
        %v2849 = vpack.c.b16 %v2737, %v2721
        %v2850 = vpack.c.b16 %v2738, %v2722
        %v2851 = vpack.c.b16 %v2739, %v2723
        %v2852 = vpack.c.b16 %v2740, %v2724
        %v2853 = vpack.c.b16 %v2741, %v2725
        %v2854 = vpack.c.b16 %v2742, %v2726
        %v2855 = vpack.c.b16 %v2743, %v2727
        %v2856 = vpack.c.b16 %v2744, %v2728
        %v2857 = vpack.c.b16 %v2745, %v2729
        %v2858 = vpack.c.b16 %v2746, %v2730
        %v2859 = vpack.c.b16 %v2763, %v2747
        %v2860 = vpack.c.b16 %v2764, %v2748
        %v2861 = vpack.c.b16 %v2765, %v2749
        %v2862 = vpack.c.b16 %v2766, %v2750
        %v2863 = vpack.c.b16 %v2767, %v2751
        %v2864 = vpack.c.b16 %v2768, %v2752
        %v2865 = vpack.c.b16 %v2769, %v2753
        %v2866 = vpack.c.b16 %v2770, %v2754
        %v2867 = vpack.c.b16 %v2771, %v2755
        %v2868 = vpack.c.b16 %v2772, %v2756
        %v2869 = vpack.c.b16 %v2773, %v2757
        %v2870 = vpack.c.b16 %v2774, %v2758
        %v2871 = vpack.c.b16 %v2775, %v2759
        %v2872 = vpack.c.b16 %v2776, %v2760
        %v2873 = vpack.c.b16 %v2777, %v2761
        %v2874 = vpack.c.b16 %v2778, %v2762
        %v2875 = vpack.c.b16 %v2795, %v2779
        %v2876 = vpack.c.b16 %v2796, %v2780
        %v2877 = vpack.c.b16 %v2797, %v2781
        %v2878 = vpack.c.b16 %v2798, %v2782
        %v2879 = vpack.c.b16 %v2799, %v2783
        %v2880 = vpack.c.b16 %v2800, %v2784
        %v2881 = vpack.c.b16 %v2801, %v2785
        %v2882 = vpack.c.b16 %v2802, %v2786
        %v2883 = vpack.c.b16 %v2803, %v2787
        %v2884 = vpack.c.b16 %v2804, %v2788
        %v2885 = vpack.c.b16 %v2805, %v2789
        %v2886 = vpack.c.b16 %v2806, %v2790
        %v2887 = vpack.c.b16 %v2807, %v2791
        %v2888 = vpack.c.b16 %v2808, %v2792
        %v2889 = vpack.c.b16 %v2809, %v2793
        %v2890 = vpack.c.b16 %v2810, %v2794
        %v2891 = vpack.c.b16 %v2827, %v2811
        %v2892 = vpack.c.b16 %v2828, %v2812
        %v2893 = vpack.c.b16 %v2829, %v2813
        %v2894 = vpack.c.b16 %v2830, %v2814
        %v2895 = vpack.c.b16 %v2831, %v2815
        %v2896 = vpack.c.b16 %v2832, %v2816
        %v2897 = vpack.c.b16 %v2833, %v2817
        %v2898 = vpack.c.b16 %v2834, %v2818
        %v2899 = vpack.c.b16 %v2835, %v2819
        %v2900 = vpack.c.b16 %v2836, %v2820
        %v2901 = vpack.c.b16 %v2837, %v2821
        %v2902 = vpack.c.b16 %v2838, %v2822
        %v2903 = vpack.c.b16 %v2839, %v2823
        %v2904 = vpack.c.b16 %v2840, %v2824
        %v2905 = vpack.c.b16 %v2841, %v2825
        %v2906 = vpack.c.b16 %v2842, %v2826
        %v2973 = vperm.slane %v2649, 0
        %v2974 = vperm.slane %v2649, 1
        %v2975 = vperm.slane %v2649, 2
        %v2976 = vperm.slane %v2649, 3
        %v2977 = vperm.slane %v2649, 4
        %v2978 = vperm.slane %v2649, 5
        %v2979 = vperm.slane %v2649, 6
        %v2980 = vperm.slane %v2649, 7
        %v2981 = vperm.slane %v2650, 0
        %v2982 = vperm.slane %v2650, 1
        %v2983 = vperm.slane %v2650, 2
        %v2984 = vperm.slane %v2650, 3
        %v2985 = vperm.slane %v2650, 4
        %v2986 = vperm.slane %v2650, 5
        %v2987 = vperm.slane %v2650, 6
        %v2988 = vperm.slane %v2650, 7
        %vm3005 = vcmask 523264
        %v3007 = vsel %vm3005, %v2584, 0
        %3009 = vmatpush.bf16.msra.mxu0 0
        %3010 = vmatpush.bf16.msra.mxu0 0
        %3011 = vmatpush.bf16.msra.mxu0 0
        %3012 = vmatpush.bf16.msra.mxu0 0
        %3013 = vmatpush.bf16.msra.mxu0 %v2891
        %3014 = vmatpush.bf16.msra.mxu0 %v2875
        %3015 = vmatpush.bf16.msra.mxu0 %v2859
        %3016 = vmatpush.bf16.msra.mxu0 %v2843
        %3017 = vmatmul.bf16.gmra.mxu0 %v3007
        %v3018 = vpop.f32.mrf.mxu0
        %v3019 = vadd.f32 %v2973, %v3018
        %v3020 = vpop.f32.mrf.mxu0
        %3021 = vdwg.mxu0
        %3022 = vmatpush.bf16.msra.mxu0 0
        %3023 = vmatpush.bf16.msra.mxu0 0
        %3024 = vmatpush.bf16.msra.mxu0 0
        %3025 = vmatpush.bf16.msra.mxu0 0
        %3026 = vmatpush.bf16.msra.mxu0 %v2892
        %3027 = vmatpush.bf16.msra.mxu0 %v2876
        %3028 = vmatpush.bf16.msra.mxu0 %v2860
        %3029 = vmatpush.bf16.msra.mxu0 %v2844
        %3030 = vmatmul.bf16.gmra.mxu0 %v3007
        %v3031 = vpop.f32.mrf.mxu0
        %v3032 = vadd.f32 %v2974, %v3031
        %v3033 = vpop.f32.mrf.mxu0
        %3034 = vdwg.mxu0
        %3035 = vmatpush.bf16.msra.mxu0 0
        %3036 = vmatpush.bf16.msra.mxu0 0
        %3037 = vmatpush.bf16.msra.mxu0 0
        %3038 = vmatpush.bf16.msra.mxu0 0
        %3039 = vmatpush.bf16.msra.mxu0 %v2893
        %3040 = vmatpush.bf16.msra.mxu0 %v2877
        %3041 = vmatpush.bf16.msra.mxu0 %v2861
        %3042 = vmatpush.bf16.msra.mxu0 %v2845
        %3043 = vmatmul.bf16.gmra.mxu0 %v3007
        %v3044 = vpop.f32.mrf.mxu0
        %v3045 = vadd.f32 %v2975, %v3044
        %v3046 = vpop.f32.mrf.mxu0
        %3047 = vdwg.mxu0
        %3048 = vmatpush.bf16.msra.mxu0 0
        %3049 = vmatpush.bf16.msra.mxu0 0
        %3050 = vmatpush.bf16.msra.mxu0 0
        %3051 = vmatpush.bf16.msra.mxu0 0
        %3052 = vmatpush.bf16.msra.mxu0 %v2894
        %3053 = vmatpush.bf16.msra.mxu0 %v2878
        %3054 = vmatpush.bf16.msra.mxu0 %v2862
        %3055 = vmatpush.bf16.msra.mxu0 %v2846
        %3056 = vmatmul.bf16.gmra.mxu0 %v3007
        %v3057 = vpop.f32.mrf.mxu0
        %v3058 = vadd.f32 %v2976, %v3057
        %v3059 = vpop.f32.mrf.mxu0
        %3060 = vdwg.mxu0
        %3061 = vmatpush.bf16.msra.mxu0 0
        %3062 = vmatpush.bf16.msra.mxu0 0
        %3063 = vmatpush.bf16.msra.mxu0 0
        %3064 = vmatpush.bf16.msra.mxu0 0
        %3065 = vmatpush.bf16.msra.mxu0 %v2895
        %3066 = vmatpush.bf16.msra.mxu0 %v2879
        %3067 = vmatpush.bf16.msra.mxu0 %v2863
        %3068 = vmatpush.bf16.msra.mxu0 %v2847
        %3069 = vmatmul.bf16.gmra.mxu0 %v3007
        %v3070 = vpop.f32.mrf.mxu0
        %v3071 = vadd.f32 %v2977, %v3070
        %v3072 = vpop.f32.mrf.mxu0
        %3073 = vdwg.mxu0
        %3074 = vmatpush.bf16.msra.mxu0 0
        %3075 = vmatpush.bf16.msra.mxu0 0
        %3076 = vmatpush.bf16.msra.mxu0 0
        %3077 = vmatpush.bf16.msra.mxu0 0
        %3078 = vmatpush.bf16.msra.mxu0 %v2896
        %3079 = vmatpush.bf16.msra.mxu0 %v2880
        %3080 = vmatpush.bf16.msra.mxu0 %v2864
        %3081 = vmatpush.bf16.msra.mxu0 %v2848
        %3082 = vmatmul.bf16.gmra.mxu0 %v3007
        %v3083 = vpop.f32.mrf.mxu0
        %v3084 = vadd.f32 %v2978, %v3083
        %v3085 = vpop.f32.mrf.mxu0
        %3086 = vdwg.mxu0
        %3087 = vmatpush.bf16.msra.mxu0 0
        %3088 = vmatpush.bf16.msra.mxu0 0
        %3089 = vmatpush.bf16.msra.mxu0 0
        %3090 = vmatpush.bf16.msra.mxu0 0
        %3091 = vmatpush.bf16.msra.mxu0 %v2897
        %3092 = vmatpush.bf16.msra.mxu0 %v2881
        %3093 = vmatpush.bf16.msra.mxu0 %v2865
        %3094 = vmatpush.bf16.msra.mxu0 %v2849
        %3095 = vmatmul.bf16.gmra.mxu0 %v3007
        %v3096 = vpop.f32.mrf.mxu0
        %v3097 = vadd.f32 %v2979, %v3096
        %v3098 = vpop.f32.mrf.mxu0
        %3099 = vdwg.mxu0
        %3100 = vmatpush.bf16.msra.mxu0 0
        %3101 = vmatpush.bf16.msra.mxu0 0
        %3102 = vmatpush.bf16.msra.mxu0 0
        %3103 = vmatpush.bf16.msra.mxu0 0
        %3104 = vmatpush.bf16.msra.mxu0 %v2898
        %3105 = vmatpush.bf16.msra.mxu0 %v2882
        %3106 = vmatpush.bf16.msra.mxu0 %v2866
        %3107 = vmatpush.bf16.msra.mxu0 %v2850
        %3108 = vmatmul.bf16.gmra.mxu0 %v3007
        %v3109 = vpop.f32.mrf.mxu0
        %v3110 = vadd.f32 %v2980, %v3109
        %v3111 = vpop.f32.mrf.mxu0
        %3112 = vdwg.mxu0
        %3113 = vmatpush.bf16.msra.mxu0 0
        %3114 = vmatpush.bf16.msra.mxu0 0
        %3115 = vmatpush.bf16.msra.mxu0 0
        %3116 = vmatpush.bf16.msra.mxu0 0
        %3117 = vmatpush.bf16.msra.mxu0 %v2899
        %3118 = vmatpush.bf16.msra.mxu0 %v2883
        %3119 = vmatpush.bf16.msra.mxu0 %v2867
        %3120 = vmatpush.bf16.msra.mxu0 %v2851
        %3121 = vmatmul.bf16.gmra.mxu0 %v3007
        %v3122 = vpop.f32.mrf.mxu0
        %v3123 = vadd.f32 %v2981, %v3122
        %v3124 = vpop.f32.mrf.mxu0
        %3125 = vdwg.mxu0
        %3126 = vmatpush.bf16.msra.mxu0 0
        %3127 = vmatpush.bf16.msra.mxu0 0
        %3128 = vmatpush.bf16.msra.mxu0 0
        %3129 = vmatpush.bf16.msra.mxu0 0
        %3130 = vmatpush.bf16.msra.mxu0 %v2900
        %3131 = vmatpush.bf16.msra.mxu0 %v2884
        %3132 = vmatpush.bf16.msra.mxu0 %v2868
        %3133 = vmatpush.bf16.msra.mxu0 %v2852
        %3134 = vmatmul.bf16.gmra.mxu0 %v3007
        %v3135 = vpop.f32.mrf.mxu0
        %v3136 = vadd.f32 %v2982, %v3135
        %v3137 = vpop.f32.mrf.mxu0
        %3138 = vdwg.mxu0
        %3139 = vmatpush.bf16.msra.mxu0 0
        %3140 = vmatpush.bf16.msra.mxu0 0
        %3141 = vmatpush.bf16.msra.mxu0 0
        %3142 = vmatpush.bf16.msra.mxu0 0
        %3143 = vmatpush.bf16.msra.mxu0 %v2901
        %3144 = vmatpush.bf16.msra.mxu0 %v2885
        %3145 = vmatpush.bf16.msra.mxu0 %v2869
        %3146 = vmatpush.bf16.msra.mxu0 %v2853
        %3147 = vmatmul.bf16.gmra.mxu0 %v3007
        %v3148 = vpop.f32.mrf.mxu0
        %v3149 = vadd.f32 %v2983, %v3148
        %v3150 = vpop.f32.mrf.mxu0
        %3151 = vdwg.mxu0
        %3152 = vmatpush.bf16.msra.mxu0 0
        %3153 = vmatpush.bf16.msra.mxu0 0
        %3154 = vmatpush.bf16.msra.mxu0 0
        %3155 = vmatpush.bf16.msra.mxu0 0
        %3156 = vmatpush.bf16.msra.mxu0 %v2902
        %3157 = vmatpush.bf16.msra.mxu0 %v2886
        %3158 = vmatpush.bf16.msra.mxu0 %v2870
        %3159 = vmatpush.bf16.msra.mxu0 %v2854
        %3160 = vmatmul.bf16.gmra.mxu0 %v3007
        %v3161 = vpop.f32.mrf.mxu0
        %v3162 = vadd.f32 %v2984, %v3161
        %v3163 = vpop.f32.mrf.mxu0
        %3164 = vdwg.mxu0
        %3165 = vmatpush.bf16.msra.mxu0 0
        %3166 = vmatpush.bf16.msra.mxu0 0
        %3167 = vmatpush.bf16.msra.mxu0 0
        %3168 = vmatpush.bf16.msra.mxu0 0
        %3169 = vmatpush.bf16.msra.mxu0 %v2903
        %3170 = vmatpush.bf16.msra.mxu0 %v2887
        %3171 = vmatpush.bf16.msra.mxu0 %v2871
        %3172 = vmatpush.bf16.msra.mxu0 %v2855
        %3173 = vmatmul.bf16.gmra.mxu0 %v3007
        %v3174 = vpop.f32.mrf.mxu0
        %v3175 = vadd.f32 %v2985, %v3174
        %v3176 = vpop.f32.mrf.mxu0
        %3177 = vdwg.mxu0
        %3178 = vmatpush.bf16.msra.mxu0 0
        %3179 = vmatpush.bf16.msra.mxu0 0
        %3180 = vmatpush.bf16.msra.mxu0 0
        %3181 = vmatpush.bf16.msra.mxu0 0
        %3182 = vmatpush.bf16.msra.mxu0 %v2904
        %3183 = vmatpush.bf16.msra.mxu0 %v2888
        %3184 = vmatpush.bf16.msra.mxu0 %v2872
        %3185 = vmatpush.bf16.msra.mxu0 %v2856
        %3186 = vmatmul.bf16.gmra.mxu0 %v3007
        %v3187 = vpop.f32.mrf.mxu0
        %v3188 = vadd.f32 %v2986, %v3187
        %v3189 = vpop.f32.mrf.mxu0
        %3190 = vdwg.mxu0
        %3191 = vmatpush.bf16.msra.mxu0 0
        %3192 = vmatpush.bf16.msra.mxu0 0
        %3193 = vmatpush.bf16.msra.mxu0 0
        %3194 = vmatpush.bf16.msra.mxu0 0
        %3195 = vmatpush.bf16.msra.mxu0 %v2905
        %3196 = vmatpush.bf16.msra.mxu0 %v2889
        %3197 = vmatpush.bf16.msra.mxu0 %v2873
        %3198 = vmatpush.bf16.msra.mxu0 %v2857
        %3199 = vmatmul.bf16.gmra.mxu0 %v3007
        %v3200 = vpop.f32.mrf.mxu0
        %v3201 = vadd.f32 %v2987, %v3200
        %v3202 = vpop.f32.mrf.mxu0
        %3203 = vdwg.mxu0
        %3204 = vmatpush.bf16.msra.mxu0 0
        %3205 = vmatpush.bf16.msra.mxu0 0
        %3206 = vmatpush.bf16.msra.mxu0 0
        %3207 = vmatpush.bf16.msra.mxu0 0
        %3208 = vmatpush.bf16.msra.mxu0 %v2906
        %3209 = vmatpush.bf16.msra.mxu0 %v2890
        %3210 = vmatpush.bf16.msra.mxu0 %v2874
        %3211 = vmatpush.bf16.msra.mxu0 %v2858
        %3212 = vmatmul.bf16.gmra.mxu0 %v3007
        %v3213 = vpop.f32.mrf.mxu0
        %v3214 = vadd.f32 %v2988, %v3213
        %v3215 = vpop.f32.mrf.mxu0
        %3216 = vdwg.mxu0
        %v3217 = vpack.c.bf16 %v3032, %v3019
        %v3218 = vpack.c.bf16 %v3058, %v3045
        %v3219 = vpack.c.bf16 %v3084, %v3071
        %v3220 = vpack.c.bf16 %v3110, %v3097
        %v3221 = vpack.c.bf16 %v3136, %v3123
        %v3222 = vpack.c.bf16 %v3162, %v3149
        %v3223 = vpack.c.bf16 %v3188, %v3175
        %v3224 = vpack.c.bf16 %v3214, %v3201
        %v3225 = vld [vmem:[%s12] sm:$0xf]
        %v3226 = vld [vmem:[%s12 + $0x4] sm:$0xf]
        %s3227 = scalar_lea.vmem %s12, 8
        %v3228 = vld [vmem:[%s3227] sm:$0xf]
        %v3229 = vld [vmem:[%s3227 + $0x4] sm:$0xf]
        %v3232 = vunpack.c.l.b16 %v3228
        %v3233 = vunpack.c.l.b16 %v3229
        %v3234 = vpack.c.b16 %v3233, %v3232
        %v3236 = vunpack.c.l.b16 %v3218
        %v3237 = vunpack.c.h.b16 %v3218
        %v3238 = vpack.c.b16 %v3236, %v3236
        %v3239 = vpack.c.b16 %v3237, %v3237
        %vm3240 = vcmask 7168
        %v3242 = vsel %vm3240, %v3234, 0
        %vm3244 = vcmask 1040384
        %v3245 = vsel 0, 4294967295, 65535
        %v3246 = vsel %vm3244, %v3245, 0
        %v3248 = vand.u32 %v3238, %v3246
        %v3251 = vand.u32 %v3239, %v3246
        %3253 = vmatpush.bf16.msra.mxu0 0
        %3254 = vmatpush.bf16.msra.mxu0 0
        %3255 = vmatpush.bf16.msra.mxu0 0
        %3256 = vmatpush.bf16.msra.mxu0 0
        %3257 = vmatpush.bf16.msra.mxu0 0
        %3258 = vmatpush.bf16.msra.mxu0 0
        %3259 = vmatpush.bf16.msra.mxu0 0
        %3260 = vmatpush.bf16.msra.mxu0 %v3248
        %3261 = vmatmul.bf16.gmra.mxu0 %v3242
        %v3262 = vpop.f32.mrf.mxu0
        %v3263 = vadd.f32 0.0, %v3262
        %v3264 = vpop.f32.mrf.mxu0
        %v3265 = vadd.f32 0.0, %v3264
        %3266 = vdwg.mxu0
        %3267 = vmatpush.bf16.msra.mxu0 0
        %3268 = vmatpush.bf16.msra.mxu0 0
        %3269 = vmatpush.bf16.msra.mxu0 0
        %3270 = vmatpush.bf16.msra.mxu0 0
        %3271 = vmatpush.bf16.msra.mxu0 0
        %3272 = vmatpush.bf16.msra.mxu0 0
        %3273 = vmatpush.bf16.msra.mxu0 0
        %3274 = vmatpush.bf16.msra.mxu0 %v3251
        %3275 = vmatmul.bf16.gmra.mxu0 %v3242
        %v3276 = vpop.f32.mrf.mxu0
        %v3277 = vadd.f32 0.0, %v3276
        %v3278 = vpop.f32.mrf.mxu0
        %v3279 = vadd.f32 0.0, %v3278
        %3280 = vdwg.mxu0
        %s3281 = scalar_lea.vmem %s12, 16
        %v3282 = vld [vmem:[%s3281] sm:$0xf]
        %v3283 = vld [vmem:[%s3281 + $0x4] sm:$0xf]
        %v3286 = vunpack.c.l.b16 %v3282
        %v3287 = vunpack.c.l.b16 %v3283
        %v3288 = vpack.c.b16 %v3287, %v3286
        %v3290 = vunpack.c.l.b16 %v3219
        %v3291 = vunpack.c.h.b16 %v3219
        %v3292 = vpack.c.b16 %v3290, %v3290
        %v3293 = vpack.c.b16 %v3291, %v3291
        %v3295 = vsel %vm3240, %v3288, 0
        %v3298 = vand.u32 %v3292, %v3246
        %v3301 = vand.u32 %v3293, %v3246
        %3303 = vmatpush.bf16.msra.mxu0 0
        %3304 = vmatpush.bf16.msra.mxu0 0
        %3305 = vmatpush.bf16.msra.mxu0 0
        %3306 = vmatpush.bf16.msra.mxu0 0
        %3307 = vmatpush.bf16.msra.mxu0 0
        %3308 = vmatpush.bf16.msra.mxu0 0
        %3309 = vmatpush.bf16.msra.mxu0 0
        %3310 = vmatpush.bf16.msra.mxu0 %v3298
        %3311 = vmatmul.bf16.gmra.mxu0 %v3295
        %v3312 = vpop.f32.mrf.mxu0
        %v3313 = vadd.f32 0.0, %v3312
        %v3314 = vpop.f32.mrf.mxu0
        %v3315 = vadd.f32 0.0, %v3314
        %3316 = vdwg.mxu0
        %3317 = vmatpush.bf16.msra.mxu0 0
        %3318 = vmatpush.bf16.msra.mxu0 0
        %3319 = vmatpush.bf16.msra.mxu0 0
        %3320 = vmatpush.bf16.msra.mxu0 0
        %3321 = vmatpush.bf16.msra.mxu0 0
        %3322 = vmatpush.bf16.msra.mxu0 0
        %3323 = vmatpush.bf16.msra.mxu0 0
        %3324 = vmatpush.bf16.msra.mxu0 %v3301
        %3325 = vmatmul.bf16.gmra.mxu0 %v3295
        %v3326 = vpop.f32.mrf.mxu0
        %v3327 = vadd.f32 0.0, %v3326
        %v3328 = vpop.f32.mrf.mxu0
        %v3329 = vadd.f32 0.0, %v3328
        %3330 = vdwg.mxu0
        %s3331 = scalar_lea.vmem %s12, 24
        %v3332 = vld [vmem:[%s3331] sm:$0xf]
        %v3333 = vld [vmem:[%s3331 + $0x4] sm:$0xf]
        %v3336 = vunpack.c.l.b16 %v3332
        %v3337 = vunpack.c.l.b16 %v3333
        %v3338 = vpack.c.b16 %v3337, %v3336
        %v3340 = vunpack.c.l.b16 %v3220
        %v3341 = vunpack.c.h.b16 %v3220
        %v3342 = vpack.c.b16 %v3340, %v3340
        %v3343 = vpack.c.b16 %v3341, %v3341
        %v3345 = vsel %vm3240, %v3338, 0
        %v3348 = vand.u32 %v3342, %v3246
        %v3351 = vand.u32 %v3343, %v3246
        %3353 = vmatpush.bf16.msra.mxu0 0
        %3354 = vmatpush.bf16.msra.mxu0 0
        %3355 = vmatpush.bf16.msra.mxu0 0
        %3356 = vmatpush.bf16.msra.mxu0 0
        %3357 = vmatpush.bf16.msra.mxu0 0
        %3358 = vmatpush.bf16.msra.mxu0 0
        %3359 = vmatpush.bf16.msra.mxu0 0
        %3360 = vmatpush.bf16.msra.mxu0 %v3348
        %3361 = vmatmul.bf16.gmra.mxu0 %v3345
        %v3362 = vpop.f32.mrf.mxu0
        %v3363 = vadd.f32 0.0, %v3362
        %v3364 = vpop.f32.mrf.mxu0
        %v3365 = vadd.f32 0.0, %v3364
        %3366 = vdwg.mxu0
        %3367 = vmatpush.bf16.msra.mxu0 0
        %3368 = vmatpush.bf16.msra.mxu0 0
        %3369 = vmatpush.bf16.msra.mxu0 0
        %3370 = vmatpush.bf16.msra.mxu0 0
        %3371 = vmatpush.bf16.msra.mxu0 0
        %3372 = vmatpush.bf16.msra.mxu0 0
        %3373 = vmatpush.bf16.msra.mxu0 0
        %3374 = vmatpush.bf16.msra.mxu0 %v3351
        %3375 = vmatmul.bf16.gmra.mxu0 %v3345
        %v3376 = vpop.f32.mrf.mxu0
        %v3377 = vadd.f32 0.0, %v3376
        %v3378 = vpop.f32.mrf.mxu0
        %v3379 = vadd.f32 0.0, %v3378
        %3380 = vdwg.mxu0
        %s3381 = scalar_lea.vmem %s12, 32
        %v3382 = vld [vmem:[%s3381] sm:$0xf]
        %v3383 = vld [vmem:[%s3381 + $0x4] sm:$0xf]
        %v3386 = vunpack.c.l.b16 %v3382
        %v3387 = vunpack.c.l.b16 %v3383
        %v3388 = vpack.c.b16 %v3387, %v3386
        %v3390 = vunpack.c.l.b16 %v3221
        %v3391 = vunpack.c.h.b16 %v3221
        %v3392 = vpack.c.b16 %v3390, %v3390
        %v3393 = vpack.c.b16 %v3391, %v3391
        %v3395 = vsel %vm3240, %v3388, 0
        %v3398 = vand.u32 %v3392, %v3246
        %v3401 = vand.u32 %v3393, %v3246
        %3403 = vmatpush.bf16.msra.mxu0 0
        %3404 = vmatpush.bf16.msra.mxu0 0
        %3405 = vmatpush.bf16.msra.mxu0 0
        %3406 = vmatpush.bf16.msra.mxu0 0
        %3407 = vmatpush.bf16.msra.mxu0 0
        %3408 = vmatpush.bf16.msra.mxu0 0
        %3409 = vmatpush.bf16.msra.mxu0 0
        %3410 = vmatpush.bf16.msra.mxu0 %v3398
        %3411 = vmatmul.bf16.gmra.mxu0 %v3395
        %v3412 = vpop.f32.mrf.mxu0
        %v3413 = vadd.f32 0.0, %v3412
        %v3414 = vpop.f32.mrf.mxu0
        %v3415 = vadd.f32 0.0, %v3414
        %3416 = vdwg.mxu0
        %3417 = vmatpush.bf16.msra.mxu0 0
        %3418 = vmatpush.bf16.msra.mxu0 0
        %3419 = vmatpush.bf16.msra.mxu0 0
        %3420 = vmatpush.bf16.msra.mxu0 0
        %3421 = vmatpush.bf16.msra.mxu0 0
        %3422 = vmatpush.bf16.msra.mxu0 0
        %3423 = vmatpush.bf16.msra.mxu0 0
        %3424 = vmatpush.bf16.msra.mxu0 %v3401
        %3425 = vmatmul.bf16.gmra.mxu0 %v3395
        %v3426 = vpop.f32.mrf.mxu0
        %v3427 = vadd.f32 0.0, %v3426
        %v3428 = vpop.f32.mrf.mxu0
        %v3429 = vadd.f32 0.0, %v3428
        %3430 = vdwg.mxu0
        %s3431 = scalar_lea.vmem %s12, 40
        %v3432 = vld [vmem:[%s3431] sm:$0xf]
        %v3433 = vld [vmem:[%s3431 + $0x4] sm:$0xf]
        %v3436 = vunpack.c.l.b16 %v3432
        %v3437 = vunpack.c.l.b16 %v3433
        %v3438 = vpack.c.b16 %v3437, %v3436
        %v3440 = vunpack.c.l.b16 %v3222
        %v3441 = vunpack.c.h.b16 %v3222
        %v3442 = vpack.c.b16 %v3440, %v3440
        %v3443 = vpack.c.b16 %v3441, %v3441
        %v3445 = vsel %vm3240, %v3438, 0
        %v3448 = vand.u32 %v3442, %v3246
        %v3451 = vand.u32 %v3443, %v3246
        %3453 = vmatpush.bf16.msra.mxu0 0
        %3454 = vmatpush.bf16.msra.mxu0 0
        %3455 = vmatpush.bf16.msra.mxu0 0
        %3456 = vmatpush.bf16.msra.mxu0 0
        %3457 = vmatpush.bf16.msra.mxu0 0
        %3458 = vmatpush.bf16.msra.mxu0 0
        %3459 = vmatpush.bf16.msra.mxu0 0
        %3460 = vmatpush.bf16.msra.mxu0 %v3448
        %3461 = vmatmul.bf16.gmra.mxu0 %v3445
        %v3462 = vpop.f32.mrf.mxu0
        %v3463 = vadd.f32 0.0, %v3462
        %v3464 = vpop.f32.mrf.mxu0
        %v3465 = vadd.f32 0.0, %v3464
        %3466 = vdwg.mxu0
        %3467 = vmatpush.bf16.msra.mxu0 0
        %3468 = vmatpush.bf16.msra.mxu0 0
        %3469 = vmatpush.bf16.msra.mxu0 0
        %3470 = vmatpush.bf16.msra.mxu0 0
        %3471 = vmatpush.bf16.msra.mxu0 0
        %3472 = vmatpush.bf16.msra.mxu0 0
        %3473 = vmatpush.bf16.msra.mxu0 0
        %3474 = vmatpush.bf16.msra.mxu0 %v3451
        %3475 = vmatmul.bf16.gmra.mxu0 %v3445
        %v3476 = vpop.f32.mrf.mxu0
        %v3477 = vadd.f32 0.0, %v3476
        %v3478 = vpop.f32.mrf.mxu0
        %v3479 = vadd.f32 0.0, %v3478
        %3480 = vdwg.mxu0
        %s3481 = scalar_lea.vmem %s12, 48
        %v3482 = vld [vmem:[%s3481] sm:$0xf]
        %v3483 = vld [vmem:[%s3481 + $0x4] sm:$0xf]
        %v3486 = vunpack.c.l.b16 %v3482
        %v3487 = vunpack.c.l.b16 %v3483
        %v3488 = vpack.c.b16 %v3487, %v3486
        %v3490 = vunpack.c.l.b16 %v3223
        %v3491 = vunpack.c.h.b16 %v3223
        %v3492 = vpack.c.b16 %v3490, %v3490
        %v3493 = vpack.c.b16 %v3491, %v3491
        %v3495 = vsel %vm3240, %v3488, 0
        %v3498 = vand.u32 %v3492, %v3246
        %v3501 = vand.u32 %v3493, %v3246
        %3503 = vmatpush.bf16.msra.mxu0 0
        %3504 = vmatpush.bf16.msra.mxu0 0
        %3505 = vmatpush.bf16.msra.mxu0 0
        %3506 = vmatpush.bf16.msra.mxu0 0
        %3507 = vmatpush.bf16.msra.mxu0 0
        %3508 = vmatpush.bf16.msra.mxu0 0
        %3509 = vmatpush.bf16.msra.mxu0 0
        %3510 = vmatpush.bf16.msra.mxu0 %v3498
        %3511 = vmatmul.bf16.gmra.mxu0 %v3495
        %v3512 = vpop.f32.mrf.mxu0
        %v3513 = vadd.f32 0.0, %v3512
        %v3514 = vpop.f32.mrf.mxu0
        %v3515 = vadd.f32 0.0, %v3514
        %3516 = vdwg.mxu0
        %3517 = vmatpush.bf16.msra.mxu0 0
        %3518 = vmatpush.bf16.msra.mxu0 0
        %3519 = vmatpush.bf16.msra.mxu0 0
        %3520 = vmatpush.bf16.msra.mxu0 0
        %3521 = vmatpush.bf16.msra.mxu0 0
        %3522 = vmatpush.bf16.msra.mxu0 0
        %3523 = vmatpush.bf16.msra.mxu0 0
        %3524 = vmatpush.bf16.msra.mxu0 %v3501
        %3525 = vmatmul.bf16.gmra.mxu0 %v3495
        %v3526 = vpop.f32.mrf.mxu0
        %v3527 = vadd.f32 0.0, %v3526
        %v3528 = vpop.f32.mrf.mxu0
        %v3529 = vadd.f32 0.0, %v3528
        %3530 = vdwg.mxu0
        %s3531 = scalar_lea.vmem %s12, 56
        %v3532 = vld [vmem:[%s3531] sm:$0xf]
        %v3533 = vld [vmem:[%s3531 + $0x4] sm:$0xf]
        %v3536 = vunpack.c.l.b16 %v3532
        %v3537 = vunpack.c.l.b16 %v3533
        %v3538 = vpack.c.b16 %v3537, %v3536
        %v3540 = vunpack.c.l.b16 %v3224
        %v3541 = vunpack.c.h.b16 %v3224
        %v3542 = vpack.c.b16 %v3540, %v3540
        %v3543 = vpack.c.b16 %v3541, %v3541
        %v3545 = vsel %vm3240, %v3538, 0
        %v3548 = vand.u32 %v3542, %v3246
        %v3551 = vand.u32 %v3543, %v3246
        %3553 = vmatpush.bf16.msra.mxu0 0
        %3554 = vmatpush.bf16.msra.mxu0 0
        %3555 = vmatpush.bf16.msra.mxu0 0
        %3556 = vmatpush.bf16.msra.mxu0 0
        %3557 = vmatpush.bf16.msra.mxu0 0
        %3558 = vmatpush.bf16.msra.mxu0 0
        %3559 = vmatpush.bf16.msra.mxu0 0
        %3560 = vmatpush.bf16.msra.mxu0 %v3548
        %3561 = vmatmul.bf16.gmra.mxu0 %v3545
        %v3562 = vpop.f32.mrf.mxu0
        %v3563 = vadd.f32 0.0, %v3562
        %v3564 = vpop.f32.mrf.mxu0
        %v3565 = vadd.f32 0.0, %v3564
        %3566 = vdwg.mxu0
        %3567 = vmatpush.bf16.msra.mxu0 0
        %3568 = vmatpush.bf16.msra.mxu0 0
        %3569 = vmatpush.bf16.msra.mxu0 0
        %3570 = vmatpush.bf16.msra.mxu0 0
        %3571 = vmatpush.bf16.msra.mxu0 0
        %3572 = vmatpush.bf16.msra.mxu0 0
        %3573 = vmatpush.bf16.msra.mxu0 0
        %3574 = vmatpush.bf16.msra.mxu0 %v3551
        %3575 = vmatmul.bf16.gmra.mxu0 %v3545
        %v3576 = vpop.f32.mrf.mxu0
        %v3577 = vadd.f32 0.0, %v3576
        %v3578 = vpop.f32.mrf.mxu0
        %v3579 = vadd.f32 0.0, %v3578
        %3580 = vdwg.mxu0
        %v3583 = vunpack.c.l.b16 %v3225
        %v3584 = vunpack.c.l.b16 %v3226
        %v3585 = vpack.c.b16 %v3584, %v3583
        %v3587 = vunpack.c.l.b16 %v3217
        %v3588 = vunpack.c.h.b16 %v3217
        %v3589 = vpack.c.b16 %v3587, %v3587
        %v3590 = vpack.c.b16 %v3588, %v3588
        %v3592 = vsel %vm3240, %v3585, 0
        %v3595 = vand.u32 %v3589, %v3246
        %v3598 = vand.u32 %v3590, %v3246
        %3600 = vmatpush.bf16.msra.mxu0 0
        %3601 = vmatpush.bf16.msra.mxu0 0
        %3602 = vmatpush.bf16.msra.mxu0 0
        %3603 = vmatpush.bf16.msra.mxu0 0
        %3604 = vmatpush.bf16.msra.mxu0 0
        %3605 = vmatpush.bf16.msra.mxu0 0
        %3606 = vmatpush.bf16.msra.mxu0 0
        %3607 = vmatpush.bf16.msra.mxu0 %v3595
        %3608 = vmatmul.bf16.gmra.mxu0 %v3592
        %v3609 = vpop.f32.mrf.mxu0
        %v3610 = vadd.f32 %v3263, %v3609
        %v3611 = vpop.f32.mrf.mxu0
        %v3612 = vadd.f32 %v3265, %v3611
        %3613 = vdwg.mxu0
        %3614 = vmatpush.bf16.msra.mxu0 0
        %3615 = vmatpush.bf16.msra.mxu0 0
        %3616 = vmatpush.bf16.msra.mxu0 0
        %3617 = vmatpush.bf16.msra.mxu0 0
        %3618 = vmatpush.bf16.msra.mxu0 0
        %3619 = vmatpush.bf16.msra.mxu0 0
        %3620 = vmatpush.bf16.msra.mxu0 0
        %3621 = vmatpush.bf16.msra.mxu0 %v3598
        %3622 = vmatmul.bf16.gmra.mxu0 %v3592
        %v3623 = vpop.f32.mrf.mxu0
        %v3624 = vadd.f32 %v3277, %v3623
        %v3625 = vpop.f32.mrf.mxu0
        %v3626 = vadd.f32 %v3279, %v3625
        %3627 = vdwg.mxu0
        %v3628 = vadd.f32 %v3610, %v3313
        %v3629 = vadd.f32 %v3624, %v3327
        %v3630 = vadd.f32 %v3612, %v3315
        %v3631 = vadd.f32 %v3626, %v3329
        %v3632 = vadd.f32 %v3628, %v3363
        %v3633 = vadd.f32 %v3629, %v3377
        %v3634 = vadd.f32 %v3630, %v3365
        %v3635 = vadd.f32 %v3631, %v3379
        %v3636 = vadd.f32 %v3632, %v3413
        %v3637 = vadd.f32 %v3633, %v3427
        %v3638 = vadd.f32 %v3634, %v3415
        %v3639 = vadd.f32 %v3635, %v3429
        %v3640 = vadd.f32 %v3636, %v3463
        %v3641 = vadd.f32 %v3637, %v3477
        %v3642 = vadd.f32 %v3638, %v3465
        %v3643 = vadd.f32 %v3639, %v3479
        %v3644 = vadd.f32 %v3640, %v3513
        %v3645 = vadd.f32 %v3641, %v3527
        %v3646 = vadd.f32 %v3642, %v3515
        %v3647 = vadd.f32 %v3643, %v3529
        %v3648 = vadd.f32 %v3644, %v3563
        %v3649 = vadd.f32 %v3645, %v3577
        %v3650 = vadd.f32 %v3646, %v3565
        %v3651 = vadd.f32 %v3647, %v3579
        %v3652 = vrot.slane %v3648, 7
        %v3653 = vrot.slane %v3649, 7
        %v3654 = vrot.slane %v3650, 7
        %v3655 = vrot.slane %v3651, 7
        %v3656 = vsel %vm586, %v3652, %v3654
        %v3657 = vsel %vm586, %v3653, %v3655
        %v3658 = vsel %vm586, %v3654, %v3652
        %v3659 = vsel %vm586, %v3655, %v3653
        %v3660 = vmul.f32 %v592, %v3658
        %v3661 = vmul.f32 %v592, %v3659
        %v3662 = vmul.f32 %v597, %v3656
        %v3663 = vmul.f32 %v597, %v3657
        %v3664 = vrot.slane %v3648, 1
        %v3665 = vrot.slane %v3649, 1
        %v3666 = vrot.slane %v3650, 1
        %v3667 = vrot.slane %v3651, 1
        %v3668 = vsel %vm603, %v3664, %v3666
        %v3669 = vsel %vm603, %v3665, %v3667
        %v3670 = vsel %vm603, %v3666, %v3664
        %v3671 = vsel %vm603, %v3667, %v3665
        %v3672 = vmul.f32 %v609, %v3668
        %v3673 = vmul.f32 %v609, %v3669
        %v3674 = vmul.f32 %v614, %v3670
        %v3675 = vmul.f32 %v614, %v3671
        %v3676 = vld [vmem:[%s13] sm:$0xf]
        %v3677 = vld [vmem:[%s13 + $0x4] sm:$0xf]
        %v3678 = vld [vmem:[%s13 + $0x8] sm:$0xf]
        %v3679 = vld [vmem:[%s13 + $0xc] sm:$0xf]
        %v3680 = vld [vmem:[%s13 + $0x10] sm:$0xf]
        %v3681 = vld [vmem:[%s13 + $0x14] sm:$0xf]
        %v3682 = vld [vmem:[%s13 + $0x18] sm:$0xf]
        %v3683 = vld [vmem:[%s13 + $0x1c] sm:$0xf]
        %v3684 = vld [vmem:[%s13 + $0x20] sm:$0xf]
        %v3685 = vld [vmem:[%s13 + $0x24] sm:$0xf]
        %v3686 = vld [vmem:[%s13 + $0x28] sm:$0xf]
        %v3687 = vld [vmem:[%s13 + $0x2c] sm:$0xf]
        %v3688 = vld [vmem:[%s13 + $0x30] sm:$0xf]
        %v3689 = vld [vmem:[%s13 + $0x34] sm:$0xf]
        %v3690 = vld [vmem:[%s13 + $0x38] sm:$0xf]
        %v3691 = vld [vmem:[%s13 + $0x3c] sm:$0xf]
        %v3692 = vld [vmem:[%s13 + $0x40] sm:$0xf]
        %v3693 = vld [vmem:[%s13 + $0x44] sm:$0xf]
        %v3694 = vld [vmem:[%s13 + $0x48] sm:$0xf]
        %v3695 = vld [vmem:[%s13 + $0x4c] sm:$0xf]
        %v3696 = vld [vmem:[%s13 + $0x50] sm:$0xf]
        %v3697 = vld [vmem:[%s13 + $0x54] sm:$0xf]
        %v3698 = vld [vmem:[%s13 + $0x58] sm:$0xf]
        %v3699 = vld [vmem:[%s13 + $0x5c] sm:$0xf]
        %v3700 = vld [vmem:[%s13 + $0x60] sm:$0xf]
        %v3701 = vld [vmem:[%s13 + $0x64] sm:$0xf]
        %v3702 = vld [vmem:[%s13 + $0x68] sm:$0xf]
        %v3703 = vld [vmem:[%s13 + $0x6c] sm:$0xf]
        %v3704 = vld [vmem:[%s13 + $0x70] sm:$0xf]
        %v3705 = vld [vmem:[%s13 + $0x74] sm:$0xf]
        %v3706 = vld [vmem:[%s13 + $0x78] sm:$0xf]
        %v3707 = vld [vmem:[%s13 + $0x7c] sm:$0xf]
        %v3708 = vld [vmem:[%s13 + $0x80] sm:$0xf]
        %v3709 = vld [vmem:[%s13 + $0x84] sm:$0xf]
        %v3710 = vld [vmem:[%s13 + $0x88] sm:$0xf]
        %v3711 = vld [vmem:[%s13 + $0x8c] sm:$0xf]
        %v3712 = vld [vmem:[%s13 + $0x90] sm:$0xf]
        %v3713 = vld [vmem:[%s13 + $0x94] sm:$0xf]
        %v3714 = vld [vmem:[%s13 + $0x98] sm:$0xf]
        %v3715 = vld [vmem:[%s13 + $0x9c] sm:$0xf]
        %v3716 = vld [vmem:[%s13 + $0xa0] sm:$0xf]
        %v3717 = vld [vmem:[%s13 + $0xa4] sm:$0xf]
        %v3718 = vld [vmem:[%s13 + $0xa8] sm:$0xf]
        %v3719 = vld [vmem:[%s13 + $0xac] sm:$0xf]
        %v3720 = vld [vmem:[%s13 + $0xb0] sm:$0xf]
        %v3721 = vld [vmem:[%s13 + $0xb4] sm:$0xf]
        %v3722 = vld [vmem:[%s13 + $0xb8] sm:$0xf]
        %v3723 = vld [vmem:[%s13 + $0xbc] sm:$0xf]
        %v3724 = vld [vmem:[%s13 + $0xc0] sm:$0xf]
        %v3725 = vld [vmem:[%s13 + $0xc4] sm:$0xf]
        %v3726 = vld [vmem:[%s13 + $0xc8] sm:$0xf]
        %v3727 = vld [vmem:[%s13 + $0xcc] sm:$0xf]
        %v3728 = vld [vmem:[%s13 + $0xd0] sm:$0xf]
        %v3729 = vld [vmem:[%s13 + $0xd4] sm:$0xf]
        %v3730 = vld [vmem:[%s13 + $0xd8] sm:$0xf]
        %v3731 = vld [vmem:[%s13 + $0xdc] sm:$0xf]
        %v3732 = vld [vmem:[%s13 + $0xe0] sm:$0xf]
        %v3733 = vld [vmem:[%s13 + $0xe4] sm:$0xf]
        %v3734 = vld [vmem:[%s13 + $0xe8] sm:$0xf]
        %v3735 = vld [vmem:[%s13 + $0xec] sm:$0xf]
        %v3736 = vld [vmem:[%s13 + $0xf0] sm:$0xf]
        %v3737 = vld [vmem:[%s13 + $0xf4] sm:$0xf]
        %v3738 = vld [vmem:[%s13 + $0xf8] sm:$0xf]
        %v3739 = vld [vmem:[%s13 + $0xfc] sm:$0xf]
        %v3740 = vld [vmem:[%s13 + $0x100] sm:$0xf]
        %v3741 = vld [vmem:[%s13 + $0x104] sm:$0xf]
        %v3742 = vld [vmem:[%s13 + $0x108] sm:$0xf]
        %v3743 = vld [vmem:[%s13 + $0x10c] sm:$0xf]
        %v3744 = vld [vmem:[%s13 + $0x110] sm:$0xf]
        %v3745 = vld [vmem:[%s13 + $0x114] sm:$0xf]
        %v3746 = vld [vmem:[%s13 + $0x118] sm:$0xf]
        %v3747 = vld [vmem:[%s13 + $0x11c] sm:$0xf]
        %v3748 = vld [vmem:[%s13 + $0x120] sm:$0xf]
        %v3749 = vld [vmem:[%s13 + $0x124] sm:$0xf]
        %v3750 = vld [vmem:[%s13 + $0x128] sm:$0xf]
        %v3751 = vld [vmem:[%s13 + $0x12c] sm:$0xf]
        %v3752 = vld [vmem:[%s13 + $0x130] sm:$0xf]
        %v3753 = vld [vmem:[%s13 + $0x134] sm:$0xf]
        %v3754 = vld [vmem:[%s13 + $0x138] sm:$0xf]
        %v3755 = vld [vmem:[%s13 + $0x13c] sm:$0xf]
        %v3756 = vld [vmem:[%s13 + $0x140] sm:$0xf]
        %v3757 = vld [vmem:[%s13 + $0x144] sm:$0xf]
        %v3758 = vld [vmem:[%s13 + $0x148] sm:$0xf]
        %v3759 = vld [vmem:[%s13 + $0x14c] sm:$0xf]
        %v3760 = vld [vmem:[%s13 + $0x150] sm:$0xf]
        %v3761 = vld [vmem:[%s13 + $0x154] sm:$0xf]
        %v3762 = vld [vmem:[%s13 + $0x158] sm:$0xf]
        %v3763 = vld [vmem:[%s13 + $0x15c] sm:$0xf]
        %v3764 = vld [vmem:[%s13 + $0x160] sm:$0xf]
        %v3765 = vld [vmem:[%s13 + $0x164] sm:$0xf]
        %v3766 = vld [vmem:[%s13 + $0x168] sm:$0xf]
        %v3767 = vld [vmem:[%s13 + $0x16c] sm:$0xf]
        %v3768 = vld [vmem:[%s13 + $0x170] sm:$0xf]
        %v3769 = vld [vmem:[%s13 + $0x174] sm:$0xf]
        %v3770 = vld [vmem:[%s13 + $0x178] sm:$0xf]
        %v3771 = vld [vmem:[%s13 + $0x17c] sm:$0xf]
        %v3772 = vpack.c.bf16 %v3662, %v3660
        %v3773 = vpack.c.bf16 %v3663, %v3661
        %v3774 = vpack.c.bf16 %v3650, %v3648
        %v3775 = vpack.c.bf16 %v3651, %v3649
        %v3808 = vunpack.c.l.b16 %v3708
        %v3809 = vunpack.c.l.b16 %v3709
        %v3810 = vunpack.c.l.b16 %v3710
        %v3811 = vunpack.c.l.b16 %v3711
        %v3812 = vunpack.c.l.b16 %v3712
        %v3813 = vunpack.c.l.b16 %v3713
        %v3814 = vunpack.c.l.b16 %v3714
        %v3815 = vunpack.c.l.b16 %v3715
        %v3816 = vunpack.c.l.b16 %v3716
        %v3817 = vunpack.c.l.b16 %v3717
        %v3818 = vunpack.c.l.b16 %v3718
        %v3819 = vunpack.c.l.b16 %v3719
        %v3820 = vunpack.c.l.b16 %v3720
        %v3821 = vunpack.c.l.b16 %v3721
        %v3822 = vunpack.c.l.b16 %v3722
        %v3823 = vunpack.c.l.b16 %v3723
        %v3824 = vunpack.c.l.b16 %v3724
        %v3825 = vunpack.c.l.b16 %v3725
        %v3826 = vunpack.c.l.b16 %v3726
        %v3827 = vunpack.c.l.b16 %v3727
        %v3828 = vunpack.c.l.b16 %v3728
        %v3829 = vunpack.c.l.b16 %v3729
        %v3830 = vunpack.c.l.b16 %v3730
        %v3831 = vunpack.c.l.b16 %v3731
        %v3832 = vunpack.c.l.b16 %v3732
        %v3833 = vunpack.c.l.b16 %v3733
        %v3834 = vunpack.c.l.b16 %v3734
        %v3835 = vunpack.c.l.b16 %v3735
        %v3836 = vunpack.c.l.b16 %v3736
        %v3837 = vunpack.c.l.b16 %v3737
        %v3838 = vunpack.c.l.b16 %v3738
        %v3839 = vunpack.c.l.b16 %v3739
        %v3840 = vpack.c.b16 %v3809, %v3808
        %v3841 = vpack.c.b16 %v3811, %v3810
        %v3842 = vpack.c.b16 %v3813, %v3812
        %v3843 = vpack.c.b16 %v3815, %v3814
        %v3844 = vpack.c.b16 %v3817, %v3816
        %v3845 = vpack.c.b16 %v3819, %v3818
        %v3846 = vpack.c.b16 %v3821, %v3820
        %v3847 = vpack.c.b16 %v3823, %v3822
        %v3848 = vpack.c.b16 %v3825, %v3824
        %v3849 = vpack.c.b16 %v3827, %v3826
        %v3850 = vpack.c.b16 %v3829, %v3828
        %v3851 = vpack.c.b16 %v3831, %v3830
        %v3852 = vpack.c.b16 %v3833, %v3832
        %v3853 = vpack.c.b16 %v3835, %v3834
        %v3854 = vpack.c.b16 %v3837, %v3836
        %v3855 = vpack.c.b16 %v3839, %v3838
        %3872 = vmatpush.bf16.msra.mxu0 %v3847
        %3873 = vmatpush.bf16.msra.mxu0 %v3846
        %3874 = vmatpush.bf16.msra.mxu0 %v3845
        %3875 = vmatpush.bf16.msra.mxu0 %v3844
        %3876 = vmatpush.bf16.msra.mxu0 %v3843
        %3877 = vmatpush.bf16.msra.mxu0 %v3842
        %3878 = vmatpush.bf16.msra.mxu0 %v3841
        %3879 = vmatpush.bf16.msra.mxu0 %v3840
        %3880 = vmatmul.bf16.gmra.mxu0 %v3774
        %v3881 = vpop.f32.mrf.mxu0
        %v3882 = vadd.f32 0.0, %v3881
        %v3883 = vpop.f32.mrf.mxu0
        %v3884 = vadd.f32 0.0, %v3883
        %3885 = vdwg.mxu0
        %3886 = vmatpush.bf16.msra.mxu0 %v3855
        %3887 = vmatpush.bf16.msra.mxu0 %v3854
        %3888 = vmatpush.bf16.msra.mxu0 %v3853
        %3889 = vmatpush.bf16.msra.mxu0 %v3852
        %3890 = vmatpush.bf16.msra.mxu0 %v3851
        %3891 = vmatpush.bf16.msra.mxu0 %v3850
        %3892 = vmatpush.bf16.msra.mxu0 %v3849
        %3893 = vmatpush.bf16.msra.mxu0 %v3848
        %3894 = vmatmul.bf16.gmra.mxu0 %v3775
        %v3895 = vpop.f32.mrf.mxu0
        %v3896 = vadd.f32 %v3882, %v3895
        %v3897 = vpop.f32.mrf.mxu0
        %v3898 = vadd.f32 %v3884, %v3897
        %3899 = vdwg.mxu0
        %v3932 = vunpack.c.l.b16 %v3676
        %v3933 = vunpack.c.l.b16 %v3677
        %v3934 = vunpack.c.l.b16 %v3678
        %v3935 = vunpack.c.l.b16 %v3679
        %v3936 = vunpack.c.l.b16 %v3680
        %v3937 = vunpack.c.l.b16 %v3681
        %v3938 = vunpack.c.l.b16 %v3682
        %v3939 = vunpack.c.l.b16 %v3683
        %v3940 = vunpack.c.l.b16 %v3684
        %v3941 = vunpack.c.l.b16 %v3685
        %v3942 = vunpack.c.l.b16 %v3686
        %v3943 = vunpack.c.l.b16 %v3687
        %v3944 = vunpack.c.l.b16 %v3688
        %v3945 = vunpack.c.l.b16 %v3689
        %v3946 = vunpack.c.l.b16 %v3690
        %v3947 = vunpack.c.l.b16 %v3691
        %v3948 = vunpack.c.l.b16 %v3692
        %v3949 = vunpack.c.l.b16 %v3693
        %v3950 = vunpack.c.l.b16 %v3694
        %v3951 = vunpack.c.l.b16 %v3695
        %v3952 = vunpack.c.l.b16 %v3696
        %v3953 = vunpack.c.l.b16 %v3697
        %v3954 = vunpack.c.l.b16 %v3698
        %v3955 = vunpack.c.l.b16 %v3699
        %v3956 = vunpack.c.l.b16 %v3700
        %v3957 = vunpack.c.l.b16 %v3701
        %v3958 = vunpack.c.l.b16 %v3702
        %v3959 = vunpack.c.l.b16 %v3703
        %v3960 = vunpack.c.l.b16 %v3704
        %v3961 = vunpack.c.l.b16 %v3705
        %v3962 = vunpack.c.l.b16 %v3706
        %v3963 = vunpack.c.l.b16 %v3707
        %v3964 = vpack.c.b16 %v3933, %v3932
        %v3965 = vpack.c.b16 %v3935, %v3934
        %v3966 = vpack.c.b16 %v3937, %v3936
        %v3967 = vpack.c.b16 %v3939, %v3938
        %v3968 = vpack.c.b16 %v3941, %v3940
        %v3969 = vpack.c.b16 %v3943, %v3942
        %v3970 = vpack.c.b16 %v3945, %v3944
        %v3971 = vpack.c.b16 %v3947, %v3946
        %v3972 = vpack.c.b16 %v3949, %v3948
        %v3973 = vpack.c.b16 %v3951, %v3950
        %v3974 = vpack.c.b16 %v3953, %v3952
        %v3975 = vpack.c.b16 %v3955, %v3954
        %v3976 = vpack.c.b16 %v3957, %v3956
        %v3977 = vpack.c.b16 %v3959, %v3958
        %v3978 = vpack.c.b16 %v3961, %v3960
        %v3979 = vpack.c.b16 %v3963, %v3962
        %3996 = vmatpush.bf16.msra.mxu0 %v3971
        %3997 = vmatpush.bf16.msra.mxu0 %v3970
        %3998 = vmatpush.bf16.msra.mxu0 %v3969
        %3999 = vmatpush.bf16.msra.mxu0 %v3968
        %4000 = vmatpush.bf16.msra.mxu0 %v3967
        %4001 = vmatpush.bf16.msra.mxu0 %v3966
        %4002 = vmatpush.bf16.msra.mxu0 %v3965
        %4003 = vmatpush.bf16.msra.mxu0 %v3964
        %4004 = vmatmul.bf16.gmra.mxu0 %v3772
        %v4005 = vpop.f32.mrf.mxu0
        %v4006 = vadd.f32 %v3896, %v4005
        %v4007 = vpop.f32.mrf.mxu0
        %v4008 = vadd.f32 %v3898, %v4007
        %4009 = vdwg.mxu0
        %4010 = vmatpush.bf16.msra.mxu0 %v3979
        %4011 = vmatpush.bf16.msra.mxu0 %v3978
        %4012 = vmatpush.bf16.msra.mxu0 %v3977
        %4013 = vmatpush.bf16.msra.mxu0 %v3976
        %4014 = vmatpush.bf16.msra.mxu0 %v3975
        %4015 = vmatpush.bf16.msra.mxu0 %v3974
        %4016 = vmatpush.bf16.msra.mxu0 %v3973
        %4017 = vmatpush.bf16.msra.mxu0 %v3972
        %4018 = vmatmul.bf16.gmra.mxu0 %v3773
        %v4019 = vpop.f32.mrf.mxu0
        %v4020 = vadd.f32 %v4006, %v4019
        %v4021 = vpop.f32.mrf.mxu0
        %v4022 = vadd.f32 %v4008, %v4021
        %4023 = vdwg.mxu0
        %v4024 = vpack.c.bf16 %v3674, %v3672
        %v4025 = vpack.c.bf16 %v3675, %v3673
        %v4058 = vunpack.c.l.b16 %v3740
        %v4059 = vunpack.c.l.b16 %v3741
        %v4060 = vunpack.c.l.b16 %v3742
        %v4061 = vunpack.c.l.b16 %v3743
        %v4062 = vunpack.c.l.b16 %v3744
        %v4063 = vunpack.c.l.b16 %v3745
        %v4064 = vunpack.c.l.b16 %v3746
        %v4065 = vunpack.c.l.b16 %v3747
        %v4066 = vunpack.c.l.b16 %v3748
        %v4067 = vunpack.c.l.b16 %v3749
        %v4068 = vunpack.c.l.b16 %v3750
        %v4069 = vunpack.c.l.b16 %v3751
        %v4070 = vunpack.c.l.b16 %v3752
        %v4071 = vunpack.c.l.b16 %v3753
        %v4072 = vunpack.c.l.b16 %v3754
        %v4073 = vunpack.c.l.b16 %v3755
        %v4074 = vunpack.c.l.b16 %v3756
        %v4075 = vunpack.c.l.b16 %v3757
        %v4076 = vunpack.c.l.b16 %v3758
        %v4077 = vunpack.c.l.b16 %v3759
        %v4078 = vunpack.c.l.b16 %v3760
        %v4079 = vunpack.c.l.b16 %v3761
        %v4080 = vunpack.c.l.b16 %v3762
        %v4081 = vunpack.c.l.b16 %v3763
        %v4082 = vunpack.c.l.b16 %v3764
        %v4083 = vunpack.c.l.b16 %v3765
        %v4084 = vunpack.c.l.b16 %v3766
        %v4085 = vunpack.c.l.b16 %v3767
        %v4086 = vunpack.c.l.b16 %v3768
        %v4087 = vunpack.c.l.b16 %v3769
        %v4088 = vunpack.c.l.b16 %v3770
        %v4089 = vunpack.c.l.b16 %v3771
        %v4090 = vpack.c.b16 %v4059, %v4058
        %v4091 = vpack.c.b16 %v4061, %v4060
        %v4092 = vpack.c.b16 %v4063, %v4062
        %v4093 = vpack.c.b16 %v4065, %v4064
        %v4094 = vpack.c.b16 %v4067, %v4066
        %v4095 = vpack.c.b16 %v4069, %v4068
        %v4096 = vpack.c.b16 %v4071, %v4070
        %v4097 = vpack.c.b16 %v4073, %v4072
        %v4098 = vpack.c.b16 %v4075, %v4074
        %v4099 = vpack.c.b16 %v4077, %v4076
        %v4100 = vpack.c.b16 %v4079, %v4078
        %v4101 = vpack.c.b16 %v4081, %v4080
        %v4102 = vpack.c.b16 %v4083, %v4082
        %v4103 = vpack.c.b16 %v4085, %v4084
        %v4104 = vpack.c.b16 %v4087, %v4086
        %v4105 = vpack.c.b16 %v4089, %v4088
        %4122 = vmatpush.bf16.msra.mxu0 %v4097
        %4123 = vmatpush.bf16.msra.mxu0 %v4096
        %4124 = vmatpush.bf16.msra.mxu0 %v4095
        %4125 = vmatpush.bf16.msra.mxu0 %v4094
        %4126 = vmatpush.bf16.msra.mxu0 %v4093
        %4127 = vmatpush.bf16.msra.mxu0 %v4092
        %4128 = vmatpush.bf16.msra.mxu0 %v4091
        %4129 = vmatpush.bf16.msra.mxu0 %v4090
        %4130 = vmatmul.bf16.gmra.mxu0 %v4024
        %v4131 = vpop.f32.mrf.mxu0
        %v4132 = vadd.f32 0.0, %v4131
        %v4133 = vpop.f32.mrf.mxu0
        %v4134 = vadd.f32 0.0, %v4133
        %4135 = vdwg.mxu0
        %4136 = vmatpush.bf16.msra.mxu0 %v4105
        %4137 = vmatpush.bf16.msra.mxu0 %v4104
        %4138 = vmatpush.bf16.msra.mxu0 %v4103
        %4139 = vmatpush.bf16.msra.mxu0 %v4102
        %4140 = vmatpush.bf16.msra.mxu0 %v4101
        %4141 = vmatpush.bf16.msra.mxu0 %v4100
        %4142 = vmatpush.bf16.msra.mxu0 %v4099
        %4143 = vmatpush.bf16.msra.mxu0 %v4098
        %4144 = vmatmul.bf16.gmra.mxu0 %v4025
        %v4145 = vpop.f32.mrf.mxu0
        %v4146 = vadd.f32 %v4132, %v4145
        %v4147 = vpop.f32.mrf.mxu0
        %v4148 = vadd.f32 %v4134, %v4147
        %4149 = vdwg.mxu0
        %v4150 = vadd.f32 %v4020, %v4146
        %v4151 = vadd.f32 %v4022, %v4148
        %v4152 = vld [vmem:[%s14] sm:$0x1]
        %v4154 = vperm.slane %v4152, 0
        %v4156 = vadd.f32 %v4150, %v4154
        %v4157 = vadd.f32 %v4151, %v4154
        %v4158 = vmax.f32 %v4156, 0.0
        %v4159 = vmax.f32 %v4157, 0.0
        %v4160 = vrot.slane %v4158, 7
        %v4161 = vrot.slane %v4159, 7
        %v4162 = vsel %vm586, %v4160, %v4161
        %v4163 = vsel %vm586, %v4161, %v4160
        %v4164 = vmul.f32 %v592, %v4163
        %v4165 = vmul.f32 %v597, %v4162
        %v4166 = vrot.slane %v4158, 1
        %v4167 = vrot.slane %v4159, 1
        %v4168 = vsel %vm603, %v4166, %v4167
        %v4169 = vsel %vm603, %v4167, %v4166
        %v4170 = vmul.f32 %v609, %v4168
        %v4171 = vmul.f32 %v614, %v4169
        %v4172 = vld [vmem:[%s15] sm:$0xf]
        %v4173 = vld [vmem:[%s15 + $0x4] sm:$0xf]
        %v4174 = vld [vmem:[%s15 + $0x8] sm:$0xf]
        %v4175 = vld [vmem:[%s15 + $0xc] sm:$0xf]
        %v4176 = vld [vmem:[%s15 + $0x10] sm:$0xf]
        %v4177 = vld [vmem:[%s15 + $0x14] sm:$0xf]
        %v4178 = vld [vmem:[%s15 + $0x18] sm:$0xf]
        %v4179 = vld [vmem:[%s15 + $0x1c] sm:$0xf]
        %v4180 = vld [vmem:[%s15 + $0x20] sm:$0xf]
        %v4181 = vld [vmem:[%s15 + $0x24] sm:$0xf]
        %v4182 = vld [vmem:[%s15 + $0x28] sm:$0xf]
        %v4183 = vld [vmem:[%s15 + $0x2c] sm:$0xf]
        %v4184 = vld [vmem:[%s15 + $0x30] sm:$0xf]
        %v4185 = vld [vmem:[%s15 + $0x34] sm:$0xf]
        %v4186 = vld [vmem:[%s15 + $0x38] sm:$0xf]
        %v4187 = vld [vmem:[%s15 + $0x3c] sm:$0xf]
        %v4188 = vld [vmem:[%s15 + $0x40] sm:$0xf]
        %v4189 = vld [vmem:[%s15 + $0x44] sm:$0xf]
        %v4190 = vld [vmem:[%s15 + $0x48] sm:$0xf]
        %v4191 = vld [vmem:[%s15 + $0x4c] sm:$0xf]
        %v4192 = vld [vmem:[%s15 + $0x50] sm:$0xf]
        %v4193 = vld [vmem:[%s15 + $0x54] sm:$0xf]
        %v4194 = vld [vmem:[%s15 + $0x58] sm:$0xf]
        %v4195 = vld [vmem:[%s15 + $0x5c] sm:$0xf]
        %v4196 = vld [vmem:[%s15 + $0x60] sm:$0xf]
        %v4197 = vld [vmem:[%s15 + $0x64] sm:$0xf]
        %v4198 = vld [vmem:[%s15 + $0x68] sm:$0xf]
        %v4199 = vld [vmem:[%s15 + $0x6c] sm:$0xf]
        %v4200 = vld [vmem:[%s15 + $0x70] sm:$0xf]
        %v4201 = vld [vmem:[%s15 + $0x74] sm:$0xf]
        %v4202 = vld [vmem:[%s15 + $0x78] sm:$0xf]
        %v4203 = vld [vmem:[%s15 + $0x7c] sm:$0xf]
        %v4204 = vld [vmem:[%s15 + $0x80] sm:$0xf]
        %v4205 = vld [vmem:[%s15 + $0x84] sm:$0xf]
        %v4206 = vld [vmem:[%s15 + $0x88] sm:$0xf]
        %v4207 = vld [vmem:[%s15 + $0x8c] sm:$0xf]
        %v4208 = vld [vmem:[%s15 + $0x90] sm:$0xf]
        %v4209 = vld [vmem:[%s15 + $0x94] sm:$0xf]
        %v4210 = vld [vmem:[%s15 + $0x98] sm:$0xf]
        %v4211 = vld [vmem:[%s15 + $0x9c] sm:$0xf]
        %v4212 = vld [vmem:[%s15 + $0xa0] sm:$0xf]
        %v4213 = vld [vmem:[%s15 + $0xa4] sm:$0xf]
        %v4214 = vld [vmem:[%s15 + $0xa8] sm:$0xf]
        %v4215 = vld [vmem:[%s15 + $0xac] sm:$0xf]
        %v4216 = vld [vmem:[%s15 + $0xb0] sm:$0xf]
        %v4217 = vld [vmem:[%s15 + $0xb4] sm:$0xf]
        %v4218 = vld [vmem:[%s15 + $0xb8] sm:$0xf]
        %v4219 = vld [vmem:[%s15 + $0xbc] sm:$0xf]
        %v4220 = vpack.c.bf16 %v4165, %v4164
        %v4221 = vpack.c.bf16 %v4159, %v4158
        %v4238 = vunpack.c.l.b16 %v4188
        %v4239 = vunpack.c.l.b16 %v4189
        %v4240 = vunpack.c.l.b16 %v4190
        %v4241 = vunpack.c.l.b16 %v4191
        %v4242 = vunpack.c.l.b16 %v4192
        %v4243 = vunpack.c.l.b16 %v4193
        %v4244 = vunpack.c.l.b16 %v4194
        %v4245 = vunpack.c.l.b16 %v4195
        %v4246 = vunpack.c.l.b16 %v4196
        %v4247 = vunpack.c.l.b16 %v4197
        %v4248 = vunpack.c.l.b16 %v4198
        %v4249 = vunpack.c.l.b16 %v4199
        %v4250 = vunpack.c.l.b16 %v4200
        %v4251 = vunpack.c.l.b16 %v4201
        %v4252 = vunpack.c.l.b16 %v4202
        %v4253 = vunpack.c.l.b16 %v4203
        %v4254 = vpack.c.b16 %v4239, %v4238
        %v4255 = vpack.c.b16 %v4241, %v4240
        %v4256 = vpack.c.b16 %v4243, %v4242
        %v4257 = vpack.c.b16 %v4245, %v4244
        %v4258 = vpack.c.b16 %v4247, %v4246
        %v4259 = vpack.c.b16 %v4249, %v4248
        %v4260 = vpack.c.b16 %v4251, %v4250
        %v4261 = vpack.c.b16 %v4253, %v4252
        %4270 = vmatpush.bf16.msra.mxu0 %v4261
        %4271 = vmatpush.bf16.msra.mxu0 %v4260
        %4272 = vmatpush.bf16.msra.mxu0 %v4259
        %4273 = vmatpush.bf16.msra.mxu0 %v4258
        %4274 = vmatpush.bf16.msra.mxu0 %v4257
        %4275 = vmatpush.bf16.msra.mxu0 %v4256
        %4276 = vmatpush.bf16.msra.mxu0 %v4255
        %4277 = vmatpush.bf16.msra.mxu0 %v4254
        %4278 = vmatmul.bf16.gmra.mxu0 %v4221
        %v4279 = vpop.f32.mrf.mxu0
        %v4280 = vadd.f32 0.0, %v4279
        %v4281 = vpop.f32.mrf.mxu0
        %v4282 = vadd.f32 0.0, %v4281
        %4283 = vdwg.mxu0
        %v4300 = vunpack.c.l.b16 %v4172
        %v4301 = vunpack.c.l.b16 %v4173
        %v4302 = vunpack.c.l.b16 %v4174
        %v4303 = vunpack.c.l.b16 %v4175
        %v4304 = vunpack.c.l.b16 %v4176
        %v4305 = vunpack.c.l.b16 %v4177
        %v4306 = vunpack.c.l.b16 %v4178
        %v4307 = vunpack.c.l.b16 %v4179
        %v4308 = vunpack.c.l.b16 %v4180
        %v4309 = vunpack.c.l.b16 %v4181
        %v4310 = vunpack.c.l.b16 %v4182
        %v4311 = vunpack.c.l.b16 %v4183
        %v4312 = vunpack.c.l.b16 %v4184
        %v4313 = vunpack.c.l.b16 %v4185
        %v4314 = vunpack.c.l.b16 %v4186
        %v4315 = vunpack.c.l.b16 %v4187
        %v4316 = vpack.c.b16 %v4301, %v4300
        %v4317 = vpack.c.b16 %v4303, %v4302
        %v4318 = vpack.c.b16 %v4305, %v4304
        %v4319 = vpack.c.b16 %v4307, %v4306
        %v4320 = vpack.c.b16 %v4309, %v4308
        %v4321 = vpack.c.b16 %v4311, %v4310
        %v4322 = vpack.c.b16 %v4313, %v4312
        %v4323 = vpack.c.b16 %v4315, %v4314
        %4332 = vmatpush.bf16.msra.mxu0 %v4323
        %4333 = vmatpush.bf16.msra.mxu0 %v4322
        %4334 = vmatpush.bf16.msra.mxu0 %v4321
        %4335 = vmatpush.bf16.msra.mxu0 %v4320
        %4336 = vmatpush.bf16.msra.mxu0 %v4319
        %4337 = vmatpush.bf16.msra.mxu0 %v4318
        %4338 = vmatpush.bf16.msra.mxu0 %v4317
        %4339 = vmatpush.bf16.msra.mxu0 %v4316
        %4340 = vmatmul.bf16.gmra.mxu0 %v4220
        %v4341 = vpop.f32.mrf.mxu0
        %v4342 = vadd.f32 %v4280, %v4341
        %v4343 = vpop.f32.mrf.mxu0
        %v4344 = vadd.f32 %v4282, %v4343
        %4345 = vdwg.mxu0
        %v4346 = vpack.c.bf16 %v4171, %v4170
        %v4363 = vunpack.c.l.b16 %v4204
        %v4364 = vunpack.c.l.b16 %v4205
        %v4365 = vunpack.c.l.b16 %v4206
        %v4366 = vunpack.c.l.b16 %v4207
        %v4367 = vunpack.c.l.b16 %v4208
        %v4368 = vunpack.c.l.b16 %v4209
        %v4369 = vunpack.c.l.b16 %v4210
        %v4370 = vunpack.c.l.b16 %v4211
        %v4371 = vunpack.c.l.b16 %v4212
        %v4372 = vunpack.c.l.b16 %v4213
        %v4373 = vunpack.c.l.b16 %v4214
        %v4374 = vunpack.c.l.b16 %v4215
        %v4375 = vunpack.c.l.b16 %v4216
        %v4376 = vunpack.c.l.b16 %v4217
        %v4377 = vunpack.c.l.b16 %v4218
        %v4378 = vunpack.c.l.b16 %v4219
        %v4379 = vpack.c.b16 %v4364, %v4363
        %v4380 = vpack.c.b16 %v4366, %v4365
        %v4381 = vpack.c.b16 %v4368, %v4367
        %v4382 = vpack.c.b16 %v4370, %v4369
        %v4383 = vpack.c.b16 %v4372, %v4371
        %v4384 = vpack.c.b16 %v4374, %v4373
        %v4385 = vpack.c.b16 %v4376, %v4375
        %v4386 = vpack.c.b16 %v4378, %v4377
        %4395 = vmatpush.bf16.msra.mxu0 %v4386
        %4396 = vmatpush.bf16.msra.mxu0 %v4385
        %4397 = vmatpush.bf16.msra.mxu0 %v4384
        %4398 = vmatpush.bf16.msra.mxu0 %v4383
        %4399 = vmatpush.bf16.msra.mxu0 %v4382
        %4400 = vmatpush.bf16.msra.mxu0 %v4381
        %4401 = vmatpush.bf16.msra.mxu0 %v4380
        %4402 = vmatpush.bf16.msra.mxu0 %v4379
        %4403 = vmatmul.bf16.gmra.mxu0 %v4346
        %v4404 = vpop.f32.mrf.mxu0
        %v4405 = vadd.f32 0.0, %v4404
        %v4406 = vpop.f32.mrf.mxu0
        %v4407 = vadd.f32 0.0, %v4406
        %4408 = vdwg.mxu0
        %v4409 = vadd.f32 %v4342, %v4405
        %v4410 = vadd.f32 %v4344, %v4407
        %v4411 = vld [vmem:[%s16] sm:$0x1]
        %v4413 = vperm.slane %v4411, 0
        %v4415 = vadd.f32 %v4409, %v4413
        %v4416 = vadd.f32 %v4410, %v4413
        %4417 = vxpose.xlu0.b32.start [1/16] %v4415, 128
        %4418 = vxpose.xlu0.b32.cont [2/16] %v4416, 128
        %4419 = vxpose.xlu0.b32.cont [3/16] 0.0, 128
        %4420 = vxpose.xlu0.b32.cont [4/16] 0.0, 128
        %4421 = vxpose.xlu0.b32.cont [5/16] 0.0, 128
        %4422 = vxpose.xlu0.b32.cont [6/16] 0.0, 128
        %4423 = vxpose.xlu0.b32.cont [7/16] 0.0, 128
        %4424 = vxpose.xlu0.b32.cont [8/16] 0.0, 128
        %4425 = vxpose.xlu0.b32.cont [9/16] 0.0, 128
        %4426 = vxpose.xlu0.b32.cont [10/16] 0.0, 128
        %4427 = vxpose.xlu0.b32.cont [11/16] 0.0, 128
        %4428 = vxpose.xlu0.b32.cont [12/16] 0.0, 128
        %4429 = vxpose.xlu0.b32.cont [13/16] 0.0, 128
        %4430 = vxpose.xlu0.b32.cont [14/16] 0.0, 128
        %4431 = vxpose.xlu0.b32.cont [15/16] 0.0, 128
        %4432 = vxpose.xlu0.b32.end [16/16] 0.0, 128
        %v4433 = vpop.trf.xlu0
        %v4434 = vpop.trf.xlu0
        %v4435 = vpop.trf.xlu0
        %v4436 = vpop.trf.xlu0
        %v4437 = vpop.trf.xlu0
        %v4438 = vpop.trf.xlu0
        %v4439 = vpop.trf.xlu0
        %v4440 = vpop.trf.xlu0
        %v4441 = vpop.trf.xlu0
        %v4442 = vpop.trf.xlu0
        %v4443 = vpop.trf.xlu0
        %v4444 = vpop.trf.xlu0
        %v4445 = vpop.trf.xlu0
        %v4446 = vpop.trf.xlu0
        %v4447 = vpop.trf.xlu0
        %v4448 = vpop.trf.xlu0
        %4449 = vst.msk [vmem:[%s539] sm:$0xff] %vm640, %v4433
        %s4450 = sand.u32 %s401, 1
        %s4451 = scalar_lea.sflag [#allocation3], %s4450
        %s4452 = sand.u32 %s401, 1
        %s4453 = smul.addr %s4452, 8
        %s4454 = scalar_lea.vmem [#allocation2], %s4453
        // Predicated region
        $region89: #{tpu_custom_call.1} parent=87 // pred_check
          %p4455 = pneg %p411
        $region90: #{tpu_custom_call.1} parent=87 // pred_check_branch
          %4457 = sbr.rel (%p4455) target = $region92
        $region91: #{tpu_custom_call.1} parent=87 // pred_region
          %4459 = vsyncadd %s4451, 0
          %s4460 = smul.addr %s31, 8
          %s4461 = scalar_lea.hbm %s17, %s4460
          %s4463 = sshll.u32 %s4454, 4
          %s4464 = int_to_ptr.vmem [resolvable:$true] %s4463
          %s4465 = sshll.u32 %s4461, 4
          %s4466 = int_to_ptr.hbm [resolvable:$true] %s4465
          %4468 = dma.vmem_to_hbm [thread:$0]  %s4464, 128, %s4466, %s4451
        $region92: #{tpu_custom_call.1} parent=87 // pred_fallthru
          _
      $region88: #{tpu_custom_call.1} parent=5 // pred_fallthru
        _
      %p4469 = scmp.le.s32.totalorder 2, %s26
      // Predicated region
      $region93: #{tpu_custom_call.1} parent=5 // pred_check
        %p4470 = pneg %p4469
      $region94: #{tpu_custom_call.1} parent=5 // pred_check_branch
        %4472 = sbr.rel (%p4470) target = $region96
      $region95: #{tpu_custom_call.1} parent=5 // pred_region
        %s4473 = ssub.s32 %s26, 2
        // Predicated region
        $region97: #{tpu_custom_call.1} parent=95 // pred_check
          %p4474 = pneg %p417
        $region98: #{tpu_custom_call.1} parent=95 // pred_check_branch
          %4476 = sbr.rel (%p4474) target = $region100
        $region99: #{tpu_custom_call.1} parent=95 // pred_region
          %s4477 = sand.u32 %s402, 1
          %s4478 = scalar_lea.sflag [#allocation3], %s4477
          %s4479 = sand.u32 %s402, 1
          %s4480 = smul.addr %s4479, 8
          %s4481 = scalar_lea.vmem [#allocation2], %s4480
          %4483 = dma.done %s4478, 128
        $region100: #{tpu_custom_call.1} parent=95 // pred_fallthru
          _
      $region96: #{tpu_custom_call.1} parent=5 // pred_fallthru
        _
    $region6: #{tpu_custom_call.1} parent=1 // loop_footer
      %s30 = sadd.s32 1, %s26
    $region7: #{tpu_custom_call.1} parent=1 // loop_footer_branch
      %25 = sbr.rel target = $region3
    $region8: #{tpu_custom_call.1} parent=1 // loop_exit
      _
    %4484 = vsyncpa [#allocation3], 1
    %s4485 = scalar_lea.sflag [#allocation3], 1
    %4486 = vsyncpa %s4485, 1

</llo_original>
